<compile_context>
chip_gen: v6e
topology: v6e:2x2x1
jax: 0.10.0
libtpu: 0.0.40
codegen_flags: <defaults>
</compile_context>

<pallas_src>
import jax
import jax.numpy as jnp
from jax.experimental import pallas as pl
from jax.experimental.pallas import tpu as pltpu

NUM_CLASSES = 5
IN_FEATURES = 512 * 6 * 6      # 18432
HIDDEN = 512
LOGIT_PAD = 128                # lane-dense output width; wrapper slices [:, :NUM_CLASSES]
TK = 3072                      # K-tile: 18432 / 3072 = 6 reduction steps

assert IN_FEATURES % TK == 0, "TK must divide IN_FEATURES (no ragged K-step handling)"


def classifier_kernel(x_ref, w1_ref, b1_ref, w2_ref, b2_ref, o_ref, acc_ref):
    """acc += x_k @ W1_k (bf16 MXU, f32 acc); last k: relu(acc+b1) @ W2_pad + b2_pad -> o."""
    k = pl.program_id(0)

    @pl.when(k == 0)
    def _():
        acc_ref[...] = jnp.zeros_like(acc_ref)

    # fc1 partial matmul: bf16 operands, f32 accumulation in VMEM scratch.
    acc_ref[...] += jnp.dot(
        x_ref[...].astype(jnp.bfloat16), w1_ref[...],
        preferred_element_type=jnp.float32,
    )

    @pl.when(k == pl.num_programs(0) - 1)
    def _():
        h = jnp.maximum(acc_ref[...] + b1_ref[...], 0.0)          # bias + ReLU (VPU)
        # fc2 in f32 on a lane-padded (HIDDEN, 128) weight slab -> unmasked lane-dense store.
        o_ref[...] = (
            jnp.dot(h, w2_ref[...], preferred_element_type=jnp.float32) + b2_ref[...]
        )


def prepare_params(w1, b1, w2, b2):
    """One-time conversion to kernel-ready layouts (do NOT redo per forward call)."""
    w1_bf = w1.astype(jnp.bfloat16)                                # persistent bf16 weight
    b1_2d = b1.reshape(1, HIDDEN).astype(jnp.float32)
    w2_pad = (
        jnp.zeros((HIDDEN, LOGIT_PAD), jnp.float32)
        .at[:, :NUM_CLASSES].set(w2.astype(jnp.float32))
    )
    b2_pad = (
        jnp.zeros((1, LOGIT_PAD), jnp.float32)
        .at[:, :NUM_CLASSES].set(b2.reshape(1, NUM_CLASSES).astype(jnp.float32))
    )
    return w1_bf, b1_2d, w2_pad, b2_pad


def _forward(x_nchw, w1_bf, b1_2d, w2_pad, b2_pad):
    """x_nchw: (B, 512, 6, 6) f32 -> logits (B, NUM_CLASSES) f32."""
    B = x_nchw.shape[0]
    # Same semantics as torch x.view(-1, 512*6*6): row-major flatten.
    x = x_nchw.reshape(B, IN_FEATURES)
    k_steps = IN_FEATURES // TK

    logits_pad = pl.pallas_call(
        classifier_kernel,
        out_shape=jax.ShapeDtypeStruct((B, LOGIT_PAD), jnp.float32),
        grid_spec=pltpu.PrefetchScalarGridSpec(
            num_scalar_prefetch=0,
            grid=(k_steps,),                                        # single reduction axis
            in_specs=[
                pl.BlockSpec((B, TK), lambda k: (0, k)),            # x K-tile (tiny)
                pl.BlockSpec((TK, HIDDEN), lambda k: (k, 0)),       # W1 stream (dominant)
                pl.BlockSpec((1, HIDDEN), lambda k: (0, 0)),        # b1
                pl.BlockSpec((HIDDEN, LOGIT_PAD), lambda k: (0, 0)),  # W2 (lane-padded)
                pl.BlockSpec((1, LOGIT_PAD), lambda k: (0, 0)),     # b2 (lane-padded)
            ],
            out_specs=pl.BlockSpec((B, LOGIT_PAD), lambda k: (0, 0)),
            scratch_shapes=[pltpu.VMEM((B, HIDDEN), jnp.float32)],  # f32 fc1 accumulator
        ),
        compiler_params=pltpu.CompilerParams(
            dimension_semantics=("arbitrary",),
            vmem_limit_bytes=32 * 1024 * 1024,   # footprint ~7 MB; safe on v5e/v6e/v7x
        ),
    )(x, w1_bf, b1_2d, w2_pad, b2_pad)

    return logits_pad[:, :NUM_CLASSES]


simple_classifier = jax.jit(_forward)


def init_params(key):
    """Deterministic init matching nn.Linear(512*6*6, 512), nn.Linear(512, 5).
    Weights stored transposed vs PyTorch: (in_features, out_features)."""
    k1, k2, k3, k4 = jax.random.split(key, 4)
    s1 = 1.0 / jnp.sqrt(IN_FEATURES)
    s2 = 1.0 / jnp.sqrt(HIDDEN)
    w1 = jax.random.uniform(k1, (IN_FEATURES, HIDDEN), jnp.float32, -s1, s1)
    b1 = jax.random.uniform(k2, (HIDDEN,), jnp.float32, -s1, s1)
    w2 = jax.random.uniform(k3, (HIDDEN, NUM_CLASSES), jnp.float32, -s2, s2)
    b2 = jax.random.uniform(k4, (NUM_CLASSES,), jnp.float32, -s2, s2)
    return w1, b1, w2, b2


if __name__ == "__main__":
    key = jax.random.PRNGKey(0)
    kx, kp = jax.random.split(key)

    B = 2
    x = jax.random.normal(kx, (B, 512, 6, 6), jnp.float32)
    w1, b1, w2, b2 = init_params(kp)

    # One-time param prep (the f32->bf16 W1 cast lives here, NOT in the per-call path).
    params = prepare_params(w1, b1, w2, b2)

    out = simple_classifier(x, *params)
    out = jax.block_until_ready(out)

    # Reference in plain f32 JAX (same math as the PyTorch module).
    xf = x.reshape(B, IN_FEATURES)
    ref = jnp.maximum(xf @ w1 + b1, 0.0) @ w2 + b2
    assert out.shape == (B, NUM_CLASSES)
    # bf16 streaming of x / W1 (f32 accumulation) => relaxed tolerance.
    assert jnp.allclose(out, ref, atol=2e-2, rtol=2e-2)

    print("KERNEL_OK")
</pallas_src>

<mosaic_0001>
module attributes {stable_mosaic.version = 11 : i64} {
  func.func @classifier_kernel(%arg0: i32, %arg1: memref<2x3072xf32, #tpu.memory_space<vmem>>, %arg2: memref<3072x512xbf16, #tpu.memory_space<vmem>>, %arg3: memref<1x512xf32, #tpu.memory_space<vmem>>, %arg4: memref<512x128xf32, #tpu.memory_space<vmem>>, %arg5: memref<1x128xf32, #tpu.memory_space<vmem>>, %arg6: memref<2x128xf32, #tpu.memory_space<vmem>>, %arg7: memref<2x512xf32, #tpu.memory_space<vmem>>) attributes {dimension_semantics = [#tpu.dimension_semantics<arbitrary>], iteration_bounds = array<i64: 6>, scalar_prefetch = 0 : i64, scratch_operands = 1 : i64, tpu.core_type = #tpu.core_type<tc>, window_params = [{transform_indices = @transform_0, window_bounds = array<i64: 2, 3072>}, {transform_indices = @transform_1, window_bounds = array<i64: 3072, 512>}, {pipeline_mode = #tpu.pipeline_mode<synchronous>, transform_indices = @transform_2, window_bounds = array<i64: 1, 512>}, {pipeline_mode = #tpu.pipeline_mode<synchronous>, transform_indices = @transform_3, window_bounds = array<i64: 512, 128>}, {pipeline_mode = #tpu.pipeline_mode<synchronous>, transform_indices = @transform_4, window_bounds = array<i64: 1, 128>}, {pipeline_mode = #tpu.pipeline_mode<synchronous>, transform_indices = @transform_5, window_bounds = array<i64: 2, 128>}]} {
    %c0_i32 = arith.constant 0 : i32
    %0 = arith.cmpi eq, %arg0, %c0_i32 : i32
    %1 = arith.extui %0 : i1 to i32
    %c0_i32_0 = arith.constant 0 : i32
    %2 = arith.cmpi ne, %1, %c0_i32_0 : i32
    scf.if %2 {
      %cst_9 = arith.constant 0.000000e+00 : f32
      %13 = vector.broadcast %cst_9 : f32 to vector<2x512xf32>
      %c0_10 = arith.constant 0 : index
      %c0_11 = arith.constant 0 : index
      %14 = vector.load %arg7[%c0_10, %c0_11] : memref<2x512xf32, #tpu.memory_space<vmem>>, vector<2x512xf32>
      tpu.vector_store %arg7[%c0_10, %c0_11], %13 {strides = array<i32>} : memref<2x512xf32, #tpu.memory_space<vmem>>, vector<2x512xf32>,
    } else {
    }
    %c0 = arith.constant 0 : index
    %c0_1 = arith.constant 0 : index
    %3 = vector.load %arg7[%c0, %c0_1] : memref<2x512xf32, #tpu.memory_space<vmem>>, vector<2x512xf32>
    %c0_2 = arith.constant 0 : index
    %c0_3 = arith.constant 0 : index
    %4 = vector.load %arg1[%c0_2, %c0_3] : memref<2x3072xf32, #tpu.memory_space<vmem>>, vector<2x3072xf32>
    %5 = arith.truncf %4 : vector<2x3072xf32> to vector<2x3072xbf16>
    %c0_4 = arith.constant 0 : index
    %c0_5 = arith.constant 0 : index
    %6 = vector.load %arg2[%c0_4, %c0_5] : memref<3072x512xbf16, #tpu.memory_space<vmem>>, vector<3072x512xbf16>
    %cst = arith.constant dense<0.000000e+00> : vector<2x512xf32>
    %7 = tpu.matmul %5, %6, %cst {dimension_numbers = #tpu.dot_dimension_numbers<[1], [0], [0], [1], [0, 0, 1, 1], [], []>} : vector<2x3072xbf16>, vector<3072x512xbf16>, vector<2x512xf32> -> vector<2x512xf32>
    %8 = arith.addf %3, %7 : vector<2x512xf32>
    %c0_6 = arith.constant 0 : index
    %c0_7 = arith.constant 0 : index
    %9 = vector.load %arg7[%c0_6, %c0_7] : memref<2x512xf32, #tpu.memory_space<vmem>>, vector<2x512xf32>
    tpu.vector_store %arg7[%c0_6, %c0_7], %8 {strides = array<i32>} : memref<2x512xf32, #tpu.memory_space<vmem>>, vector<2x512xf32>,
    %c5_i32 = arith.constant 5 : i32
    %10 = arith.cmpi eq, %arg0, %c5_i32 : i32
    %11 = arith.extui %10 : i1 to i32
    %c0_i32_8 = arith.constant 0 : i32
    %12 = arith.cmpi ne, %11, %c0_i32_8 : i32
    scf.if %12 {
      %c0_9 = arith.constant 0 : index
      %c0_10 = arith.constant 0 : index
      %13 = vector.load %arg7[%c0_9, %c0_10] : memref<2x512xf32, #tpu.memory_space<vmem>>, vector<2x512xf32>
      %c0_11 = arith.constant 0 : index
      %c0_12 = arith.constant 0 : index
      %14 = vector.load %arg3[%c0_11, %c0_12] : memref<1x512xf32, #tpu.memory_space<vmem>>, vector<1x512xf32>
      %15 = vector.broadcast %14 : vector<1x512xf32> to vector<2x512xf32>
      %16 = arith.addf %13, %15 : vector<2x512xf32>
      %cst_13 = arith.constant 0.000000e+00 : f32
      %17 = vector.broadcast %cst_13 : f32 to vector<2x512xf32>
      %18 = arith.maximumf %16, %17 : vector<2x512xf32>
      %c0_14 = arith.constant 0 : index
      %c0_15 = arith.constant 0 : index
      %19 = vector.load %arg4[%c0_14, %c0_15] : memref<512x128xf32, #tpu.memory_space<vmem>>, vector<512x128xf32>
      %cst_16 = arith.constant dense<0.000000e+00> : vector<2x128xf32>
      %20 = tpu.matmul %18, %19, %cst_16 {dimension_numbers = #tpu.dot_dimension_numbers<[1], [0], [0], [1], [0, 0, 1, 1], [], []>} : vector<2x512xf32>, vector<512x128xf32>, vector<2x128xf32> -> vector<2x128xf32>
      %c0_17 = arith.constant 0 : index
      %c0_18 = arith.constant 0 : index
      %21 = vector.load %arg5[%c0_17, %c0_18] : memref<1x128xf32, #tpu.memory_space<vmem>>, vector<1x128xf32>
      %22 = vector.broadcast %21 : vector<1x128xf32> to vector<2x128xf32>
      %23 = arith.addf %20, %22 : vector<2x128xf32>
      %c0_19 = arith.constant 0 : index
      %c0_20 = arith.constant 0 : index
      %24 = vector.load %arg6[%c0_19, %c0_20] : memref<2x128xf32, #tpu.memory_space<vmem>>, vector<2x128xf32>
      tpu.vector_store %arg6[%c0_19, %c0_20], %23 {strides = array<i32>} : memref<2x128xf32, #tpu.memory_space<vmem>>, vector<2x128xf32>,
    } else {
    }
    return
  }
  func.func @transform_0(%arg0: i32) -> (i32, i32) {
    %c0_i32 = arith.constant 0 : i32
    %c0_i32_0 = arith.constant 0 : i32
    return %c0_i32, %arg0 : i32, i32
  }
  func.func @transform_1(%arg0: i32) -> (i32, i32) {
    %c0_i32 = arith.constant 0 : i32
    %c0_i32_0 = arith.constant 0 : i32
    return %arg0, %c0_i32 : i32, i32
  }
  func.func @transform_2(%arg0: i32) -> (i32, i32) {
    %c0_i32 = arith.constant 0 : i32
    %c0_i32_0 = arith.constant 0 : i32
    %c0_i32_1 = arith.constant 0 : i32
    return %c0_i32, %c0_i32_0 : i32, i32
  }
  func.func @transform_3(%arg0: i32) -> (i32, i32) {
    %c0_i32 = arith.constant 0 : i32
    %c0_i32_0 = arith.constant 0 : i32
    %c0_i32_1 = arith.constant 0 : i32
    return %c0_i32, %c0_i32_0 : i32, i32
  }
  func.func @transform_4(%arg0: i32) -> (i32, i32) {
    %c0_i32 = arith.constant 0 : i32
    %c0_i32_0 = arith.constant 0 : i32
    %c0_i32_1 = arith.constant 0 : i32
    return %c0_i32, %c0_i32_0 : i32, i32
  }
  func.func @transform_5(%arg0: i32) -> (i32, i32) {
    %c0_i32 = arith.constant 0 : i32
    %c0_i32_0 = arith.constant 0 : i32
    %c0_i32_1 = arith.constant 0 : i32
    return %c0_i32, %c0_i32_0 : i32, i32
  }
}

</mosaic_0001>

<llo_original>
// kernel: _forward.1
$region0: #{_forward.1}
  #allocation0 [shape = 'u32[]', space=smem, size = 0x4, offset = 0x4, fixed_abs, tag = 'smem constant byte address 0x4 - core index']
  #allocation1 [shape = 'u32[144,128]{1,0:T(1,128)}', space=vmem, size = 0x12000, scoped, tag = 'internal scratch']
  #allocation2 [shape = 'f32[2,512]{1,0:T(2,128)}', space=vmem, size = 0x1000, scoped, tag = 'scratch operand']
  %s0 = inlined_call_operand.vmem [shape: f32[2,18432], index: 0, kind: input, shape index: {}]
  %s1 = inlined_call_operand.hbm [shape: bf16[18432,512], index: 1, kind: input, shape index: {}]
  %s2 = inlined_call_operand.hbm [shape: f32[1,512], index: 2, kind: input, shape index: {}]
  %s3 = inlined_call_operand.hbm [shape: f32[512,128], index: 3, kind: input, shape index: {}]
  %s4 = inlined_call_operand.hbm [shape: f32[1,128], index: 4, kind: input, shape index: {}]
  %s5 = inlined_call_operand.hbm [shape: f32[2,128], index: 5, kind: output, shape index: {}]
  %s6 = sld [smem:[#allocation0]]
  $region77: #{_forward.1} parent=0
    _
  %s8 = ssub.s32 1, %s6
  %s9 = scalar_select 0, %s8, %s6
  $region1: #{_forward.1} parent=0
    #allocation3 [shape = 'u8[6291456]{0}', space=vmem, size = 0x600000, scoped, tag = 'input window, operand 1']
    #allocation4 [shape = 's32[2]{0}', space=sflag, size = 0x8, scoped, tag = 'scoped memory for _forward.1']
    #allocation5 [shape = 's32[2]{0}', space=sflag, size = 0x8, scoped, tag = 'scoped memory for _forward.1']
    #allocation6 [shape = 'u8[2048]{0}', space=vmem, size = 0x800, scoped, tag = 'input window, operand 2, single buffered']
    #allocation7 [shape = 's32[1]{0}', space=sflag, size = 0x4, scoped, tag = 'scoped memory for _forward.1']
    #allocation8 [shape = 'u8[262144]{0}', space=vmem, size = 0x40000, scoped, tag = 'input window, operand 3, single buffered']
    #allocation9 [shape = 'u8[512]{0}', space=vmem, size = 0x400, scoped, tag = 'input window, operand 4, single buffered']
    #allocation10 [shape = 's32[1]{0}', space=sflag, size = 0x4, scoped, tag = 'scoped memory for _forward.1']
    #allocation11 [shape = 'u8[1024]{0}', space=vmem, size = 0x400, scoped, tag = 'output window, operand 0, single buffered']
    %10 = vsyncpa [#allocation4], 0
    %s11 = scalar_lea.sflag [#allocation4], 1
    %12 = vsyncpa %s11, 0
    %13 = vsyncpa [#allocation7], 0
    %14 = vsyncpa [#allocation10], 0
    %15 = vsyncpa [#allocation5], 0
    loop: start=0, step=1, limit=8
    $region2: #{_forward.1} parent=1 // loop_pre_header
      _
    $region3: #{_forward.1} parent=1 // loop_header
      %s17 = sphi 0, %s21
      %p18 = scmp.ge.s32.totalorder %s17, 8
      %s27 = sphi 0, %s29
      %s30 = sphi 0, %s27
      %s31 = sphi 0, %s30
      %s47 = sphi 0, %s31
      %s53 = sphi 0, %s55
      %s56 = sphi 0, %s53
      %s57 = sphi 0, %s56
      %s73 = sphi 0, %s57
      %s77 = sphi 0, %s77
      %s79 = sphi 0, %s77
      %s80 = sphi 0, %s79
      %s94 = sphi 0, %s80
      %s98 = sphi 0, %s98
      %s100 = sphi 0, %s98
      %s101 = sphi 0, %s100
      %s115 = sphi 0, %s101
      %s119 = sphi 0, %s119
      %s121 = sphi 0, %s119
      %s122 = sphi 0, %s121
      %s136 = sphi 0, %s122
      %s140 = sphi 0, %s140
      %s142 = sphi 0, %s140
      %s143 = sphi 0, %s142
      %s157 = sphi 0, %s143
    $region4: #{_forward.1} parent=1 // loop_header_branch
      %20 = sbr.rel (%p18) target = $region8
    $region5: #{_forward.1} parent=1 // loop_body
      %s22 = ssub.s32 %s17, 1
      %s23 = ssub.s32 %s17, 2
      %s24 = sadd.s32 %s17, 1
      %s25 = ssub.s32 %s17, %s24
      %p26 = scmp.eq.s32.totalorder %s25, 0
      %s28 = sadd.s32 %s27, 1
      %s29 = scalar_select %p26, %s27, %s28
      %p32 = pneg %p26
      %p33 = scmp.eq.s32.totalorder %s17, 5
      %p34 = por %p32, %p33
      %p35 = scmp.ne.s32.totalorder %s27, %s30
      %p36 = scmp.eq.s32.totalorder %s17, 0
      %p37 = por %p35, %p36
      %p38 = scmp.ne.s32.totalorder %s27, %s30
      %p39 = scmp.eq.s32.totalorder %s22, 5
      %p40 = por %p38, %p39
      %p41 = scmp.ne.s32.totalorder %s30, %s31
      %p42 = scmp.eq.s32.totalorder %s22, 0
      %p43 = por %p41, %p42
      %p44 = scmp.ne.s32.totalorder %s30, %s31
      %p45 = scmp.eq.s32.totalorder %s23, 5
      %p46 = por %p44, %p45
      %p48 = scmp.ne.s32.totalorder %s31, %s47
      %p49 = scmp.eq.s32.totalorder %s23, 0
      %p50 = por %p48, %p49
      %s51 = ssub.s32 %s17, %s24
      %p52 = scmp.eq.s32.totalorder %s51, 0
      %s54 = sadd.s32 %s53, 1
      %s55 = scalar_select %p52, %s53, %s54
      %p58 = pneg %p52
      %p59 = scmp.eq.s32.totalorder %s17, 5
      %p60 = por %p58, %p59
      %p61 = scmp.ne.s32.totalorder %s53, %s56
      %p62 = scmp.eq.s32.totalorder %s17, 0
      %p63 = por %p61, %p62
      %p64 = scmp.ne.s32.totalorder %s53, %s56
      %p65 = scmp.eq.s32.totalorder %s22, 5
      %p66 = por %p64, %p65
      %p67 = scmp.ne.s32.totalorder %s56, %s57
      %p68 = scmp.eq.s32.totalorder %s22, 0
      %p69 = por %p67, %p68
      %p70 = scmp.ne.s32.totalorder %s56, %s57
      %p71 = scmp.eq.s32.totalorder %s23, 5
      %p72 = por %p70, %p71
      %p74 = scmp.ne.s32.totalorder %s57, %s73
      %p75 = scmp.eq.s32.totalorder %s23, 0
      %p76 = por %p74, %p75
      %s78 = sadd.s32 %s77, 1
      %p81 = scmp.eq.s32.totalorder %s17, 5
      %p82 = scmp.ne.s32.totalorder %s77, %s79
      %p83 = scmp.eq.s32.totalorder %s17, 0
      %p84 = por %p82, %p83
      %p85 = scmp.ne.s32.totalorder %s77, %s79
      %p86 = scmp.eq.s32.totalorder %s22, 5
      %p87 = por %p85, %p86
      %p88 = scmp.ne.s32.totalorder %s79, %s80
      %p89 = scmp.eq.s32.totalorder %s22, 0
      %p90 = por %p88, %p89
      %p91 = scmp.ne.s32.totalorder %s79, %s80
      %p92 = scmp.eq.s32.totalorder %s23, 5
      %p93 = por %p91, %p92
      %p95 = scmp.ne.s32.totalorder %s80, %s94
      %p96 = scmp.eq.s32.totalorder %s23, 0
      %p97 = por %p95, %p96
      %s99 = sadd.s32 %s98, 1
      %p102 = scmp.eq.s32.totalorder %s17, 5
      %p103 = scmp.ne.s32.totalorder %s98, %s100
      %p104 = scmp.eq.s32.totalorder %s17, 0
      %p105 = por %p103, %p104
      %p106 = scmp.ne.s32.totalorder %s98, %s100
      %p107 = scmp.eq.s32.totalorder %s22, 5
      %p108 = por %p106, %p107
      %p109 = scmp.ne.s32.totalorder %s100, %s101
      %p110 = scmp.eq.s32.totalorder %s22, 0
      %p111 = por %p109, %p110
      %p112 = scmp.ne.s32.totalorder %s100, %s101
      %p113 = scmp.eq.s32.totalorder %s23, 5
      %p114 = por %p112, %p113
      %p116 = scmp.ne.s32.totalorder %s101, %s115
      %p117 = scmp.eq.s32.totalorder %s23, 0
      %p118 = por %p116, %p117
      %s120 = sadd.s32 %s119, 1
      %p123 = scmp.eq.s32.totalorder %s17, 5
      %p124 = scmp.ne.s32.totalorder %s119, %s121
      %p125 = scmp.eq.s32.totalorder %s17, 0
      %p126 = por %p124, %p125
      %p127 = scmp.ne.s32.totalorder %s119, %s121
      %p128 = scmp.eq.s32.totalorder %s22, 5
      %p129 = por %p127, %p128
      %p130 = scmp.ne.s32.totalorder %s121, %s122
      %p131 = scmp.eq.s32.totalorder %s22, 0
      %p132 = por %p130, %p131
      %p133 = scmp.ne.s32.totalorder %s121, %s122
      %p134 = scmp.eq.s32.totalorder %s23, 5
      %p135 = por %p133, %p134
      %p137 = scmp.ne.s32.totalorder %s122, %s136
      %p138 = scmp.eq.s32.totalorder %s23, 0
      %p139 = por %p137, %p138
      %s141 = sadd.s32 %s140, 1
      %p144 = scmp.eq.s32.totalorder %s17, 5
      %p145 = scmp.ne.s32.totalorder %s140, %s142
      %p146 = scmp.eq.s32.totalorder %s17, 0
      %p147 = por %p145, %p146
      %p148 = scmp.ne.s32.totalorder %s140, %s142
      %p149 = scmp.eq.s32.totalorder %s22, 5
      %p150 = por %p148, %p149
      %p151 = scmp.ne.s32.totalorder %s142, %s143
      %p152 = scmp.eq.s32.totalorder %s22, 0
      %p153 = por %p151, %p152
      %p154 = scmp.ne.s32.totalorder %s142, %s143
      %p155 = scmp.eq.s32.totalorder %s23, 5
      %p156 = por %p154, %p155
      %p158 = scmp.ne.s32.totalorder %s143, %s157
      %p159 = scmp.eq.s32.totalorder %s23, 0
      %p160 = por %p158, %p159
      %p161 = scmp.le.s32.totalorder 1, %s17
      %p162 = scmp.lt.s32.totalorder %s17, 7
      %p163 = pnand %p161, %p162
      %p164 = pneg %p163
      // Predicated region
      $region9: #{_forward.1} parent=5 // pred_check
        _
      $region10: #{_forward.1} parent=5 // pred_check_branch
        %166 = sbr.rel (%p163) target = $region12
      $region11: #{_forward.1} parent=5 // pred_region
        %s167 = ssub.s32 %s17, 1
        // Predicated region
        $region13: #{_forward.1} parent=11 // pred_check
          %p168 = pneg %p90
        $region14: #{_forward.1} parent=11 // pred_check_branch
          %170 = sbr.rel (%p168) target = $region16
        $region15: #{_forward.1} parent=11 // pred_region
          %s172 = ssub.s32 64, 64
          %173 = vsyncadd [#allocation7], %s172
          %s175 = sshll.u32 [#allocation6], 4
          %s176 = int_to_ptr.vmem [resolvable:$true] %s175
          %178 = dma.hbm_to_vmem [thread:$0]  %s2, 64, %s176, [#allocation7]
        $region16: #{_forward.1} parent=11 // pred_fallthru
          _
        // Predicated region
        $region17: #{_forward.1} parent=11 // pred_check
          %p179 = pneg %p111
        $region18: #{_forward.1} parent=11 // pred_check_branch
          %181 = sbr.rel (%p179) target = $region20
        $region19: #{_forward.1} parent=11 // pred_region
          %s183 = ssub.s32 8192, 8192
          %184 = vsyncadd [#allocation7], %s183
          %s185 = sshll.u32 [#allocation8], 4
          %s186 = int_to_ptr.vmem [resolvable:$true] %s185
          %191 = dma.hbm_to_vmem [thread:$0]  %s3, 8192, %s186, [#allocation7], 128, 128, 8
        $region20: #{_forward.1} parent=11 // pred_fallthru
          _
        // Predicated region
        $region21: #{_forward.1} parent=11 // pred_check
          %p192 = pneg %p132
        $region22: #{_forward.1} parent=11 // pred_check_branch
          %194 = sbr.rel (%p192) target = $region24
        $region23: #{_forward.1} parent=11 // pred_region
          %s196 = ssub.s32 16, 16
          %197 = vsyncadd [#allocation10], %s196
          %s199 = sshll.u32 [#allocation9], 4
          %s200 = int_to_ptr.vmem [resolvable:$true] %s199
          %202 = dma.hbm_to_vmem [thread:$0]  %s4, 16, %s200, [#allocation10]
        $region24: #{_forward.1} parent=11 // pred_fallthru
          _
      $region12: #{_forward.1} parent=5 // pred_fallthru
        _
      %p203 = scmp.lt.s32.totalorder %s17, 6
      // Predicated region
      $region25: #{_forward.1} parent=5 // pred_check
        %p204 = pneg %p203
      $region26: #{_forward.1} parent=5 // pred_check_branch
        %206 = sbr.rel (%p204) target = $region28
      $region27: #{_forward.1} parent=5 // pred_region
        // Predicated region
        $region29: #{_forward.1} parent=27 // pred_check
          %p207 = pneg %p37
        $region30: #{_forward.1} parent=27 // pred_check_branch
          %209 = sbr.rel (%p207) target = $region32
        $region31: #{_forward.1} parent=27 // pred_region
          %s210 = smul.u32 24, %s17
          %p211 = scmp.lt.s32.totalorder %s210, 143
          %s212 = scalar_select %p211, %s210, 143
          %s213 = smul.addr %s212, 2
          %s214 = scalar_lea.vmem %s0, %s213
          %s215 = smul.u32 24, %s17
        $region32: #{_forward.1} parent=27 // pred_fallthru
          _
        // Predicated region
        $region33: #{_forward.1} parent=27 // pred_check
          %p216 = pneg %p63
        $region34: #{_forward.1} parent=27 // pred_check_branch
          %218 = sbr.rel (%p216) target = $region36
        $region35: #{_forward.1} parent=27 // pred_region
          %s219 = sand.u32 %s53, 1
          %s220 = scalar_lea.sflag [#allocation4], %s219
          %s221 = sand.u32 %s53, 1
          %s222 = smul.addr %s221, 6144
          %s223 = scalar_lea.vmem [#allocation3], %s222
          %s224 = smul.u32 384, %s17
          %s226 = ssub.s32 98304, 98304
          %227 = vsyncadd %s220, %s226
          %s228 = smul.addr %s224, 4
          %s229 = smul.addr %s228, 64
          %s230 = scalar_lea.hbm %s1, %s229
          %s231 = sshll.u32 %s223, 4
          %s232 = int_to_ptr.vmem [resolvable:$true] %s231
          %237 = dma.hbm_to_vmem [thread:$0]  %s230, 98304, %s232, %s220, 256, 256, 16
        $region36: #{_forward.1} parent=27 // pred_fallthru
          _
      $region28: #{_forward.1} parent=5 // pred_fallthru
        _
      %p238 = scmp.le.s32.totalorder 1, %s17
      %p239 = scmp.lt.s32.totalorder %s17, 7
      %p240 = pnand %p238, %p239
      %p241 = pneg %p240
      // Predicated region
      $region37: #{_forward.1} parent=5 // pred_check
        _
      $region38: #{_forward.1} parent=5 // pred_check_branch
        %243 = sbr.rel (%p240) target = $region40
      $region39: #{_forward.1} parent=5 // pred_region
        %s244 = ssub.s32 %s17, 1
        %s245 = sand.u32 %s56, 1
        %s246 = scalar_lea.sflag [#allocation4], %s245
        %s247 = sand.u32 %s56, 1
        %s248 = smul.addr %s247, 6144
        %s249 = scalar_lea.vmem [#allocation3], %s248
        // Predicated region
        $region41: #{_forward.1} parent=39 // pred_check
          %p250 = pneg %p69
        $region42: #{_forward.1} parent=39 // pred_check_branch
          %252 = sbr.rel (%p250) target = $region44
        $region43: #{_forward.1} parent=39 // pred_region
          %253 = dma.done %s246, 98304
        $region44: #{_forward.1} parent=39 // pred_fallthru
          _
        // Predicated region
        $region45: #{_forward.1} parent=39 // pred_check
          %p254 = pneg %p90
        $region46: #{_forward.1} parent=39 // pred_check_branch
          %256 = sbr.rel (%p254) target = $region48
        $region47: #{_forward.1} parent=39 // pred_region
          %257 = dma.done [#allocation7], 64
        $region48: #{_forward.1} parent=39 // pred_fallthru
          _
        // Predicated region
        $region49: #{_forward.1} parent=39 // pred_check
          %p258 = pneg %p111
        $region50: #{_forward.1} parent=39 // pred_check_branch
          %260 = sbr.rel (%p258) target = $region52
        $region51: #{_forward.1} parent=39 // pred_region
          %261 = dma.done [#allocation7], 8192
        $region52: #{_forward.1} parent=39 // pred_fallthru
          _
        // Predicated region
        $region53: #{_forward.1} parent=39 // pred_check
          %p262 = pneg %p132
        $region54: #{_forward.1} parent=39 // pred_check_branch
          %264 = sbr.rel (%p262) target = $region56
        $region55: #{_forward.1} parent=39 // pred_region
          %265 = dma.done [#allocation10], 16
        $region56: #{_forward.1} parent=39 // pred_fallthru
          _
        %s266 = smul.u32 24, %s22
        %p267 = scmp.lt.s32.totalorder %s266, 143
        %s268 = scalar_select %p267, %s266, 143
        %s269 = smul.addr %s268, 2
        %s270 = scalar_lea.vmem %s0, %s269
        %p271 = pneg %p43
        %p272 = pneg %p40
        %s273 = sand.u32 %s56, 1
        %s274 = scalar_lea.sflag [#allocation4], %s273
        %s275 = sand.u32 %s56, 1
        %s276 = smul.addr %s275, 6144
        %s277 = scalar_lea.vmem [#allocation3], %s276
        %p278 = pneg %p69
        %p279 = pneg %p66
        %p280 = pneg %p90
        %p281 = pneg %p87
        %p282 = pneg %p111
        %p283 = pneg %p108
        %p284 = pneg %p132
        %p285 = pneg %p129
        %p286 = pneg %p153
        %p287 = pneg %p150
        %s288 = smul.u32 24, %s22
        %p289 = scmp.lt.s32.totalorder %s288, 143
        %s290 = scalar_select %p289, %s288, 143
        %s291 = smul.addr %s290, 2
        %s292 = scalar_lea.vmem %s0, %s291
        %s293 = smul.u32 24, %s22
        %s294 = smul.u32 384, %s22
        %p295 = scmp.eq.s32.totalorder %s22, 0
        // Predicated region
        $region57: #{_forward.1} parent=39 // pred_check
          %p296 = pneg %p295
        $region58: #{_forward.1} parent=39 // pred_check_branch
          %298 = sbr.rel (%p296) target = $region60
        $region59: #{_forward.1} parent=39 // pred_region
          %299 = vst [vmem:[#allocation2] sm:$0xff] 0.0
        $region60: #{_forward.1} parent=39 // pred_fallthru
          _
        %v300 = vld [vmem:[#allocation2] sm:$0xff]
        %v301 = vld [vmem:[%s292] sm:$0xff]
        %v302 = vld [vmem:[%s292 + $0x8] sm:$0xff]
        %v303 = vld [vmem:[%s292 + $0x10] sm:$0xff]
        %v304 = vld [vmem:[%s292 + $0x18] sm:$0xff]
        %v305 = vld [vmem:[%s292 + $0x20] sm:$0xff]
        %v306 = vld [vmem:[%s292 + $0x28] sm:$0xff]
        %v313 = vcombine.high %v301, %v301
        %v315 = vunpack.c.l.s4 1983009808
        %v316 = vunpack.c.0.s8 %v315
        %v317 = vlaneseq
        %v318 = vshrl.u32 %v317, 7
        %v319 = vsub.s32 %v316, %v318
        %v320 = vrot.slane %v301, %v319
        %v322 = vunpack.c.l.s4 1983009808
        %v323 = vunpack.c.0.s8 %v322
        %v324 = vlaneseq
        %v325 = vshrl.u32 %v324, 7
        %v326 = vsub.s32 %v323, %v325
        %v327 = vrot.slane %v313, %v326
        %v328 = vcombine.high %v320, %v320
        %v329 = vcombine.high %v327, %v327
        %v330 = vcombine.high %v302, %v302
        %v332 = vunpack.c.l.s4 1983009808
        %v333 = vunpack.c.0.s8 %v332
        %v334 = vlaneseq
        %v335 = vshrl.u32 %v334, 7
        %v336 = vsub.s32 %v333, %v335
        %v337 = vrot.slane %v302, %v336
        %v339 = vunpack.c.l.s4 1983009808
        %v340 = vunpack.c.0.s8 %v339
        %v341 = vlaneseq
        %v342 = vshrl.u32 %v341, 7
        %v343 = vsub.s32 %v340, %v342
        %v344 = vrot.slane %v330, %v343
        %v345 = vcombine.high %v337, %v337
        %v346 = vcombine.high %v344, %v344
        %v347 = vcombine.high %v303, %v303
        %v349 = vunpack.c.l.s4 1983009808
        %v350 = vunpack.c.0.s8 %v349
        %v351 = vlaneseq
        %v352 = vshrl.u32 %v351, 7
        %v353 = vsub.s32 %v350, %v352
        %v354 = vrot.slane %v303, %v353
        %v356 = vunpack.c.l.s4 1983009808
        %v357 = vunpack.c.0.s8 %v356
        %v358 = vlaneseq
        %v359 = vshrl.u32 %v358, 7
        %v360 = vsub.s32 %v357, %v359
        %v361 = vrot.slane %v347, %v360
        %v362 = vcombine.high %v354, %v354
        %v363 = vcombine.high %v361, %v361
        %v364 = vcombine.high %v304, %v304
        %v366 = vunpack.c.l.s4 1983009808
        %v367 = vunpack.c.0.s8 %v366
        %v368 = vlaneseq
        %v369 = vshrl.u32 %v368, 7
        %v370 = vsub.s32 %v367, %v369
        %v371 = vrot.slane %v304, %v370
        %v373 = vunpack.c.l.s4 1983009808
        %v374 = vunpack.c.0.s8 %v373
        %v375 = vlaneseq
        %v376 = vshrl.u32 %v375, 7
        %v377 = vsub.s32 %v374, %v376
        %v378 = vrot.slane %v364, %v377
        %v379 = vcombine.high %v371, %v371
        %v380 = vcombine.high %v378, %v378
        %v381 = vcombine.high %v305, %v305
        %v383 = vunpack.c.l.s4 1983009808
        %v384 = vunpack.c.0.s8 %v383
        %v385 = vlaneseq
        %v386 = vshrl.u32 %v385, 7
        %v387 = vsub.s32 %v384, %v386
        %v388 = vrot.slane %v305, %v387
        %v390 = vunpack.c.l.s4 1983009808
        %v391 = vunpack.c.0.s8 %v390
        %v392 = vlaneseq
        %v393 = vshrl.u32 %v392, 7
        %v394 = vsub.s32 %v391, %v393
        %v395 = vrot.slane %v381, %v394
        %v396 = vcombine.high %v388, %v388
        %v397 = vcombine.high %v395, %v395
        %v398 = vcombine.high %v306, %v306
        %v400 = vunpack.c.l.s4 1983009808
        %v401 = vunpack.c.0.s8 %v400
        %v402 = vlaneseq
        %v403 = vshrl.u32 %v402, 7
        %v404 = vsub.s32 %v401, %v403
        %v405 = vrot.slane %v306, %v404
        %v407 = vunpack.c.l.s4 1983009808
        %v408 = vunpack.c.0.s8 %v407
        %v409 = vlaneseq
        %v410 = vshrl.u32 %v409, 7
        %v411 = vsub.s32 %v408, %v410
        %v412 = vrot.slane %v398, %v411
        %v413 = vcombine.high %v405, %v405
        %v414 = vcombine.high %v412, %v412
        %v439 = vpack.c.bf16 %v320, %v320
        %v440 = vpack.c.bf16 %v328, %v328
        %v441 = vpack.c.bf16 %v327, %v327
        %v442 = vpack.c.bf16 %v329, %v329
        %v443 = vpack.c.bf16 %v337, %v337
        %v444 = vpack.c.bf16 %v345, %v345
        %v445 = vpack.c.bf16 %v344, %v344
        %v446 = vpack.c.bf16 %v346, %v346
        %v447 = vpack.c.bf16 %v354, %v354
        %v448 = vpack.c.bf16 %v362, %v362
        %v449 = vpack.c.bf16 %v361, %v361
        %v450 = vpack.c.bf16 %v363, %v363
        %v451 = vpack.c.bf16 %v371, %v371
        %v452 = vpack.c.bf16 %v379, %v379
        %v453 = vpack.c.bf16 %v378, %v378
        %v454 = vpack.c.bf16 %v380, %v380
        %v455 = vpack.c.bf16 %v388, %v388
        %v456 = vpack.c.bf16 %v396, %v396
        %v457 = vpack.c.bf16 %v395, %v395
        %v458 = vpack.c.bf16 %v397, %v397
        %v459 = vpack.c.bf16 %v405, %v405
        %v460 = vpack.c.bf16 %v413, %v413
        %v461 = vpack.c.bf16 %v412, %v412
        %v462 = vpack.c.bf16 %v414, %v414
        %v463 = vld [vmem:[%s249] sm:$0xff]
        %v464 = vld [vmem:[%s249 + $0x8] sm:$0xff]
        %v465 = vld [vmem:[%s249 + $0x10] sm:$0xff]
        %v466 = vld [vmem:[%s249 + $0x18] sm:$0xff]
        %v467 = vld [vmem:[%s249 + $0x20] sm:$0xff]
        %v468 = vld [vmem:[%s249 + $0x28] sm:$0xff]
        %v469 = vld [vmem:[%s249 + $0x30] sm:$0xff]
        %v470 = vld [vmem:[%s249 + $0x38] sm:$0xff]
        %v471 = vld [vmem:[%s249 + $0x40] sm:$0xff]
        %v472 = vld [vmem:[%s249 + $0x48] sm:$0xff]
        %v473 = vld [vmem:[%s249 + $0x50] sm:$0xff]
        %v474 = vld [vmem:[%s249 + $0x58] sm:$0xff]
        %v475 = vld [vmem:[%s249 + $0x60] sm:$0xff]
        %v476 = vld [vmem:[%s249 + $0x68] sm:$0xff]
        %v477 = vld [vmem:[%s249 + $0x70] sm:$0xff]
        %v478 = vld [vmem:[%s249 + $0x78] sm:$0xff]
        %v479 = vld [vmem:[%s249 + $0x80] sm:$0xff]
        %v480 = vld [vmem:[%s249 + $0x88] sm:$0xff]
        %v481 = vld [vmem:[%s249 + $0x90] sm:$0xff]
        %v482 = vld [vmem:[%s249 + $0x98] sm:$0xff]
        %v483 = vld [vmem:[%s249 + $0xa0] sm:$0xff]
        %v484 = vld [vmem:[%s249 + $0xa8] sm:$0xff]
        %v485 = vld [vmem:[%s249 + $0xb0] sm:$0xff]
        %v486 = vld [vmem:[%s249 + $0xb8] sm:$0xff]
        %v487 = vld [vmem:[%s249 + $0xc0] sm:$0xff]
        %v488 = vld [vmem:[%s249 + $0xc8] sm:$0xff]
        %v489 = vld [vmem:[%s249 + $0xd0] sm:$0xff]
        %v490 = vld [vmem:[%s249 + $0xd8] sm:$0xff]
        %v491 = vld [vmem:[%s249 + $0xe0] sm:$0xff]
        %v492 = vld [vmem:[%s249 + $0xe8] sm:$0xff]
        %v493 = vld [vmem:[%s249 + $0xf0] sm:$0xff]
        %v494 = vld [vmem:[%s249 + $0xf8] sm:$0xff]
        %v495 = vld [vmem:[%s249 + $0x100] sm:$0xff]
        %v496 = vld [vmem:[%s249 + $0x108] sm:$0xff]
        %v497 = vld [vmem:[%s249 + $0x110] sm:$0xff]
        %v498 = vld [vmem:[%s249 + $0x118] sm:$0xff]
        %v499 = vld [vmem:[%s249 + $0x120] sm:$0xff]
        %v500 = vld [vmem:[%s249 + $0x128] sm:$0xff]
        %v501 = vld [vmem:[%s249 + $0x130] sm:$0xff]
        %v502 = vld [vmem:[%s249 + $0x138] sm:$0xff]
        %v503 = vld [vmem:[%s249 + $0x140] sm:$0xff]
        %v504 = vld [vmem:[%s249 + $0x148] sm:$0xff]
        %v505 = vld [vmem:[%s249 + $0x150] sm:$0xff]
        %v506 = vld [vmem:[%s249 + $0x158] sm:$0xff]
        %v507 = vld [vmem:[%s249 + $0x160] sm:$0xff]
        %v508 = vld [vmem:[%s249 + $0x168] sm:$0xff]
        %v509 = vld [vmem:[%s249 + $0x170] sm:$0xff]
        %v510 = vld [vmem:[%s249 + $0x178] sm:$0xff]
        %v511 = vld [vmem:[%s249 + $0x180] sm:$0xff]
        %v512 = vld [vmem:[%s249 + $0x188] sm:$0xff]
        %v513 = vld [vmem:[%s249 + $0x190] sm:$0xff]
        %v514 = vld [vmem:[%s249 + $0x198] sm:$0xff]
        %v515 = vld [vmem:[%s249 + $0x1a0] sm:$0xff]
        %v516 = vld [vmem:[%s249 + $0x1a8] sm:$0xff]
        %v517 = vld [vmem:[%s249 + $0x1b0] sm:$0xff]
        %v518 = vld [vmem:[%s249 + $0x1b8] sm:$0xff]
        %v519 = vld [vmem:[%s249 + $0x1c0] sm:$0xff]
        %v520 = vld [vmem:[%s249 + $0x1c8] sm:$0xff]
        %v521 = vld [vmem:[%s249 + $0x1d0] sm:$0xff]
        %v522 = vld [vmem:[%s249 + $0x1d8] sm:$0xff]
        %v523 = vld [vmem:[%s249 + $0x1e0] sm:$0xff]
        %v524 = vld [vmem:[%s249 + $0x1e8] sm:$0xff]
        %v525 = vld [vmem:[%s249 + $0x1f0] sm:$0xff]
        %v526 = vld [vmem:[%s249 + $0x1f8] sm:$0xff]
        %v527 = vld [vmem:[%s249 + $0x200] sm:$0xff]
        %v528 = vld [vmem:[%s249 + $0x208] sm:$0xff]
        %v529 = vld [vmem:[%s249 + $0x210] sm:$0xff]
        %v530 = vld [vmem:[%s249 + $0x218] sm:$0xff]
        %v531 = vld [vmem:[%s249 + $0x220] sm:$0xff]
        %v532 = vld [vmem:[%s249 + $0x228] sm:$0xff]
        %v533 = vld [vmem:[%s249 + $0x230] sm:$0xff]
        %v534 = vld [vmem:[%s249 + $0x238] sm:$0xff]
        %v535 = vld [vmem:[%s249 + $0x240] sm:$0xff]
        %v536 = vld [vmem:[%s249 + $0x248] sm:$0xff]
        %v537 = vld [vmem:[%s249 + $0x250] sm:$0xff]
        %v538 = vld [vmem:[%s249 + $0x258] sm:$0xff]
        %v539 = vld [vmem:[%s249 + $0x260] sm:$0xff]
        %v540 = vld [vmem:[%s249 + $0x268] sm:$0xff]
        %v541 = vld [vmem:[%s249 + $0x270] sm:$0xff]
        %v542 = vld [vmem:[%s249 + $0x278] sm:$0xff]
        %v543 = vld [vmem:[%s249 + $0x280] sm:$0xff]
        %v544 = vld [vmem:[%s249 + $0x288] sm:$0xff]
        %v545 = vld [vmem:[%s249 + $0x290] sm:$0xff]
        %v546 = vld [vmem:[%s249 + $0x298] sm:$0xff]
        %v547 = vld [vmem:[%s249 + $0x2a0] sm:$0xff]
        %v548 = vld [vmem:[%s249 + $0x2a8] sm:$0xff]
        %v549 = vld [vmem:[%s249 + $0x2b0] sm:$0xff]
        %v550 = vld [vmem:[%s249 + $0x2b8] sm:$0xff]
        %v551 = vld [vmem:[%s249 + $0x2c0] sm:$0xff]
        %v552 = vld [vmem:[%s249 + $0x2c8] sm:$0xff]
        %v553 = vld [vmem:[%s249 + $0x2d0] sm:$0xff]
        %v554 = vld [vmem:[%s249 + $0x2d8] sm:$0xff]
        %v555 = vld [vmem:[%s249 + $0x2e0] sm:$0xff]
        %v556 = vld [vmem:[%s249 + $0x2e8] sm:$0xff]
        %v557 = vld [vmem:[%s249 + $0x2f0] sm:$0xff]
        %v558 = vld [vmem:[%s249 + $0x2f8] sm:$0xff]
        %v559 = vld [vmem:[%s249 + $0x300] sm:$0xff]
        %v560 = vld [vmem:[%s249 + $0x308] sm:$0xff]
        %v561 = vld [vmem:[%s249 + $0x310] sm:$0xff]
        %v562 = vld [vmem:[%s249 + $0x318] sm:$0xff]
        %v563 = vld [vmem:[%s249 + $0x320] sm:$0xff]
        %v564 = vld [vmem:[%s249 + $0x328] sm:$0xff]
        %v565 = vld [vmem:[%s249 + $0x330] sm:$0xff]
        %v566 = vld [vmem:[%s249 + $0x338] sm:$0xff]
        %v567 = vld [vmem:[%s249 + $0x340] sm:$0xff]
        %v568 = vld [vmem:[%s249 + $0x348] sm:$0xff]
        %v569 = vld [vmem:[%s249 + $0x350] sm:$0xff]
        %v570 = vld [vmem:[%s249 + $0x358] sm:$0xff]
        %v571 = vld [vmem:[%s249 + $0x360] sm:$0xff]
        %v572 = vld [vmem:[%s249 + $0x368] sm:$0xff]
        %v573 = vld [vmem:[%s249 + $0x370] sm:$0xff]
        %v574 = vld [vmem:[%s249 + $0x378] sm:$0xff]
        %v575 = vld [vmem:[%s249 + $0x380] sm:$0xff]
        %v576 = vld [vmem:[%s249 + $0x388] sm:$0xff]
        %v577 = vld [vmem:[%s249 + $0x390] sm:$0xff]
        %v578 = vld [vmem:[%s249 + $0x398] sm:$0xff]
        %v579 = vld [vmem:[%s249 + $0x3a0] sm:$0xff]
        %v580 = vld [vmem:[%s249 + $0x3a8] sm:$0xff]
        %v581 = vld [vmem:[%s249 + $0x3b0] sm:$0xff]
        %v582 = vld [vmem:[%s249 + $0x3b8] sm:$0xff]
        %v583 = vld [vmem:[%s249 + $0x3c0] sm:$0xff]
        %v584 = vld [vmem:[%s249 + $0x3c8] sm:$0xff]
        %v585 = vld [vmem:[%s249 + $0x3d0] sm:$0xff]
        %v586 = vld [vmem:[%s249 + $0x3d8] sm:$0xff]
        %v587 = vld [vmem:[%s249 + $0x3e0] sm:$0xff]
        %v588 = vld [vmem:[%s249 + $0x3e8] sm:$0xff]
        %v589 = vld [vmem:[%s249 + $0x3f0] sm:$0xff]
        %v590 = vld [vmem:[%s249 + $0x3f8] sm:$0xff]
        %v591 = vld [vmem:[%s249 + $0x400] sm:$0xff]
        %v592 = vld [vmem:[%s249 + $0x408] sm:$0xff]
        %v593 = vld [vmem:[%s249 + $0x410] sm:$0xff]
        %v594 = vld [vmem:[%s249 + $0x418] sm:$0xff]
        %v595 = vld [vmem:[%s249 + $0x420] sm:$0xff]
        %v596 = vld [vmem:[%s249 + $0x428] sm:$0xff]
        %v597 = vld [vmem:[%s249 + $0x430] sm:$0xff]
        %v598 = vld [vmem:[%s249 + $0x438] sm:$0xff]
        %v599 = vld [vmem:[%s249 + $0x440] sm:$0xff]
        %v600 = vld [vmem:[%s249 + $0x448] sm:$0xff]
        %v601 = vld [vmem:[%s249 + $0x450] sm:$0xff]
        %v602 = vld [vmem:[%s249 + $0x458] sm:$0xff]
        %v603 = vld [vmem:[%s249 + $0x460] sm:$0xff]
        %v604 = vld [vmem:[%s249 + $0x468] sm:$0xff]
        %v605 = vld [vmem:[%s249 + $0x470] sm:$0xff]
        %v606 = vld [vmem:[%s249 + $0x478] sm:$0xff]
        %v607 = vld [vmem:[%s249 + $0x480] sm:$0xff]
        %v608 = vld [vmem:[%s249 + $0x488] sm:$0xff]
        %v609 = vld [vmem:[%s249 + $0x490] sm:$0xff]
        %v610 = vld [vmem:[%s249 + $0x498] sm:$0xff]
        %v611 = vld [vmem:[%s249 + $0x4a0] sm:$0xff]
        %v612 = vld [vmem:[%s249 + $0x4a8] sm:$0xff]
        %v613 = vld [vmem:[%s249 + $0x4b0] sm:$0xff]
        %v614 = vld [vmem:[%s249 + $0x4b8] sm:$0xff]
        %v615 = vld [vmem:[%s249 + $0x4c0] sm:$0xff]
        %v616 = vld [vmem:[%s249 + $0x4c8] sm:$0xff]
        %v617 = vld [vmem:[%s249 + $0x4d0] sm:$0xff]
        %v618 = vld [vmem:[%s249 + $0x4d8] sm:$0xff]
        %v619 = vld [vmem:[%s249 + $0x4e0] sm:$0xff]
        %v620 = vld [vmem:[%s249 + $0x4e8] sm:$0xff]
        %v621 = vld [vmem:[%s249 + $0x4f0] sm:$0xff]
        %v622 = vld [vmem:[%s249 + $0x4f8] sm:$0xff]
        %v623 = vld [vmem:[%s249 + $0x500] sm:$0xff]
        %v624 = vld [vmem:[%s249 + $0x508] sm:$0xff]
        %v625 = vld [vmem:[%s249 + $0x510] sm:$0xff]
        %v626 = vld [vmem:[%s249 + $0x518] sm:$0xff]
        %v627 = vld [vmem:[%s249 + $0x520] sm:$0xff]
        %v628 = vld [vmem:[%s249 + $0x528] sm:$0xff]
        %v629 = vld [vmem:[%s249 + $0x530] sm:$0xff]
        %v630 = vld [vmem:[%s249 + $0x538] sm:$0xff]
        %v631 = vld [vmem:[%s249 + $0x540] sm:$0xff]
        %v632 = vld [vmem:[%s249 + $0x548] sm:$0xff]
        %v633 = vld [vmem:[%s249 + $0x550] sm:$0xff]
        %v634 = vld [vmem:[%s249 + $0x558] sm:$0xff]
        %v635 = vld [vmem:[%s249 + $0x560] sm:$0xff]
        %v636 = vld [vmem:[%s249 + $0x568] sm:$0xff]
        %v637 = vld [vmem:[%s249 + $0x570] sm:$0xff]
        %v638 = vld [vmem:[%s249 + $0x578] sm:$0xff]
        %v639 = vld [vmem:[%s249 + $0x580] sm:$0xff]
        %v640 = vld [vmem:[%s249 + $0x588] sm:$0xff]
        %v641 = vld [vmem:[%s249 + $0x590] sm:$0xff]
        %v642 = vld [vmem:[%s249 + $0x598] sm:$0xff]
        %v643 = vld [vmem:[%s249 + $0x5a0] sm:$0xff]
        %v644 = vld [vmem:[%s249 + $0x5a8] sm:$0xff]
        %v645 = vld [vmem:[%s249 + $0x5b0] sm:$0xff]
        %v646 = vld [vmem:[%s249 + $0x5b8] sm:$0xff]
        %v647 = vld [vmem:[%s249 + $0x5c0] sm:$0xff]
        %v648 = vld [vmem:[%s249 + $0x5c8] sm:$0xff]
        %v649 = vld [vmem:[%s249 + $0x5d0] sm:$0xff]
        %v650 = vld [vmem:[%s249 + $0x5d8] sm:$0xff]
        %v651 = vld [vmem:[%s249 + $0x5e0] sm:$0xff]
        %v652 = vld [vmem:[%s249 + $0x5e8] sm:$0xff]
        %v653 = vld [vmem:[%s249 + $0x5f0] sm:$0xff]
        %v654 = vld [vmem:[%s249 + $0x5f8] sm:$0xff]
        %v655 = vld [vmem:[%s249 + $0x600] sm:$0xff]
        %v656 = vld [vmem:[%s249 + $0x608] sm:$0xff]
        %v657 = vld [vmem:[%s249 + $0x610] sm:$0xff]
        %v658 = vld [vmem:[%s249 + $0x618] sm:$0xff]
        %v659 = vld [vmem:[%s249 + $0x620] sm:$0xff]
        %v660 = vld [vmem:[%s249 + $0x628] sm:$0xff]
        %v661 = vld [vmem:[%s249 + $0x630] sm:$0xff]
        %v662 = vld [vmem:[%s249 + $0x638] sm:$0xff]
        %v663 = vld [vmem:[%s249 + $0x640] sm:$0xff]
        %v664 = vld [vmem:[%s249 + $0x648] sm:$0xff]
        %v665 = vld [vmem:[%s249 + $0x650] sm:$0xff]
        %v666 = vld [vmem:[%s249 + $0x658] sm:$0xff]
        %v667 = vld [vmem:[%s249 + $0x660] sm:$0xff]
        %v668 = vld [vmem:[%s249 + $0x668] sm:$0xff]
        %v669 = vld [vmem:[%s249 + $0x670] sm:$0xff]
        %v670 = vld [vmem:[%s249 + $0x678] sm:$0xff]
        %v671 = vld [vmem:[%s249 + $0x680] sm:$0xff]
        %v672 = vld [vmem:[%s249 + $0x688] sm:$0xff]
        %v673 = vld [vmem:[%s249 + $0x690] sm:$0xff]
        %v674 = vld [vmem:[%s249 + $0x698] sm:$0xff]
        %v675 = vld [vmem:[%s249 + $0x6a0] sm:$0xff]
        %v676 = vld [vmem:[%s249 + $0x6a8] sm:$0xff]
        %v677 = vld [vmem:[%s249 + $0x6b0] sm:$0xff]
        %v678 = vld [vmem:[%s249 + $0x6b8] sm:$0xff]
        %v679 = vld [vmem:[%s249 + $0x6c0] sm:$0xff]
        %v680 = vld [vmem:[%s249 + $0x6c8] sm:$0xff]
        %v681 = vld [vmem:[%s249 + $0x6d0] sm:$0xff]
        %v682 = vld [vmem:[%s249 + $0x6d8] sm:$0xff]
        %v683 = vld [vmem:[%s249 + $0x6e0] sm:$0xff]
        %v684 = vld [vmem:[%s249 + $0x6e8] sm:$0xff]
        %v685 = vld [vmem:[%s249 + $0x6f0] sm:$0xff]
        %v686 = vld [vmem:[%s249 + $0x6f8] sm:$0xff]
        %v687 = vld [vmem:[%s249 + $0x700] sm:$0xff]
        %v688 = vld [vmem:[%s249 + $0x708] sm:$0xff]
        %v689 = vld [vmem:[%s249 + $0x710] sm:$0xff]
        %v690 = vld [vmem:[%s249 + $0x718] sm:$0xff]
        %v691 = vld [vmem:[%s249 + $0x720] sm:$0xff]
        %v692 = vld [vmem:[%s249 + $0x728] sm:$0xff]
        %v693 = vld [vmem:[%s249 + $0x730] sm:$0xff]
        %v694 = vld [vmem:[%s249 + $0x738] sm:$0xff]
        %v695 = vld [vmem:[%s249 + $0x740] sm:$0xff]
        %v696 = vld [vmem:[%s249 + $0x748] sm:$0xff]
        %v697 = vld [vmem:[%s249 + $0x750] sm:$0xff]
        %v698 = vld [vmem:[%s249 + $0x758] sm:$0xff]
        %v699 = vld [vmem:[%s249 + $0x760] sm:$0xff]
        %v700 = vld [vmem:[%s249 + $0x768] sm:$0xff]
        %v701 = vld [vmem:[%s249 + $0x770] sm:$0xff]
        %v702 = vld [vmem:[%s249 + $0x778] sm:$0xff]
        %v703 = vld [vmem:[%s249 + $0x780] sm:$0xff]
        %v704 = vld [vmem:[%s249 + $0x788] sm:$0xff]
        %v705 = vld [vmem:[%s249 + $0x790] sm:$0xff]
        %v706 = vld [vmem:[%s249 + $0x798] sm:$0xff]
        %v707 = vld [vmem:[%s249 + $0x7a0] sm:$0xff]
        %v708 = vld [vmem:[%s249 + $0x7a8] sm:$0xff]
        %v709 = vld [vmem:[%s249 + $0x7b0] sm:$0xff]
        %v710 = vld [vmem:[%s249 + $0x7b8] sm:$0xff]
        %v711 = vld [vmem:[%s249 + $0x7c0] sm:$0xff]
        %v712 = vld [vmem:[%s249 + $0x7c8] sm:$0xff]
        %v713 = vld [vmem:[%s249 + $0x7d0] sm:$0xff]
        %v714 = vld [vmem:[%s249 + $0x7d8] sm:$0xff]
        %v715 = vld [vmem:[%s249 + $0x7e0] sm:$0xff]
        %v716 = vld [vmem:[%s249 + $0x7e8] sm:$0xff]
        %v717 = vld [vmem:[%s249 + $0x7f0] sm:$0xff]
        %v718 = vld [vmem:[%s249 + $0x7f8] sm:$0xff]
        %v719 = vld [vmem:[%s249 + $0x800] sm:$0xff]
        %v720 = vld [vmem:[%s249 + $0x808] sm:$0xff]
        %v721 = vld [vmem:[%s249 + $0x810] sm:$0xff]
        %v722 = vld [vmem:[%s249 + $0x818] sm:$0xff]
        %v723 = vld [vmem:[%s249 + $0x820] sm:$0xff]
        %v724 = vld [vmem:[%s249 + $0x828] sm:$0xff]
        %v725 = vld [vmem:[%s249 + $0x830] sm:$0xff]
        %v726 = vld [vmem:[%s249 + $0x838] sm:$0xff]
        %v727 = vld [vmem:[%s249 + $0x840] sm:$0xff]
        %v728 = vld [vmem:[%s249 + $0x848] sm:$0xff]
        %v729 = vld [vmem:[%s249 + $0x850] sm:$0xff]
        %v730 = vld [vmem:[%s249 + $0x858] sm:$0xff]
        %v731 = vld [vmem:[%s249 + $0x860] sm:$0xff]
        %v732 = vld [vmem:[%s249 + $0x868] sm:$0xff]
        %v733 = vld [vmem:[%s249 + $0x870] sm:$0xff]
        %v734 = vld [vmem:[%s249 + $0x878] sm:$0xff]
        %v735 = vld [vmem:[%s249 + $0x880] sm:$0xff]
        %v736 = vld [vmem:[%s249 + $0x888] sm:$0xff]
        %v737 = vld [vmem:[%s249 + $0x890] sm:$0xff]
        %v738 = vld [vmem:[%s249 + $0x898] sm:$0xff]
        %v739 = vld [vmem:[%s249 + $0x8a0] sm:$0xff]
        %v740 = vld [vmem:[%s249 + $0x8a8] sm:$0xff]
        %v741 = vld [vmem:[%s249 + $0x8b0] sm:$0xff]
        %v742 = vld [vmem:[%s249 + $0x8b8] sm:$0xff]
        %v743 = vld [vmem:[%s249 + $0x8c0] sm:$0xff]
        %v744 = vld [vmem:[%s249 + $0x8c8] sm:$0xff]
        %v745 = vld [vmem:[%s249 + $0x8d0] sm:$0xff]
        %v746 = vld [vmem:[%s249 + $0x8d8] sm:$0xff]
        %v747 = vld [vmem:[%s249 + $0x8e0] sm:$0xff]
        %v748 = vld [vmem:[%s249 + $0x8e8] sm:$0xff]
        %v749 = vld [vmem:[%s249 + $0x8f0] sm:$0xff]
        %v750 = vld [vmem:[%s249 + $0x8f8] sm:$0xff]
        %v751 = vld [vmem:[%s249 + $0x900] sm:$0xff]
        %v752 = vld [vmem:[%s249 + $0x908] sm:$0xff]
        %v753 = vld [vmem:[%s249 + $0x910] sm:$0xff]
        %v754 = vld [vmem:[%s249 + $0x918] sm:$0xff]
        %v755 = vld [vmem:[%s249 + $0x920] sm:$0xff]
        %v756 = vld [vmem:[%s249 + $0x928] sm:$0xff]
        %v757 = vld [vmem:[%s249 + $0x930] sm:$0xff]
        %v758 = vld [vmem:[%s249 + $0x938] sm:$0xff]
        %v759 = vld [vmem:[%s249 + $0x940] sm:$0xff]
        %v760 = vld [vmem:[%s249 + $0x948] sm:$0xff]
        %v761 = vld [vmem:[%s249 + $0x950] sm:$0xff]
        %v762 = vld [vmem:[%s249 + $0x958] sm:$0xff]
        %v763 = vld [vmem:[%s249 + $0x960] sm:$0xff]
        %v764 = vld [vmem:[%s249 + $0x968] sm:$0xff]
        %v765 = vld [vmem:[%s249 + $0x970] sm:$0xff]
        %v766 = vld [vmem:[%s249 + $0x978] sm:$0xff]
        %v767 = vld [vmem:[%s249 + $0x980] sm:$0xff]
        %v768 = vld [vmem:[%s249 + $0x988] sm:$0xff]
        %v769 = vld [vmem:[%s249 + $0x990] sm:$0xff]
        %v770 = vld [vmem:[%s249 + $0x998] sm:$0xff]
        %v771 = vld [vmem:[%s249 + $0x9a0] sm:$0xff]
        %v772 = vld [vmem:[%s249 + $0x9a8] sm:$0xff]
        %v773 = vld [vmem:[%s249 + $0x9b0] sm:$0xff]
        %v774 = vld [vmem:[%s249 + $0x9b8] sm:$0xff]
        %v775 = vld [vmem:[%s249 + $0x9c0] sm:$0xff]
        %v776 = vld [vmem:[%s249 + $0x9c8] sm:$0xff]
        %v777 = vld [vmem:[%s249 + $0x9d0] sm:$0xff]
        %v778 = vld [vmem:[%s249 + $0x9d8] sm:$0xff]
        %v779 = vld [vmem:[%s249 + $0x9e0] sm:$0xff]
        %v780 = vld [vmem:[%s249 + $0x9e8] sm:$0xff]
        %v781 = vld [vmem:[%s249 + $0x9f0] sm:$0xff]
        %v782 = vld [vmem:[%s249 + $0x9f8] sm:$0xff]
        %v783 = vld [vmem:[%s249 + $0xa00] sm:$0xff]
        %v784 = vld [vmem:[%s249 + $0xa08] sm:$0xff]
        %v785 = vld [vmem:[%s249 + $0xa10] sm:$0xff]
        %v786 = vld [vmem:[%s249 + $0xa18] sm:$0xff]
        %v787 = vld [vmem:[%s249 + $0xa20] sm:$0xff]
        %v788 = vld [vmem:[%s249 + $0xa28] sm:$0xff]
        %v789 = vld [vmem:[%s249 + $0xa30] sm:$0xff]
        %v790 = vld [vmem:[%s249 + $0xa38] sm:$0xff]
        %v791 = vld [vmem:[%s249 + $0xa40] sm:$0xff]
        %v792 = vld [vmem:[%s249 + $0xa48] sm:$0xff]
        %v793 = vld [vmem:[%s249 + $0xa50] sm:$0xff]
        %v794 = vld [vmem:[%s249 + $0xa58] sm:$0xff]
        %v795 = vld [vmem:[%s249 + $0xa60] sm:$0xff]
        %v796 = vld [vmem:[%s249 + $0xa68] sm:$0xff]
        %v797 = vld [vmem:[%s249 + $0xa70] sm:$0xff]
        %v798 = vld [vmem:[%s249 + $0xa78] sm:$0xff]
        %v799 = vld [vmem:[%s249 + $0xa80] sm:$0xff]
        %v800 = vld [vmem:[%s249 + $0xa88] sm:$0xff]
        %v801 = vld [vmem:[%s249 + $0xa90] sm:$0xff]
        %v802 = vld [vmem:[%s249 + $0xa98] sm:$0xff]
        %v803 = vld [vmem:[%s249 + $0xaa0] sm:$0xff]
        %v804 = vld [vmem:[%s249 + $0xaa8] sm:$0xff]
        %v805 = vld [vmem:[%s249 + $0xab0] sm:$0xff]
        %v806 = vld [vmem:[%s249 + $0xab8] sm:$0xff]
        %v807 = vld [vmem:[%s249 + $0xac0] sm:$0xff]
        %v808 = vld [vmem:[%s249 + $0xac8] sm:$0xff]
        %v809 = vld [vmem:[%s249 + $0xad0] sm:$0xff]
        %v810 = vld [vmem:[%s249 + $0xad8] sm:$0xff]
        %v811 = vld [vmem:[%s249 + $0xae0] sm:$0xff]
        %v812 = vld [vmem:[%s249 + $0xae8] sm:$0xff]
        %v813 = vld [vmem:[%s249 + $0xaf0] sm:$0xff]
        %v814 = vld [vmem:[%s249 + $0xaf8] sm:$0xff]
        %v815 = vld [vmem:[%s249 + $0xb00] sm:$0xff]
        %v816 = vld [vmem:[%s249 + $0xb08] sm:$0xff]
        %v817 = vld [vmem:[%s249 + $0xb10] sm:$0xff]
        %v818 = vld [vmem:[%s249 + $0xb18] sm:$0xff]
        %v819 = vld [vmem:[%s249 + $0xb20] sm:$0xff]
        %v820 = vld [vmem:[%s249 + $0xb28] sm:$0xff]
        %v821 = vld [vmem:[%s249 + $0xb30] sm:$0xff]
        %v822 = vld [vmem:[%s249 + $0xb38] sm:$0xff]
        %v823 = vld [vmem:[%s249 + $0xb40] sm:$0xff]
        %v824 = vld [vmem:[%s249 + $0xb48] sm:$0xff]
        %v825 = vld [vmem:[%s249 + $0xb50] sm:$0xff]
        %v826 = vld [vmem:[%s249 + $0xb58] sm:$0xff]
        %v827 = vld [vmem:[%s249 + $0xb60] sm:$0xff]
        %v828 = vld [vmem:[%s249 + $0xb68] sm:$0xff]
        %v829 = vld [vmem:[%s249 + $0xb70] sm:$0xff]
        %v830 = vld [vmem:[%s249 + $0xb78] sm:$0xff]
        %v831 = vld [vmem:[%s249 + $0xb80] sm:$0xff]
        %v832 = vld [vmem:[%s249 + $0xb88] sm:$0xff]
        %v833 = vld [vmem:[%s249 + $0xb90] sm:$0xff]
        %v834 = vld [vmem:[%s249 + $0xb98] sm:$0xff]
        %v835 = vld [vmem:[%s249 + $0xba0] sm:$0xff]
        %v836 = vld [vmem:[%s249 + $0xba8] sm:$0xff]
        %v837 = vld [vmem:[%s249 + $0xbb0] sm:$0xff]
        %v838 = vld [vmem:[%s249 + $0xbb8] sm:$0xff]
        %v839 = vld [vmem:[%s249 + $0xbc0] sm:$0xff]
        %v840 = vld [vmem:[%s249 + $0xbc8] sm:$0xff]
        %v841 = vld [vmem:[%s249 + $0xbd0] sm:$0xff]
        %v842 = vld [vmem:[%s249 + $0xbd8] sm:$0xff]
        %v843 = vld [vmem:[%s249 + $0xbe0] sm:$0xff]
        %v844 = vld [vmem:[%s249 + $0xbe8] sm:$0xff]
        %v845 = vld [vmem:[%s249 + $0xbf0] sm:$0xff]
        %v846 = vld [vmem:[%s249 + $0xbf8] sm:$0xff]
        %v847 = vld [vmem:[%s249 + $0xc00] sm:$0xff]
        %v848 = vld [vmem:[%s249 + $0xc08] sm:$0xff]
        %v849 = vld [vmem:[%s249 + $0xc10] sm:$0xff]
        %v850 = vld [vmem:[%s249 + $0xc18] sm:$0xff]
        %v851 = vld [vmem:[%s249 + $0xc20] sm:$0xff]
        %v852 = vld [vmem:[%s249 + $0xc28] sm:$0xff]
        %v853 = vld [vmem:[%s249 + $0xc30] sm:$0xff]
        %v854 = vld [vmem:[%s249 + $0xc38] sm:$0xff]
        %v855 = vld [vmem:[%s249 + $0xc40] sm:$0xff]
        %v856 = vld [vmem:[%s249 + $0xc48] sm:$0xff]
        %v857 = vld [vmem:[%s249 + $0xc50] sm:$0xff]
        %v858 = vld [vmem:[%s249 + $0xc58] sm:$0xff]
        %v859 = vld [vmem:[%s249 + $0xc60] sm:$0xff]
        %v860 = vld [vmem:[%s249 + $0xc68] sm:$0xff]
        %v861 = vld [vmem:[%s249 + $0xc70] sm:$0xff]
        %v862 = vld [vmem:[%s249 + $0xc78] sm:$0xff]
        %v863 = vld [vmem:[%s249 + $0xc80] sm:$0xff]
        %v864 = vld [vmem:[%s249 + $0xc88] sm:$0xff]
        %v865 = vld [vmem:[%s249 + $0xc90] sm:$0xff]
        %v866 = vld [vmem:[%s249 + $0xc98] sm:$0xff]
        %v867 = vld [vmem:[%s249 + $0xca0] sm:$0xff]
        %v868 = vld [vmem:[%s249 + $0xca8] sm:$0xff]
        %v869 = vld [vmem:[%s249 + $0xcb0] sm:$0xff]
        %v870 = vld [vmem:[%s249 + $0xcb8] sm:$0xff]
        %v871 = vld [vmem:[%s249 + $0xcc0] sm:$0xff]
        %v872 = vld [vmem:[%s249 + $0xcc8] sm:$0xff]
        %v873 = vld [vmem:[%s249 + $0xcd0] sm:$0xff]
        %v874 = vld [vmem:[%s249 + $0xcd8] sm:$0xff]
        %v875 = vld [vmem:[%s249 + $0xce0] sm:$0xff]
        %v876 = vld [vmem:[%s249 + $0xce8] sm:$0xff]
        %v877 = vld [vmem:[%s249 + $0xcf0] sm:$0xff]
        %v878 = vld [vmem:[%s249 + $0xcf8] sm:$0xff]
        %v879 = vld [vmem:[%s249 + $0xd00] sm:$0xff]
        %v880 = vld [vmem:[%s249 + $0xd08] sm:$0xff]
        %v881 = vld [vmem:[%s249 + $0xd10] sm:$0xff]
        %v882 = vld [vmem:[%s249 + $0xd18] sm:$0xff]
        %v883 = vld [vmem:[%s249 + $0xd20] sm:$0xff]
        %v884 = vld [vmem:[%s249 + $0xd28] sm:$0xff]
        %v885 = vld [vmem:[%s249 + $0xd30] sm:$0xff]
        %v886 = vld [vmem:[%s249 + $0xd38] sm:$0xff]
        %v887 = vld [vmem:[%s249 + $0xd40] sm:$0xff]
        %v888 = vld [vmem:[%s249 + $0xd48] sm:$0xff]
        %v889 = vld [vmem:[%s249 + $0xd50] sm:$0xff]
        %v890 = vld [vmem:[%s249 + $0xd58] sm:$0xff]
        %v891 = vld [vmem:[%s249 + $0xd60] sm:$0xff]
        %v892 = vld [vmem:[%s249 + $0xd68] sm:$0xff]
        %v893 = vld [vmem:[%s249 + $0xd70] sm:$0xff]
        %v894 = vld [vmem:[%s249 + $0xd78] sm:$0xff]
        %v895 = vld [vmem:[%s249 + $0xd80] sm:$0xff]
        %v896 = vld [vmem:[%s249 + $0xd88] sm:$0xff]
        %v897 = vld [vmem:[%s249 + $0xd90] sm:$0xff]
        %v898 = vld [vmem:[%s249 + $0xd98] sm:$0xff]
        %v899 = vld [vmem:[%s249 + $0xda0] sm:$0xff]
        %v900 = vld [vmem:[%s249 + $0xda8] sm:$0xff]
        %v901 = vld [vmem:[%s249 + $0xdb0] sm:$0xff]
        %v902 = vld [vmem:[%s249 + $0xdb8] sm:$0xff]
        %v903 = vld [vmem:[%s249 + $0xdc0] sm:$0xff]
        %v904 = vld [vmem:[%s249 + $0xdc8] sm:$0xff]
        %v905 = vld [vmem:[%s249 + $0xdd0] sm:$0xff]
        %v906 = vld [vmem:[%s249 + $0xdd8] sm:$0xff]
        %v907 = vld [vmem:[%s249 + $0xde0] sm:$0xff]
        %v908 = vld [vmem:[%s249 + $0xde8] sm:$0xff]
        %v909 = vld [vmem:[%s249 + $0xdf0] sm:$0xff]
        %v910 = vld [vmem:[%s249 + $0xdf8] sm:$0xff]
        %v911 = vld [vmem:[%s249 + $0xe00] sm:$0xff]
        %v912 = vld [vmem:[%s249 + $0xe08] sm:$0xff]
        %v913 = vld [vmem:[%s249 + $0xe10] sm:$0xff]
        %v914 = vld [vmem:[%s249 + $0xe18] sm:$0xff]
        %v915 = vld [vmem:[%s249 + $0xe20] sm:$0xff]
        %v916 = vld [vmem:[%s249 + $0xe28] sm:$0xff]
        %v917 = vld [vmem:[%s249 + $0xe30] sm:$0xff]
        %v918 = vld [vmem:[%s249 + $0xe38] sm:$0xff]
        %v919 = vld [vmem:[%s249 + $0xe40] sm:$0xff]
        %v920 = vld [vmem:[%s249 + $0xe48] sm:$0xff]
        %v921 = vld [vmem:[%s249 + $0xe50] sm:$0xff]
        %v922 = vld [vmem:[%s249 + $0xe58] sm:$0xff]
        %v923 = vld [vmem:[%s249 + $0xe60] sm:$0xff]
        %v924 = vld [vmem:[%s249 + $0xe68] sm:$0xff]
        %v925 = vld [vmem:[%s249 + $0xe70] sm:$0xff]
        %v926 = vld [vmem:[%s249 + $0xe78] sm:$0xff]
        %v927 = vld [vmem:[%s249 + $0xe80] sm:$0xff]
        %v928 = vld [vmem:[%s249 + $0xe88] sm:$0xff]
        %v929 = vld [vmem:[%s249 + $0xe90] sm:$0xff]
        %v930 = vld [vmem:[%s249 + $0xe98] sm:$0xff]
        %v931 = vld [vmem:[%s249 + $0xea0] sm:$0xff]
        %v932 = vld [vmem:[%s249 + $0xea8] sm:$0xff]
        %v933 = vld [vmem:[%s249 + $0xeb0] sm:$0xff]
        %v934 = vld [vmem:[%s249 + $0xeb8] sm:$0xff]
        %v935 = vld [vmem:[%s249 + $0xec0] sm:$0xff]
        %v936 = vld [vmem:[%s249 + $0xec8] sm:$0xff]
        %v937 = vld [vmem:[%s249 + $0xed0] sm:$0xff]
        %v938 = vld [vmem:[%s249 + $0xed8] sm:$0xff]
        %v939 = vld [vmem:[%s249 + $0xee0] sm:$0xff]
        %v940 = vld [vmem:[%s249 + $0xee8] sm:$0xff]
        %v941 = vld [vmem:[%s249 + $0xef0] sm:$0xff]
        %v942 = vld [vmem:[%s249 + $0xef8] sm:$0xff]
        %v943 = vld [vmem:[%s249 + $0xf00] sm:$0xff]
        %v944 = vld [vmem:[%s249 + $0xf08] sm:$0xff]
        %v945 = vld [vmem:[%s249 + $0xf10] sm:$0xff]
        %v946 = vld [vmem:[%s249 + $0xf18] sm:$0xff]
        %v947 = vld [vmem:[%s249 + $0xf20] sm:$0xff]
        %v948 = vld [vmem:[%s249 + $0xf28] sm:$0xff]
        %v949 = vld [vmem:[%s249 + $0xf30] sm:$0xff]
        %v950 = vld [vmem:[%s249 + $0xf38] sm:$0xff]
        %v951 = vld [vmem:[%s249 + $0xf40] sm:$0xff]
        %v952 = vld [vmem:[%s249 + $0xf48] sm:$0xff]
        %v953 = vld [vmem:[%s249 + $0xf50] sm:$0xff]
        %v954 = vld [vmem:[%s249 + $0xf58] sm:$0xff]
        %v955 = vld [vmem:[%s249 + $0xf60] sm:$0xff]
        %v956 = vld [vmem:[%s249 + $0xf68] sm:$0xff]
        %v957 = vld [vmem:[%s249 + $0xf70] sm:$0xff]
        %v958 = vld [vmem:[%s249 + $0xf78] sm:$0xff]
        %v959 = vld [vmem:[%s249 + $0xf80] sm:$0xff]
        %v960 = vld [vmem:[%s249 + $0xf88] sm:$0xff]
        %v961 = vld [vmem:[%s249 + $0xf90] sm:$0xff]
        %v962 = vld [vmem:[%s249 + $0xf98] sm:$0xff]
        %v963 = vld [vmem:[%s249 + $0xfa0] sm:$0xff]
        %v964 = vld [vmem:[%s249 + $0xfa8] sm:$0xff]
        %v965 = vld [vmem:[%s249 + $0xfb0] sm:$0xff]
        %v966 = vld [vmem:[%s249 + $0xfb8] sm:$0xff]
        %v967 = vld [vmem:[%s249 + $0xfc0] sm:$0xff]
        %v968 = vld [vmem:[%s249 + $0xfc8] sm:$0xff]
        %v969 = vld [vmem:[%s249 + $0xfd0] sm:$0xff]
        %v970 = vld [vmem:[%s249 + $0xfd8] sm:$0xff]
        %v971 = vld [vmem:[%s249 + $0xfe0] sm:$0xff]
        %v972 = vld [vmem:[%s249 + $0xfe8] sm:$0xff]
        %v973 = vld [vmem:[%s249 + $0xff0] sm:$0xff]
        %v974 = vld [vmem:[%s249 + $0xff8] sm:$0xff]
        %v975 = vld [vmem:[%s249 + $0x1000] sm:$0xff]
        %v976 = vld [vmem:[%s249 + $0x1008] sm:$0xff]
        %v977 = vld [vmem:[%s249 + $0x1010] sm:$0xff]
        %v978 = vld [vmem:[%s249 + $0x1018] sm:$0xff]
        %v979 = vld [vmem:[%s249 + $0x1020] sm:$0xff]
        %v980 = vld [vmem:[%s249 + $0x1028] sm:$0xff]
        %v981 = vld [vmem:[%s249 + $0x1030] sm:$0xff]
        %v982 = vld [vmem:[%s249 + $0x1038] sm:$0xff]
        %v983 = vld [vmem:[%s249 + $0x1040] sm:$0xff]
        %v984 = vld [vmem:[%s249 + $0x1048] sm:$0xff]
        %v985 = vld [vmem:[%s249 + $0x1050] sm:$0xff]
        %v986 = vld [vmem:[%s249 + $0x1058] sm:$0xff]
        %v987 = vld [vmem:[%s249 + $0x1060] sm:$0xff]
        %v988 = vld [vmem:[%s249 + $0x1068] sm:$0xff]
        %v989 = vld [vmem:[%s249 + $0x1070] sm:$0xff]
        %v990 = vld [vmem:[%s249 + $0x1078] sm:$0xff]
        %v991 = vld [vmem:[%s249 + $0x1080] sm:$0xff]
        %v992 = vld [vmem:[%s249 + $0x1088] sm:$0xff]
        %v993 = vld [vmem:[%s249 + $0x1090] sm:$0xff]
        %v994 = vld [vmem:[%s249 + $0x1098] sm:$0xff]
        %v995 = vld [vmem:[%s249 + $0x10a0] sm:$0xff]
        %v996 = vld [vmem:[%s249 + $0x10a8] sm:$0xff]
        %v997 = vld [vmem:[%s249 + $0x10b0] sm:$0xff]
        %v998 = vld [vmem:[%s249 + $0x10b8] sm:$0xff]
        %v999 = vld [vmem:[%s249 + $0x10c0] sm:$0xff]
        %v1000 = vld [vmem:[%s249 + $0x10c8] sm:$0xff]
        %v1001 = vld [vmem:[%s249 + $0x10d0] sm:$0xff]
        %v1002 = vld [vmem:[%s249 + $0x10d8] sm:$0xff]
        %v1003 = vld [vmem:[%s249 + $0x10e0] sm:$0xff]
        %v1004 = vld [vmem:[%s249 + $0x10e8] sm:$0xff]
        %v1005 = vld [vmem:[%s249 + $0x10f0] sm:$0xff]
        %v1006 = vld [vmem:[%s249 + $0x10f8] sm:$0xff]
        %v1007 = vld [vmem:[%s249 + $0x1100] sm:$0xff]
        %v1008 = vld [vmem:[%s249 + $0x1108] sm:$0xff]
        %v1009 = vld [vmem:[%s249 + $0x1110] sm:$0xff]
        %v1010 = vld [vmem:[%s249 + $0x1118] sm:$0xff]
        %v1011 = vld [vmem:[%s249 + $0x1120] sm:$0xff]
        %v1012 = vld [vmem:[%s249 + $0x1128] sm:$0xff]
        %v1013 = vld [vmem:[%s249 + $0x1130] sm:$0xff]
        %v1014 = vld [vmem:[%s249 + $0x1138] sm:$0xff]
        %v1015 = vld [vmem:[%s249 + $0x1140] sm:$0xff]
        %v1016 = vld [vmem:[%s249 + $0x1148] sm:$0xff]
        %v1017 = vld [vmem:[%s249 + $0x1150] sm:$0xff]
        %v1018 = vld [vmem:[%s249 + $0x1158] sm:$0xff]
        %v1019 = vld [vmem:[%s249 + $0x1160] sm:$0xff]
        %v1020 = vld [vmem:[%s249 + $0x1168] sm:$0xff]
        %v1021 = vld [vmem:[%s249 + $0x1170] sm:$0xff]
        %v1022 = vld [vmem:[%s249 + $0x1178] sm:$0xff]
        %v1023 = vld [vmem:[%s249 + $0x1180] sm:$0xff]
        %v1024 = vld [vmem:[%s249 + $0x1188] sm:$0xff]
        %v1025 = vld [vmem:[%s249 + $0x1190] sm:$0xff]
        %v1026 = vld [vmem:[%s249 + $0x1198] sm:$0xff]
        %v1027 = vld [vmem:[%s249 + $0x11a0] sm:$0xff]
        %v1028 = vld [vmem:[%s249 + $0x11a8] sm:$0xff]
        %v1029 = vld [vmem:[%s249 + $0x11b0] sm:$0xff]
        %v1030 = vld [vmem:[%s249 + $0x11b8] sm:$0xff]
        %v1031 = vld [vmem:[%s249 + $0x11c0] sm:$0xff]
        %v1032 = vld [vmem:[%s249 + $0x11c8] sm:$0xff]
        %v1033 = vld [vmem:[%s249 + $0x11d0] sm:$0xff]
        %v1034 = vld [vmem:[%s249 + $0x11d8] sm:$0xff]
        %v1035 = vld [vmem:[%s249 + $0x11e0] sm:$0xff]
        %v1036 = vld [vmem:[%s249 + $0x11e8] sm:$0xff]
        %v1037 = vld [vmem:[%s249 + $0x11f0] sm:$0xff]
        %v1038 = vld [vmem:[%s249 + $0x11f8] sm:$0xff]
        %v1039 = vld [vmem:[%s249 + $0x1200] sm:$0xff]
        %v1040 = vld [vmem:[%s249 + $0x1208] sm:$0xff]
        %v1041 = vld [vmem:[%s249 + $0x1210] sm:$0xff]
        %v1042 = vld [vmem:[%s249 + $0x1218] sm:$0xff]
        %v1043 = vld [vmem:[%s249 + $0x1220] sm:$0xff]
        %v1044 = vld [vmem:[%s249 + $0x1228] sm:$0xff]
        %v1045 = vld [vmem:[%s249 + $0x1230] sm:$0xff]
        %v1046 = vld [vmem:[%s249 + $0x1238] sm:$0xff]
        %v1047 = vld [vmem:[%s249 + $0x1240] sm:$0xff]
        %v1048 = vld [vmem:[%s249 + $0x1248] sm:$0xff]
        %v1049 = vld [vmem:[%s249 + $0x1250] sm:$0xff]
        %v1050 = vld [vmem:[%s249 + $0x1258] sm:$0xff]
        %v1051 = vld [vmem:[%s249 + $0x1260] sm:$0xff]
        %v1052 = vld [vmem:[%s249 + $0x1268] sm:$0xff]
        %v1053 = vld [vmem:[%s249 + $0x1270] sm:$0xff]
        %v1054 = vld [vmem:[%s249 + $0x1278] sm:$0xff]
        %v1055 = vld [vmem:[%s249 + $0x1280] sm:$0xff]
        %v1056 = vld [vmem:[%s249 + $0x1288] sm:$0xff]
        %v1057 = vld [vmem:[%s249 + $0x1290] sm:$0xff]
        %v1058 = vld [vmem:[%s249 + $0x1298] sm:$0xff]
        %v1059 = vld [vmem:[%s249 + $0x12a0] sm:$0xff]
        %v1060 = vld [vmem:[%s249 + $0x12a8] sm:$0xff]
        %v1061 = vld [vmem:[%s249 + $0x12b0] sm:$0xff]
        %v1062 = vld [vmem:[%s249 + $0x12b8] sm:$0xff]
        %v1063 = vld [vmem:[%s249 + $0x12c0] sm:$0xff]
        %v1064 = vld [vmem:[%s249 + $0x12c8] sm:$0xff]
        %v1065 = vld [vmem:[%s249 + $0x12d0] sm:$0xff]
        %v1066 = vld [vmem:[%s249 + $0x12d8] sm:$0xff]
        %v1067 = vld [vmem:[%s249 + $0x12e0] sm:$0xff]
        %v1068 = vld [vmem:[%s249 + $0x12e8] sm:$0xff]
        %v1069 = vld [vmem:[%s249 + $0x12f0] sm:$0xff]
        %v1070 = vld [vmem:[%s249 + $0x12f8] sm:$0xff]
        %v1071 = vld [vmem:[%s249 + $0x1300] sm:$0xff]
        %v1072 = vld [vmem:[%s249 + $0x1308] sm:$0xff]
        %v1073 = vld [vmem:[%s249 + $0x1310] sm:$0xff]
        %v1074 = vld [vmem:[%s249 + $0x1318] sm:$0xff]
        %v1075 = vld [vmem:[%s249 + $0x1320] sm:$0xff]
        %v1076 = vld [vmem:[%s249 + $0x1328] sm:$0xff]
        %v1077 = vld [vmem:[%s249 + $0x1330] sm:$0xff]
        %v1078 = vld [vmem:[%s249 + $0x1338] sm:$0xff]
        %v1079 = vld [vmem:[%s249 + $0x1340] sm:$0xff]
        %v1080 = vld [vmem:[%s249 + $0x1348] sm:$0xff]
        %v1081 = vld [vmem:[%s249 + $0x1350] sm:$0xff]
        %v1082 = vld [vmem:[%s249 + $0x1358] sm:$0xff]
        %v1083 = vld [vmem:[%s249 + $0x1360] sm:$0xff]
        %v1084 = vld [vmem:[%s249 + $0x1368] sm:$0xff]
        %v1085 = vld [vmem:[%s249 + $0x1370] sm:$0xff]
        %v1086 = vld [vmem:[%s249 + $0x1378] sm:$0xff]
        %v1087 = vld [vmem:[%s249 + $0x1380] sm:$0xff]
        %v1088 = vld [vmem:[%s249 + $0x1388] sm:$0xff]
        %v1089 = vld [vmem:[%s249 + $0x1390] sm:$0xff]
        %v1090 = vld [vmem:[%s249 + $0x1398] sm:$0xff]
        %v1091 = vld [vmem:[%s249 + $0x13a0] sm:$0xff]
        %v1092 = vld [vmem:[%s249 + $0x13a8] sm:$0xff]
        %v1093 = vld [vmem:[%s249 + $0x13b0] sm:$0xff]
        %v1094 = vld [vmem:[%s249 + $0x13b8] sm:$0xff]
        %v1095 = vld [vmem:[%s249 + $0x13c0] sm:$0xff]
        %v1096 = vld [vmem:[%s249 + $0x13c8] sm:$0xff]
        %v1097 = vld [vmem:[%s249 + $0x13d0] sm:$0xff]
        %v1098 = vld [vmem:[%s249 + $0x13d8] sm:$0xff]
        %v1099 = vld [vmem:[%s249 + $0x13e0] sm:$0xff]
        %v1100 = vld [vmem:[%s249 + $0x13e8] sm:$0xff]
        %v1101 = vld [vmem:[%s249 + $0x13f0] sm:$0xff]
        %v1102 = vld [vmem:[%s249 + $0x13f8] sm:$0xff]
        %v1103 = vld [vmem:[%s249 + $0x1400] sm:$0xff]
        %v1104 = vld [vmem:[%s249 + $0x1408] sm:$0xff]
        %v1105 = vld [vmem:[%s249 + $0x1410] sm:$0xff]
        %v1106 = vld [vmem:[%s249 + $0x1418] sm:$0xff]
        %v1107 = vld [vmem:[%s249 + $0x1420] sm:$0xff]
        %v1108 = vld [vmem:[%s249 + $0x1428] sm:$0xff]
        %v1109 = vld [vmem:[%s249 + $0x1430] sm:$0xff]
        %v1110 = vld [vmem:[%s249 + $0x1438] sm:$0xff]
        %v1111 = vld [vmem:[%s249 + $0x1440] sm:$0xff]
        %v1112 = vld [vmem:[%s249 + $0x1448] sm:$0xff]
        %v1113 = vld [vmem:[%s249 + $0x1450] sm:$0xff]
        %v1114 = vld [vmem:[%s249 + $0x1458] sm:$0xff]
        %v1115 = vld [vmem:[%s249 + $0x1460] sm:$0xff]
        %v1116 = vld [vmem:[%s249 + $0x1468] sm:$0xff]
        %v1117 = vld [vmem:[%s249 + $0x1470] sm:$0xff]
        %v1118 = vld [vmem:[%s249 + $0x1478] sm:$0xff]
        %v1119 = vld [vmem:[%s249 + $0x1480] sm:$0xff]
        %v1120 = vld [vmem:[%s249 + $0x1488] sm:$0xff]
        %v1121 = vld [vmem:[%s249 + $0x1490] sm:$0xff]
        %v1122 = vld [vmem:[%s249 + $0x1498] sm:$0xff]
        %v1123 = vld [vmem:[%s249 + $0x14a0] sm:$0xff]
        %v1124 = vld [vmem:[%s249 + $0x14a8] sm:$0xff]
        %v1125 = vld [vmem:[%s249 + $0x14b0] sm:$0xff]
        %v1126 = vld [vmem:[%s249 + $0x14b8] sm:$0xff]
        %v1127 = vld [vmem:[%s249 + $0x14c0] sm:$0xff]
        %v1128 = vld [vmem:[%s249 + $0x14c8] sm:$0xff]
        %v1129 = vld [vmem:[%s249 + $0x14d0] sm:$0xff]
        %v1130 = vld [vmem:[%s249 + $0x14d8] sm:$0xff]
        %v1131 = vld [vmem:[%s249 + $0x14e0] sm:$0xff]
        %v1132 = vld [vmem:[%s249 + $0x14e8] sm:$0xff]
        %v1133 = vld [vmem:[%s249 + $0x14f0] sm:$0xff]
        %v1134 = vld [vmem:[%s249 + $0x14f8] sm:$0xff]
        %v1135 = vld [vmem:[%s249 + $0x1500] sm:$0xff]
        %v1136 = vld [vmem:[%s249 + $0x1508] sm:$0xff]
        %v1137 = vld [vmem:[%s249 + $0x1510] sm:$0xff]
        %v1138 = vld [vmem:[%s249 + $0x1518] sm:$0xff]
        %v1139 = vld [vmem:[%s249 + $0x1520] sm:$0xff]
        %v1140 = vld [vmem:[%s249 + $0x1528] sm:$0xff]
        %v1141 = vld [vmem:[%s249 + $0x1530] sm:$0xff]
        %v1142 = vld [vmem:[%s249 + $0x1538] sm:$0xff]
        %v1143 = vld [vmem:[%s249 + $0x1540] sm:$0xff]
        %v1144 = vld [vmem:[%s249 + $0x1548] sm:$0xff]
        %v1145 = vld [vmem:[%s249 + $0x1550] sm:$0xff]
        %v1146 = vld [vmem:[%s249 + $0x1558] sm:$0xff]
        %v1147 = vld [vmem:[%s249 + $0x1560] sm:$0xff]
        %v1148 = vld [vmem:[%s249 + $0x1568] sm:$0xff]
        %v1149 = vld [vmem:[%s249 + $0x1570] sm:$0xff]
        %v1150 = vld [vmem:[%s249 + $0x1578] sm:$0xff]
        %v1151 = vld [vmem:[%s249 + $0x1580] sm:$0xff]
        %v1152 = vld [vmem:[%s249 + $0x1588] sm:$0xff]
        %v1153 = vld [vmem:[%s249 + $0x1590] sm:$0xff]
        %v1154 = vld [vmem:[%s249 + $0x1598] sm:$0xff]
        %v1155 = vld [vmem:[%s249 + $0x15a0] sm:$0xff]
        %v1156 = vld [vmem:[%s249 + $0x15a8] sm:$0xff]
        %v1157 = vld [vmem:[%s249 + $0x15b0] sm:$0xff]
        %v1158 = vld [vmem:[%s249 + $0x15b8] sm:$0xff]
        %v1159 = vld [vmem:[%s249 + $0x15c0] sm:$0xff]
        %v1160 = vld [vmem:[%s249 + $0x15c8] sm:$0xff]
        %v1161 = vld [vmem:[%s249 + $0x15d0] sm:$0xff]
        %v1162 = vld [vmem:[%s249 + $0x15d8] sm:$0xff]
        %v1163 = vld [vmem:[%s249 + $0x15e0] sm:$0xff]
        %v1164 = vld [vmem:[%s249 + $0x15e8] sm:$0xff]
        %v1165 = vld [vmem:[%s249 + $0x15f0] sm:$0xff]
        %v1166 = vld [vmem:[%s249 + $0x15f8] sm:$0xff]
        %v1167 = vld [vmem:[%s249 + $0x1600] sm:$0xff]
        %v1168 = vld [vmem:[%s249 + $0x1608] sm:$0xff]
        %v1169 = vld [vmem:[%s249 + $0x1610] sm:$0xff]
        %v1170 = vld [vmem:[%s249 + $0x1618] sm:$0xff]
        %v1171 = vld [vmem:[%s249 + $0x1620] sm:$0xff]
        %v1172 = vld [vmem:[%s249 + $0x1628] sm:$0xff]
        %v1173 = vld [vmem:[%s249 + $0x1630] sm:$0xff]
        %v1174 = vld [vmem:[%s249 + $0x1638] sm:$0xff]
        %v1175 = vld [vmem:[%s249 + $0x1640] sm:$0xff]
        %v1176 = vld [vmem:[%s249 + $0x1648] sm:$0xff]
        %v1177 = vld [vmem:[%s249 + $0x1650] sm:$0xff]
        %v1178 = vld [vmem:[%s249 + $0x1658] sm:$0xff]
        %v1179 = vld [vmem:[%s249 + $0x1660] sm:$0xff]
        %v1180 = vld [vmem:[%s249 + $0x1668] sm:$0xff]
        %v1181 = vld [vmem:[%s249 + $0x1670] sm:$0xff]
        %v1182 = vld [vmem:[%s249 + $0x1678] sm:$0xff]
        %v1183 = vld [vmem:[%s249 + $0x1680] sm:$0xff]
        %v1184 = vld [vmem:[%s249 + $0x1688] sm:$0xff]
        %v1185 = vld [vmem:[%s249 + $0x1690] sm:$0xff]
        %v1186 = vld [vmem:[%s249 + $0x1698] sm:$0xff]
        %v1187 = vld [vmem:[%s249 + $0x16a0] sm:$0xff]
        %v1188 = vld [vmem:[%s249 + $0x16a8] sm:$0xff]
        %v1189 = vld [vmem:[%s249 + $0x16b0] sm:$0xff]
        %v1190 = vld [vmem:[%s249 + $0x16b8] sm:$0xff]
        %v1191 = vld [vmem:[%s249 + $0x16c0] sm:$0xff]
        %v1192 = vld [vmem:[%s249 + $0x16c8] sm:$0xff]
        %v1193 = vld [vmem:[%s249 + $0x16d0] sm:$0xff]
        %v1194 = vld [vmem:[%s249 + $0x16d8] sm:$0xff]
        %v1195 = vld [vmem:[%s249 + $0x16e0] sm:$0xff]
        %v1196 = vld [vmem:[%s249 + $0x16e8] sm:$0xff]
        %v1197 = vld [vmem:[%s249 + $0x16f0] sm:$0xff]
        %v1198 = vld [vmem:[%s249 + $0x16f8] sm:$0xff]
        %v1199 = vld [vmem:[%s249 + $0x1700] sm:$0xff]
        %v1200 = vld [vmem:[%s249 + $0x1708] sm:$0xff]
        %v1201 = vld [vmem:[%s249 + $0x1710] sm:$0xff]
        %v1202 = vld [vmem:[%s249 + $0x1718] sm:$0xff]
        %v1203 = vld [vmem:[%s249 + $0x1720] sm:$0xff]
        %v1204 = vld [vmem:[%s249 + $0x1728] sm:$0xff]
        %v1205 = vld [vmem:[%s249 + $0x1730] sm:$0xff]
        %v1206 = vld [vmem:[%s249 + $0x1738] sm:$0xff]
        %v1207 = vld [vmem:[%s249 + $0x1740] sm:$0xff]
        %v1208 = vld [vmem:[%s249 + $0x1748] sm:$0xff]
        %v1209 = vld [vmem:[%s249 + $0x1750] sm:$0xff]
        %v1210 = vld [vmem:[%s249 + $0x1758] sm:$0xff]
        %v1211 = vld [vmem:[%s249 + $0x1760] sm:$0xff]
        %v1212 = vld [vmem:[%s249 + $0x1768] sm:$0xff]
        %v1213 = vld [vmem:[%s249 + $0x1770] sm:$0xff]
        %v1214 = vld [vmem:[%s249 + $0x1778] sm:$0xff]
        %v1215 = vld [vmem:[%s249 + $0x1780] sm:$0xff]
        %v1216 = vld [vmem:[%s249 + $0x1788] sm:$0xff]
        %v1217 = vld [vmem:[%s249 + $0x1790] sm:$0xff]
        %v1218 = vld [vmem:[%s249 + $0x1798] sm:$0xff]
        %v1219 = vld [vmem:[%s249 + $0x17a0] sm:$0xff]
        %v1220 = vld [vmem:[%s249 + $0x17a8] sm:$0xff]
        %v1221 = vld [vmem:[%s249 + $0x17b0] sm:$0xff]
        %v1222 = vld [vmem:[%s249 + $0x17b8] sm:$0xff]
        %v1223 = vld [vmem:[%s249 + $0x17c0] sm:$0xff]
        %v1224 = vld [vmem:[%s249 + $0x17c8] sm:$0xff]
        %v1225 = vld [vmem:[%s249 + $0x17d0] sm:$0xff]
        %v1226 = vld [vmem:[%s249 + $0x17d8] sm:$0xff]
        %v1227 = vld [vmem:[%s249 + $0x17e0] sm:$0xff]
        %v1228 = vld [vmem:[%s249 + $0x17e8] sm:$0xff]
        %v1229 = vld [vmem:[%s249 + $0x17f0] sm:$0xff]
        %v1230 = vld [vmem:[%s249 + $0x17f8] sm:$0xff]
        %v1999 = vunpack.c.l.b16 %v463
        %v2000 = vunpack.c.h.b16 %v463
        %v2001 = vunpack.c.l.b16 %v464
        %v2002 = vunpack.c.h.b16 %v464
        %v2003 = vunpack.c.l.b16 %v465
        %v2004 = vunpack.c.h.b16 %v465
        %v2005 = vunpack.c.l.b16 %v466
        %v2006 = vunpack.c.h.b16 %v466
        %v2007 = vunpack.c.l.b16 %v467
        %v2008 = vunpack.c.h.b16 %v467
        %v2009 = vunpack.c.l.b16 %v468
        %v2010 = vunpack.c.h.b16 %v468
        %v2011 = vunpack.c.l.b16 %v469
        %v2012 = vunpack.c.h.b16 %v469
        %v2013 = vunpack.c.l.b16 %v470
        %v2014 = vunpack.c.h.b16 %v470
        %v2015 = vunpack.c.l.b16 %v471
        %v2016 = vunpack.c.h.b16 %v471
        %v2017 = vunpack.c.l.b16 %v472
        %v2018 = vunpack.c.h.b16 %v472
        %v2019 = vunpack.c.l.b16 %v473
        %v2020 = vunpack.c.h.b16 %v473
        %v2021 = vunpack.c.l.b16 %v474
        %v2022 = vunpack.c.h.b16 %v474
        %v2023 = vunpack.c.l.b16 %v475
        %v2024 = vunpack.c.h.b16 %v475
        %v2025 = vunpack.c.l.b16 %v476
        %v2026 = vunpack.c.h.b16 %v476
        %v2027 = vunpack.c.l.b16 %v477
        %v2028 = vunpack.c.h.b16 %v477
        %v2029 = vunpack.c.l.b16 %v478
        %v2030 = vunpack.c.h.b16 %v478
        %v2031 = vunpack.c.l.b16 %v479
        %v2032 = vunpack.c.h.b16 %v479
        %v2033 = vunpack.c.l.b16 %v480
        %v2034 = vunpack.c.h.b16 %v480
        %v2035 = vunpack.c.l.b16 %v481
        %v2036 = vunpack.c.h.b16 %v481
        %v2037 = vunpack.c.l.b16 %v482
        %v2038 = vunpack.c.h.b16 %v482
        %v2039 = vunpack.c.l.b16 %v483
        %v2040 = vunpack.c.h.b16 %v483
        %v2041 = vunpack.c.l.b16 %v484
        %v2042 = vunpack.c.h.b16 %v484
        %v2043 = vunpack.c.l.b16 %v485
        %v2044 = vunpack.c.h.b16 %v485
        %v2045 = vunpack.c.l.b16 %v486
        %v2046 = vunpack.c.h.b16 %v486
        %v2047 = vunpack.c.l.b16 %v487
        %v2048 = vunpack.c.h.b16 %v487
        %v2049 = vunpack.c.l.b16 %v488
        %v2050 = vunpack.c.h.b16 %v488
        %v2051 = vunpack.c.l.b16 %v489
        %v2052 = vunpack.c.h.b16 %v489
        %v2053 = vunpack.c.l.b16 %v490
        %v2054 = vunpack.c.h.b16 %v490
        %v2055 = vunpack.c.l.b16 %v491
        %v2056 = vunpack.c.h.b16 %v491
        %v2057 = vunpack.c.l.b16 %v492
        %v2058 = vunpack.c.h.b16 %v492
        %v2059 = vunpack.c.l.b16 %v493
        %v2060 = vunpack.c.h.b16 %v493
        %v2061 = vunpack.c.l.b16 %v494
        %v2062 = vunpack.c.h.b16 %v494
        %v2063 = vunpack.c.l.b16 %v495
        %v2064 = vunpack.c.h.b16 %v495
        %v2065 = vunpack.c.l.b16 %v496
        %v2066 = vunpack.c.h.b16 %v496
        %v2067 = vunpack.c.l.b16 %v497
        %v2068 = vunpack.c.h.b16 %v497
        %v2069 = vunpack.c.l.b16 %v498
        %v2070 = vunpack.c.h.b16 %v498
        %v2071 = vunpack.c.l.b16 %v499
        %v2072 = vunpack.c.h.b16 %v499
        %v2073 = vunpack.c.l.b16 %v500
        %v2074 = vunpack.c.h.b16 %v500
        %v2075 = vunpack.c.l.b16 %v501
        %v2076 = vunpack.c.h.b16 %v501
        %v2077 = vunpack.c.l.b16 %v502
        %v2078 = vunpack.c.h.b16 %v502
        %v2079 = vunpack.c.l.b16 %v503
        %v2080 = vunpack.c.h.b16 %v503
        %v2081 = vunpack.c.l.b16 %v504
        %v2082 = vunpack.c.h.b16 %v504
        %v2083 = vunpack.c.l.b16 %v505
        %v2084 = vunpack.c.h.b16 %v505
        %v2085 = vunpack.c.l.b16 %v506
        %v2086 = vunpack.c.h.b16 %v506
        %v2087 = vunpack.c.l.b16 %v507
        %v2088 = vunpack.c.h.b16 %v507
        %v2089 = vunpack.c.l.b16 %v508
        %v2090 = vunpack.c.h.b16 %v508
        %v2091 = vunpack.c.l.b16 %v509
        %v2092 = vunpack.c.h.b16 %v509
        %v2093 = vunpack.c.l.b16 %v510
        %v2094 = vunpack.c.h.b16 %v510
        %v2095 = vunpack.c.l.b16 %v511
        %v2096 = vunpack.c.h.b16 %v511
        %v2097 = vunpack.c.l.b16 %v512
        %v2098 = vunpack.c.h.b16 %v512
        %v2099 = vunpack.c.l.b16 %v513
        %v2100 = vunpack.c.h.b16 %v513
        %v2101 = vunpack.c.l.b16 %v514
        %v2102 = vunpack.c.h.b16 %v514
        %v2103 = vunpack.c.l.b16 %v515
        %v2104 = vunpack.c.h.b16 %v515
        %v2105 = vunpack.c.l.b16 %v516
        %v2106 = vunpack.c.h.b16 %v516
        %v2107 = vunpack.c.l.b16 %v517
        %v2108 = vunpack.c.h.b16 %v517
        %v2109 = vunpack.c.l.b16 %v518
        %v2110 = vunpack.c.h.b16 %v518
        %v2111 = vunpack.c.l.b16 %v519
        %v2112 = vunpack.c.h.b16 %v519
        %v2113 = vunpack.c.l.b16 %v520
        %v2114 = vunpack.c.h.b16 %v520
        %v2115 = vunpack.c.l.b16 %v521
        %v2116 = vunpack.c.h.b16 %v521
        %v2117 = vunpack.c.l.b16 %v522
        %v2118 = vunpack.c.h.b16 %v522
        %v2119 = vunpack.c.l.b16 %v523
        %v2120 = vunpack.c.h.b16 %v523
        %v2121 = vunpack.c.l.b16 %v524
        %v2122 = vunpack.c.h.b16 %v524
        %v2123 = vunpack.c.l.b16 %v525
        %v2124 = vunpack.c.h.b16 %v525
        %v2125 = vunpack.c.l.b16 %v526
        %v2126 = vunpack.c.h.b16 %v526
        %v2127 = vunpack.c.l.b16 %v527
        %v2128 = vunpack.c.h.b16 %v527
        %v2129 = vunpack.c.l.b16 %v528
        %v2130 = vunpack.c.h.b16 %v528
        %v2131 = vunpack.c.l.b16 %v529
        %v2132 = vunpack.c.h.b16 %v529
        %v2133 = vunpack.c.l.b16 %v530
        %v2134 = vunpack.c.h.b16 %v530
        %v2135 = vunpack.c.l.b16 %v531
        %v2136 = vunpack.c.h.b16 %v531
        %v2137 = vunpack.c.l.b16 %v532
        %v2138 = vunpack.c.h.b16 %v532
        %v2139 = vunpack.c.l.b16 %v533
        %v2140 = vunpack.c.h.b16 %v533
        %v2141 = vunpack.c.l.b16 %v534
        %v2142 = vunpack.c.h.b16 %v534
        %v2143 = vunpack.c.l.b16 %v535
        %v2144 = vunpack.c.h.b16 %v535
        %v2145 = vunpack.c.l.b16 %v536
        %v2146 = vunpack.c.h.b16 %v536
        %v2147 = vunpack.c.l.b16 %v537
        %v2148 = vunpack.c.h.b16 %v537
        %v2149 = vunpack.c.l.b16 %v538
        %v2150 = vunpack.c.h.b16 %v538
        %v2151 = vunpack.c.l.b16 %v539
        %v2152 = vunpack.c.h.b16 %v539
        %v2153 = vunpack.c.l.b16 %v540
        %v2154 = vunpack.c.h.b16 %v540
        %v2155 = vunpack.c.l.b16 %v541
        %v2156 = vunpack.c.h.b16 %v541
        %v2157 = vunpack.c.l.b16 %v542
        %v2158 = vunpack.c.h.b16 %v542
        %v2159 = vunpack.c.l.b16 %v543
        %v2160 = vunpack.c.h.b16 %v543
        %v2161 = vunpack.c.l.b16 %v544
        %v2162 = vunpack.c.h.b16 %v544
        %v2163 = vunpack.c.l.b16 %v545
        %v2164 = vunpack.c.h.b16 %v545
        %v2165 = vunpack.c.l.b16 %v546
        %v2166 = vunpack.c.h.b16 %v546
        %v2167 = vunpack.c.l.b16 %v547
        %v2168 = vunpack.c.h.b16 %v547
        %v2169 = vunpack.c.l.b16 %v548
        %v2170 = vunpack.c.h.b16 %v548
        %v2171 = vunpack.c.l.b16 %v549
        %v2172 = vunpack.c.h.b16 %v549
        %v2173 = vunpack.c.l.b16 %v550
        %v2174 = vunpack.c.h.b16 %v550
        %v2175 = vunpack.c.l.b16 %v551
        %v2176 = vunpack.c.h.b16 %v551
        %v2177 = vunpack.c.l.b16 %v552
        %v2178 = vunpack.c.h.b16 %v552
        %v2179 = vunpack.c.l.b16 %v553
        %v2180 = vunpack.c.h.b16 %v553
        %v2181 = vunpack.c.l.b16 %v554
        %v2182 = vunpack.c.h.b16 %v554
        %v2183 = vunpack.c.l.b16 %v555
        %v2184 = vunpack.c.h.b16 %v555
        %v2185 = vunpack.c.l.b16 %v556
        %v2186 = vunpack.c.h.b16 %v556
        %v2187 = vunpack.c.l.b16 %v557
        %v2188 = vunpack.c.h.b16 %v557
        %v2189 = vunpack.c.l.b16 %v558
        %v2190 = vunpack.c.h.b16 %v558
        %v2191 = vunpack.c.l.b16 %v559
        %v2192 = vunpack.c.h.b16 %v559
        %v2193 = vunpack.c.l.b16 %v560
        %v2194 = vunpack.c.h.b16 %v560
        %v2195 = vunpack.c.l.b16 %v561
        %v2196 = vunpack.c.h.b16 %v561
        %v2197 = vunpack.c.l.b16 %v562
        %v2198 = vunpack.c.h.b16 %v562
        %v2199 = vunpack.c.l.b16 %v563
        %v2200 = vunpack.c.h.b16 %v563
        %v2201 = vunpack.c.l.b16 %v564
        %v2202 = vunpack.c.h.b16 %v564
        %v2203 = vunpack.c.l.b16 %v565
        %v2204 = vunpack.c.h.b16 %v565
        %v2205 = vunpack.c.l.b16 %v566
        %v2206 = vunpack.c.h.b16 %v566
        %v2207 = vunpack.c.l.b16 %v567
        %v2208 = vunpack.c.h.b16 %v567
        %v2209 = vunpack.c.l.b16 %v568
        %v2210 = vunpack.c.h.b16 %v568
        %v2211 = vunpack.c.l.b16 %v569
        %v2212 = vunpack.c.h.b16 %v569
        %v2213 = vunpack.c.l.b16 %v570
        %v2214 = vunpack.c.h.b16 %v570
        %v2215 = vunpack.c.l.b16 %v571
        %v2216 = vunpack.c.h.b16 %v571
        %v2217 = vunpack.c.l.b16 %v572
        %v2218 = vunpack.c.h.b16 %v572
        %v2219 = vunpack.c.l.b16 %v573
        %v2220 = vunpack.c.h.b16 %v573
        %v2221 = vunpack.c.l.b16 %v574
        %v2222 = vunpack.c.h.b16 %v574
        %v2223 = vunpack.c.l.b16 %v575
        %v2224 = vunpack.c.h.b16 %v575
        %v2225 = vunpack.c.l.b16 %v576
        %v2226 = vunpack.c.h.b16 %v576
        %v2227 = vunpack.c.l.b16 %v577
        %v2228 = vunpack.c.h.b16 %v577
        %v2229 = vunpack.c.l.b16 %v578
        %v2230 = vunpack.c.h.b16 %v578
        %v2231 = vunpack.c.l.b16 %v579
        %v2232 = vunpack.c.h.b16 %v579
        %v2233 = vunpack.c.l.b16 %v580
        %v2234 = vunpack.c.h.b16 %v580
        %v2235 = vunpack.c.l.b16 %v581
        %v2236 = vunpack.c.h.b16 %v581
        %v2237 = vunpack.c.l.b16 %v582
        %v2238 = vunpack.c.h.b16 %v582
        %v2239 = vunpack.c.l.b16 %v583
        %v2240 = vunpack.c.h.b16 %v583
        %v2241 = vunpack.c.l.b16 %v584
        %v2242 = vunpack.c.h.b16 %v584
        %v2243 = vunpack.c.l.b16 %v585
        %v2244 = vunpack.c.h.b16 %v585
        %v2245 = vunpack.c.l.b16 %v586
        %v2246 = vunpack.c.h.b16 %v586
        %v2247 = vunpack.c.l.b16 %v587
        %v2248 = vunpack.c.h.b16 %v587
        %v2249 = vunpack.c.l.b16 %v588
        %v2250 = vunpack.c.h.b16 %v588
        %v2251 = vunpack.c.l.b16 %v589
        %v2252 = vunpack.c.h.b16 %v589
        %v2253 = vunpack.c.l.b16 %v590
        %v2254 = vunpack.c.h.b16 %v590
        %v2255 = vunpack.c.l.b16 %v591
        %v2256 = vunpack.c.h.b16 %v591
        %v2257 = vunpack.c.l.b16 %v592
        %v2258 = vunpack.c.h.b16 %v592
        %v2259 = vunpack.c.l.b16 %v593
        %v2260 = vunpack.c.h.b16 %v593
        %v2261 = vunpack.c.l.b16 %v594
        %v2262 = vunpack.c.h.b16 %v594
        %v2263 = vunpack.c.l.b16 %v595
        %v2264 = vunpack.c.h.b16 %v595
        %v2265 = vunpack.c.l.b16 %v596
        %v2266 = vunpack.c.h.b16 %v596
        %v2267 = vunpack.c.l.b16 %v597
        %v2268 = vunpack.c.h.b16 %v597
        %v2269 = vunpack.c.l.b16 %v598
        %v2270 = vunpack.c.h.b16 %v598
        %v2271 = vunpack.c.l.b16 %v599
        %v2272 = vunpack.c.h.b16 %v599
        %v2273 = vunpack.c.l.b16 %v600
        %v2274 = vunpack.c.h.b16 %v600
        %v2275 = vunpack.c.l.b16 %v601
        %v2276 = vunpack.c.h.b16 %v601
        %v2277 = vunpack.c.l.b16 %v602
        %v2278 = vunpack.c.h.b16 %v602
        %v2279 = vunpack.c.l.b16 %v603
        %v2280 = vunpack.c.h.b16 %v603
        %v2281 = vunpack.c.l.b16 %v604
        %v2282 = vunpack.c.h.b16 %v604
        %v2283 = vunpack.c.l.b16 %v605
        %v2284 = vunpack.c.h.b16 %v605
        %v2285 = vunpack.c.l.b16 %v606
        %v2286 = vunpack.c.h.b16 %v606
        %v2287 = vunpack.c.l.b16 %v607
        %v2288 = vunpack.c.h.b16 %v607
        %v2289 = vunpack.c.l.b16 %v608
        %v2290 = vunpack.c.h.b16 %v608
        %v2291 = vunpack.c.l.b16 %v609
        %v2292 = vunpack.c.h.b16 %v609
        %v2293 = vunpack.c.l.b16 %v610
        %v2294 = vunpack.c.h.b16 %v610
        %v2295 = vunpack.c.l.b16 %v611
        %v2296 = vunpack.c.h.b16 %v611
        %v2297 = vunpack.c.l.b16 %v612
        %v2298 = vunpack.c.h.b16 %v612
        %v2299 = vunpack.c.l.b16 %v613
        %v2300 = vunpack.c.h.b16 %v613
        %v2301 = vunpack.c.l.b16 %v614
        %v2302 = vunpack.c.h.b16 %v614
        %v2303 = vunpack.c.l.b16 %v615
        %v2304 = vunpack.c.h.b16 %v615
        %v2305 = vunpack.c.l.b16 %v616
        %v2306 = vunpack.c.h.b16 %v616
        %v2307 = vunpack.c.l.b16 %v617
        %v2308 = vunpack.c.h.b16 %v617
        %v2309 = vunpack.c.l.b16 %v618
        %v2310 = vunpack.c.h.b16 %v618
        %v2311 = vunpack.c.l.b16 %v619
        %v2312 = vunpack.c.h.b16 %v619
        %v2313 = vunpack.c.l.b16 %v620
        %v2314 = vunpack.c.h.b16 %v620
        %v2315 = vunpack.c.l.b16 %v621
        %v2316 = vunpack.c.h.b16 %v621
        %v2317 = vunpack.c.l.b16 %v622
        %v2318 = vunpack.c.h.b16 %v622
        %v2319 = vunpack.c.l.b16 %v623
        %v2320 = vunpack.c.h.b16 %v623
        %v2321 = vunpack.c.l.b16 %v624
        %v2322 = vunpack.c.h.b16 %v624
        %v2323 = vunpack.c.l.b16 %v625
        %v2324 = vunpack.c.h.b16 %v625
        %v2325 = vunpack.c.l.b16 %v626
        %v2326 = vunpack.c.h.b16 %v626
        %v2327 = vunpack.c.l.b16 %v627
        %v2328 = vunpack.c.h.b16 %v627
        %v2329 = vunpack.c.l.b16 %v628
        %v2330 = vunpack.c.h.b16 %v628
        %v2331 = vunpack.c.l.b16 %v629
        %v2332 = vunpack.c.h.b16 %v629
        %v2333 = vunpack.c.l.b16 %v630
        %v2334 = vunpack.c.h.b16 %v630
        %v2335 = vunpack.c.l.b16 %v631
        %v2336 = vunpack.c.h.b16 %v631
        %v2337 = vunpack.c.l.b16 %v632
        %v2338 = vunpack.c.h.b16 %v632
        %v2339 = vunpack.c.l.b16 %v633
        %v2340 = vunpack.c.h.b16 %v633
        %v2341 = vunpack.c.l.b16 %v634
        %v2342 = vunpack.c.h.b16 %v634
        %v2343 = vunpack.c.l.b16 %v635
        %v2344 = vunpack.c.h.b16 %v635
        %v2345 = vunpack.c.l.b16 %v636
        %v2346 = vunpack.c.h.b16 %v636
        %v2347 = vunpack.c.l.b16 %v637
        %v2348 = vunpack.c.h.b16 %v637
        %v2349 = vunpack.c.l.b16 %v638
        %v2350 = vunpack.c.h.b16 %v638
        %v2351 = vunpack.c.l.b16 %v639
        %v2352 = vunpack.c.h.b16 %v639
        %v2353 = vunpack.c.l.b16 %v640
        %v2354 = vunpack.c.h.b16 %v640
        %v2355 = vunpack.c.l.b16 %v641
        %v2356 = vunpack.c.h.b16 %v641
        %v2357 = vunpack.c.l.b16 %v642
        %v2358 = vunpack.c.h.b16 %v642
        %v2359 = vunpack.c.l.b16 %v643
        %v2360 = vunpack.c.h.b16 %v643
        %v2361 = vunpack.c.l.b16 %v644
        %v2362 = vunpack.c.h.b16 %v644
        %v2363 = vunpack.c.l.b16 %v645
        %v2364 = vunpack.c.h.b16 %v645
        %v2365 = vunpack.c.l.b16 %v646
        %v2366 = vunpack.c.h.b16 %v646
        %v2367 = vunpack.c.l.b16 %v647
        %v2368 = vunpack.c.h.b16 %v647
        %v2369 = vunpack.c.l.b16 %v648
        %v2370 = vunpack.c.h.b16 %v648
        %v2371 = vunpack.c.l.b16 %v649
        %v2372 = vunpack.c.h.b16 %v649
        %v2373 = vunpack.c.l.b16 %v650
        %v2374 = vunpack.c.h.b16 %v650
        %v2375 = vunpack.c.l.b16 %v651
        %v2376 = vunpack.c.h.b16 %v651
        %v2377 = vunpack.c.l.b16 %v652
        %v2378 = vunpack.c.h.b16 %v652
        %v2379 = vunpack.c.l.b16 %v653
        %v2380 = vunpack.c.h.b16 %v653
        %v2381 = vunpack.c.l.b16 %v654
        %v2382 = vunpack.c.h.b16 %v654
        %v2383 = vunpack.c.l.b16 %v655
        %v2384 = vunpack.c.h.b16 %v655
        %v2385 = vunpack.c.l.b16 %v656
        %v2386 = vunpack.c.h.b16 %v656
        %v2387 = vunpack.c.l.b16 %v657
        %v2388 = vunpack.c.h.b16 %v657
        %v2389 = vunpack.c.l.b16 %v658
        %v2390 = vunpack.c.h.b16 %v658
        %v2391 = vunpack.c.l.b16 %v659
        %v2392 = vunpack.c.h.b16 %v659
        %v2393 = vunpack.c.l.b16 %v660
        %v2394 = vunpack.c.h.b16 %v660
        %v2395 = vunpack.c.l.b16 %v661
        %v2396 = vunpack.c.h.b16 %v661
        %v2397 = vunpack.c.l.b16 %v662
        %v2398 = vunpack.c.h.b16 %v662
        %v2399 = vunpack.c.l.b16 %v663
        %v2400 = vunpack.c.h.b16 %v663
        %v2401 = vunpack.c.l.b16 %v664
        %v2402 = vunpack.c.h.b16 %v664
        %v2403 = vunpack.c.l.b16 %v665
        %v2404 = vunpack.c.h.b16 %v665
        %v2405 = vunpack.c.l.b16 %v666
        %v2406 = vunpack.c.h.b16 %v666
        %v2407 = vunpack.c.l.b16 %v667
        %v2408 = vunpack.c.h.b16 %v667
        %v2409 = vunpack.c.l.b16 %v668
        %v2410 = vunpack.c.h.b16 %v668
        %v2411 = vunpack.c.l.b16 %v669
        %v2412 = vunpack.c.h.b16 %v669
        %v2413 = vunpack.c.l.b16 %v670
        %v2414 = vunpack.c.h.b16 %v670
        %v2415 = vunpack.c.l.b16 %v671
        %v2416 = vunpack.c.h.b16 %v671
        %v2417 = vunpack.c.l.b16 %v672
        %v2418 = vunpack.c.h.b16 %v672
        %v2419 = vunpack.c.l.b16 %v673
        %v2420 = vunpack.c.h.b16 %v673
        %v2421 = vunpack.c.l.b16 %v674
        %v2422 = vunpack.c.h.b16 %v674
        %v2423 = vunpack.c.l.b16 %v675
        %v2424 = vunpack.c.h.b16 %v675
        %v2425 = vunpack.c.l.b16 %v676
        %v2426 = vunpack.c.h.b16 %v676
        %v2427 = vunpack.c.l.b16 %v677
        %v2428 = vunpack.c.h.b16 %v677
        %v2429 = vunpack.c.l.b16 %v678
        %v2430 = vunpack.c.h.b16 %v678
        %v2431 = vunpack.c.l.b16 %v679
        %v2432 = vunpack.c.h.b16 %v679
        %v2433 = vunpack.c.l.b16 %v680
        %v2434 = vunpack.c.h.b16 %v680
        %v2435 = vunpack.c.l.b16 %v681
        %v2436 = vunpack.c.h.b16 %v681
        %v2437 = vunpack.c.l.b16 %v682
        %v2438 = vunpack.c.h.b16 %v682
        %v2439 = vunpack.c.l.b16 %v683
        %v2440 = vunpack.c.h.b16 %v683
        %v2441 = vunpack.c.l.b16 %v684
        %v2442 = vunpack.c.h.b16 %v684
        %v2443 = vunpack.c.l.b16 %v685
        %v2444 = vunpack.c.h.b16 %v685
        %v2445 = vunpack.c.l.b16 %v686
        %v2446 = vunpack.c.h.b16 %v686
        %v2447 = vunpack.c.l.b16 %v687
        %v2448 = vunpack.c.h.b16 %v687
        %v2449 = vunpack.c.l.b16 %v688
        %v2450 = vunpack.c.h.b16 %v688
        %v2451 = vunpack.c.l.b16 %v689
        %v2452 = vunpack.c.h.b16 %v689
        %v2453 = vunpack.c.l.b16 %v690
        %v2454 = vunpack.c.h.b16 %v690
        %v2455 = vunpack.c.l.b16 %v691
        %v2456 = vunpack.c.h.b16 %v691
        %v2457 = vunpack.c.l.b16 %v692
        %v2458 = vunpack.c.h.b16 %v692
        %v2459 = vunpack.c.l.b16 %v693
        %v2460 = vunpack.c.h.b16 %v693
        %v2461 = vunpack.c.l.b16 %v694
        %v2462 = vunpack.c.h.b16 %v694
        %v2463 = vunpack.c.l.b16 %v695
        %v2464 = vunpack.c.h.b16 %v695
        %v2465 = vunpack.c.l.b16 %v696
        %v2466 = vunpack.c.h.b16 %v696
        %v2467 = vunpack.c.l.b16 %v697
        %v2468 = vunpack.c.h.b16 %v697
        %v2469 = vunpack.c.l.b16 %v698
        %v2470 = vunpack.c.h.b16 %v698
        %v2471 = vunpack.c.l.b16 %v699
        %v2472 = vunpack.c.h.b16 %v699
        %v2473 = vunpack.c.l.b16 %v700
        %v2474 = vunpack.c.h.b16 %v700
        %v2475 = vunpack.c.l.b16 %v701
        %v2476 = vunpack.c.h.b16 %v701
        %v2477 = vunpack.c.l.b16 %v702
        %v2478 = vunpack.c.h.b16 %v702
        %v2479 = vunpack.c.l.b16 %v703
        %v2480 = vunpack.c.h.b16 %v703
        %v2481 = vunpack.c.l.b16 %v704
        %v2482 = vunpack.c.h.b16 %v704
        %v2483 = vunpack.c.l.b16 %v705
        %v2484 = vunpack.c.h.b16 %v705
        %v2485 = vunpack.c.l.b16 %v706
        %v2486 = vunpack.c.h.b16 %v706
        %v2487 = vunpack.c.l.b16 %v707
        %v2488 = vunpack.c.h.b16 %v707
        %v2489 = vunpack.c.l.b16 %v708
        %v2490 = vunpack.c.h.b16 %v708
        %v2491 = vunpack.c.l.b16 %v709
        %v2492 = vunpack.c.h.b16 %v709
        %v2493 = vunpack.c.l.b16 %v710
        %v2494 = vunpack.c.h.b16 %v710
        %v2495 = vunpack.c.l.b16 %v711
        %v2496 = vunpack.c.h.b16 %v711
        %v2497 = vunpack.c.l.b16 %v712
        %v2498 = vunpack.c.h.b16 %v712
        %v2499 = vunpack.c.l.b16 %v713
        %v2500 = vunpack.c.h.b16 %v713
        %v2501 = vunpack.c.l.b16 %v714
        %v2502 = vunpack.c.h.b16 %v714
        %v2503 = vunpack.c.l.b16 %v715
        %v2504 = vunpack.c.h.b16 %v715
        %v2505 = vunpack.c.l.b16 %v716
        %v2506 = vunpack.c.h.b16 %v716
        %v2507 = vunpack.c.l.b16 %v717
        %v2508 = vunpack.c.h.b16 %v717
        %v2509 = vunpack.c.l.b16 %v718
        %v2510 = vunpack.c.h.b16 %v718
        %v2511 = vunpack.c.l.b16 %v719
        %v2512 = vunpack.c.h.b16 %v719
        %v2513 = vunpack.c.l.b16 %v720
        %v2514 = vunpack.c.h.b16 %v720
        %v2515 = vunpack.c.l.b16 %v721
        %v2516 = vunpack.c.h.b16 %v721
        %v2517 = vunpack.c.l.b16 %v722
        %v2518 = vunpack.c.h.b16 %v722
        %v2519 = vunpack.c.l.b16 %v723
        %v2520 = vunpack.c.h.b16 %v723
        %v2521 = vunpack.c.l.b16 %v724
        %v2522 = vunpack.c.h.b16 %v724
        %v2523 = vunpack.c.l.b16 %v725
        %v2524 = vunpack.c.h.b16 %v725
        %v2525 = vunpack.c.l.b16 %v726
        %v2526 = vunpack.c.h.b16 %v726
        %v2527 = vunpack.c.l.b16 %v727
        %v2528 = vunpack.c.h.b16 %v727
        %v2529 = vunpack.c.l.b16 %v728
        %v2530 = vunpack.c.h.b16 %v728
        %v2531 = vunpack.c.l.b16 %v729
        %v2532 = vunpack.c.h.b16 %v729
        %v2533 = vunpack.c.l.b16 %v730
        %v2534 = vunpack.c.h.b16 %v730
        %v2535 = vunpack.c.l.b16 %v731
        %v2536 = vunpack.c.h.b16 %v731
        %v2537 = vunpack.c.l.b16 %v732
        %v2538 = vunpack.c.h.b16 %v732
        %v2539 = vunpack.c.l.b16 %v733
        %v2540 = vunpack.c.h.b16 %v733
        %v2541 = vunpack.c.l.b16 %v734
        %v2542 = vunpack.c.h.b16 %v734
        %v2543 = vunpack.c.l.b16 %v735
        %v2544 = vunpack.c.h.b16 %v735
        %v2545 = vunpack.c.l.b16 %v736
        %v2546 = vunpack.c.h.b16 %v736
        %v2547 = vunpack.c.l.b16 %v737
        %v2548 = vunpack.c.h.b16 %v737
        %v2549 = vunpack.c.l.b16 %v738
        %v2550 = vunpack.c.h.b16 %v738
        %v2551 = vunpack.c.l.b16 %v739
        %v2552 = vunpack.c.h.b16 %v739
        %v2553 = vunpack.c.l.b16 %v740
        %v2554 = vunpack.c.h.b16 %v740
        %v2555 = vunpack.c.l.b16 %v741
        %v2556 = vunpack.c.h.b16 %v741
        %v2557 = vunpack.c.l.b16 %v742
        %v2558 = vunpack.c.h.b16 %v742
        %v2559 = vunpack.c.l.b16 %v743
        %v2560 = vunpack.c.h.b16 %v743
        %v2561 = vunpack.c.l.b16 %v744
        %v2562 = vunpack.c.h.b16 %v744
        %v2563 = vunpack.c.l.b16 %v745
        %v2564 = vunpack.c.h.b16 %v745
        %v2565 = vunpack.c.l.b16 %v746
        %v2566 = vunpack.c.h.b16 %v746
        %v2567 = vunpack.c.l.b16 %v747
        %v2568 = vunpack.c.h.b16 %v747
        %v2569 = vunpack.c.l.b16 %v748
        %v2570 = vunpack.c.h.b16 %v748
        %v2571 = vunpack.c.l.b16 %v749
        %v2572 = vunpack.c.h.b16 %v749
        %v2573 = vunpack.c.l.b16 %v750
        %v2574 = vunpack.c.h.b16 %v750
        %v2575 = vunpack.c.l.b16 %v751
        %v2576 = vunpack.c.h.b16 %v751
        %v2577 = vunpack.c.l.b16 %v752
        %v2578 = vunpack.c.h.b16 %v752
        %v2579 = vunpack.c.l.b16 %v753
        %v2580 = vunpack.c.h.b16 %v753
        %v2581 = vunpack.c.l.b16 %v754
        %v2582 = vunpack.c.h.b16 %v754
        %v2583 = vunpack.c.l.b16 %v755
        %v2584 = vunpack.c.h.b16 %v755
        %v2585 = vunpack.c.l.b16 %v756
        %v2586 = vunpack.c.h.b16 %v756
        %v2587 = vunpack.c.l.b16 %v757
        %v2588 = vunpack.c.h.b16 %v757
        %v2589 = vunpack.c.l.b16 %v758
        %v2590 = vunpack.c.h.b16 %v758
        %v2591 = vunpack.c.l.b16 %v759
        %v2592 = vunpack.c.h.b16 %v759
        %v2593 = vunpack.c.l.b16 %v760
        %v2594 = vunpack.c.h.b16 %v760
        %v2595 = vunpack.c.l.b16 %v761
        %v2596 = vunpack.c.h.b16 %v761
        %v2597 = vunpack.c.l.b16 %v762
        %v2598 = vunpack.c.h.b16 %v762
        %v2599 = vunpack.c.l.b16 %v763
        %v2600 = vunpack.c.h.b16 %v763
        %v2601 = vunpack.c.l.b16 %v764
        %v2602 = vunpack.c.h.b16 %v764
        %v2603 = vunpack.c.l.b16 %v765
        %v2604 = vunpack.c.h.b16 %v765
        %v2605 = vunpack.c.l.b16 %v766
        %v2606 = vunpack.c.h.b16 %v766
        %v2607 = vunpack.c.l.b16 %v767
        %v2608 = vunpack.c.h.b16 %v767
        %v2609 = vunpack.c.l.b16 %v768
        %v2610 = vunpack.c.h.b16 %v768
        %v2611 = vunpack.c.l.b16 %v769
        %v2612 = vunpack.c.h.b16 %v769
        %v2613 = vunpack.c.l.b16 %v770
        %v2614 = vunpack.c.h.b16 %v770
        %v2615 = vunpack.c.l.b16 %v771
        %v2616 = vunpack.c.h.b16 %v771
        %v2617 = vunpack.c.l.b16 %v772
        %v2618 = vunpack.c.h.b16 %v772
        %v2619 = vunpack.c.l.b16 %v773
        %v2620 = vunpack.c.h.b16 %v773
        %v2621 = vunpack.c.l.b16 %v774
        %v2622 = vunpack.c.h.b16 %v774
        %v2623 = vunpack.c.l.b16 %v775
        %v2624 = vunpack.c.h.b16 %v775
        %v2625 = vunpack.c.l.b16 %v776
        %v2626 = vunpack.c.h.b16 %v776
        %v2627 = vunpack.c.l.b16 %v777
        %v2628 = vunpack.c.h.b16 %v777
        %v2629 = vunpack.c.l.b16 %v778
        %v2630 = vunpack.c.h.b16 %v778
        %v2631 = vunpack.c.l.b16 %v779
        %v2632 = vunpack.c.h.b16 %v779
        %v2633 = vunpack.c.l.b16 %v780
        %v2634 = vunpack.c.h.b16 %v780
        %v2635 = vunpack.c.l.b16 %v781
        %v2636 = vunpack.c.h.b16 %v781
        %v2637 = vunpack.c.l.b16 %v782
        %v2638 = vunpack.c.h.b16 %v782
        %v2639 = vunpack.c.l.b16 %v783
        %v2640 = vunpack.c.h.b16 %v783
        %v2641 = vunpack.c.l.b16 %v784
        %v2642 = vunpack.c.h.b16 %v784
        %v2643 = vunpack.c.l.b16 %v785
        %v2644 = vunpack.c.h.b16 %v785
        %v2645 = vunpack.c.l.b16 %v786
        %v2646 = vunpack.c.h.b16 %v786
        %v2647 = vunpack.c.l.b16 %v787
        %v2648 = vunpack.c.h.b16 %v787
        %v2649 = vunpack.c.l.b16 %v788
        %v2650 = vunpack.c.h.b16 %v788
        %v2651 = vunpack.c.l.b16 %v789
        %v2652 = vunpack.c.h.b16 %v789
        %v2653 = vunpack.c.l.b16 %v790
        %v2654 = vunpack.c.h.b16 %v790
        %v2655 = vunpack.c.l.b16 %v791
        %v2656 = vunpack.c.h.b16 %v791
        %v2657 = vunpack.c.l.b16 %v792
        %v2658 = vunpack.c.h.b16 %v792
        %v2659 = vunpack.c.l.b16 %v793
        %v2660 = vunpack.c.h.b16 %v793
        %v2661 = vunpack.c.l.b16 %v794
        %v2662 = vunpack.c.h.b16 %v794
        %v2663 = vunpack.c.l.b16 %v795
        %v2664 = vunpack.c.h.b16 %v795
        %v2665 = vunpack.c.l.b16 %v796
        %v2666 = vunpack.c.h.b16 %v796
        %v2667 = vunpack.c.l.b16 %v797
        %v2668 = vunpack.c.h.b16 %v797
        %v2669 = vunpack.c.l.b16 %v798
        %v2670 = vunpack.c.h.b16 %v798
        %v2671 = vunpack.c.l.b16 %v799
        %v2672 = vunpack.c.h.b16 %v799
        %v2673 = vunpack.c.l.b16 %v800
        %v2674 = vunpack.c.h.b16 %v800
        %v2675 = vunpack.c.l.b16 %v801
        %v2676 = vunpack.c.h.b16 %v801
        %v2677 = vunpack.c.l.b16 %v802
        %v2678 = vunpack.c.h.b16 %v802
        %v2679 = vunpack.c.l.b16 %v803
        %v2680 = vunpack.c.h.b16 %v803
        %v2681 = vunpack.c.l.b16 %v804
        %v2682 = vunpack.c.h.b16 %v804
        %v2683 = vunpack.c.l.b16 %v805
        %v2684 = vunpack.c.h.b16 %v805
        %v2685 = vunpack.c.l.b16 %v806
        %v2686 = vunpack.c.h.b16 %v806
        %v2687 = vunpack.c.l.b16 %v807
        %v2688 = vunpack.c.h.b16 %v807
        %v2689 = vunpack.c.l.b16 %v808
        %v2690 = vunpack.c.h.b16 %v808
        %v2691 = vunpack.c.l.b16 %v809
        %v2692 = vunpack.c.h.b16 %v809
        %v2693 = vunpack.c.l.b16 %v810
        %v2694 = vunpack.c.h.b16 %v810
        %v2695 = vunpack.c.l.b16 %v811
        %v2696 = vunpack.c.h.b16 %v811
        %v2697 = vunpack.c.l.b16 %v812
        %v2698 = vunpack.c.h.b16 %v812
        %v2699 = vunpack.c.l.b16 %v813
        %v2700 = vunpack.c.h.b16 %v813
        %v2701 = vunpack.c.l.b16 %v814
        %v2702 = vunpack.c.h.b16 %v814
        %v2703 = vunpack.c.l.b16 %v815
        %v2704 = vunpack.c.h.b16 %v815
        %v2705 = vunpack.c.l.b16 %v816
        %v2706 = vunpack.c.h.b16 %v816
        %v2707 = vunpack.c.l.b16 %v817
        %v2708 = vunpack.c.h.b16 %v817
        %v2709 = vunpack.c.l.b16 %v818
        %v2710 = vunpack.c.h.b16 %v818
        %v2711 = vunpack.c.l.b16 %v819
        %v2712 = vunpack.c.h.b16 %v819
        %v2713 = vunpack.c.l.b16 %v820
        %v2714 = vunpack.c.h.b16 %v820
        %v2715 = vunpack.c.l.b16 %v821
        %v2716 = vunpack.c.h.b16 %v821
        %v2717 = vunpack.c.l.b16 %v822
        %v2718 = vunpack.c.h.b16 %v822
        %v2719 = vunpack.c.l.b16 %v823
        %v2720 = vunpack.c.h.b16 %v823
        %v2721 = vunpack.c.l.b16 %v824
        %v2722 = vunpack.c.h.b16 %v824
        %v2723 = vunpack.c.l.b16 %v825
        %v2724 = vunpack.c.h.b16 %v825
        %v2725 = vunpack.c.l.b16 %v826
        %v2726 = vunpack.c.h.b16 %v826
        %v2727 = vunpack.c.l.b16 %v827
        %v2728 = vunpack.c.h.b16 %v827
        %v2729 = vunpack.c.l.b16 %v828
        %v2730 = vunpack.c.h.b16 %v828
        %v2731 = vunpack.c.l.b16 %v829
        %v2732 = vunpack.c.h.b16 %v829
        %v2733 = vunpack.c.l.b16 %v830
        %v2734 = vunpack.c.h.b16 %v830
        %v2735 = vunpack.c.l.b16 %v831
        %v2736 = vunpack.c.h.b16 %v831
        %v2737 = vunpack.c.l.b16 %v832
        %v2738 = vunpack.c.h.b16 %v832
        %v2739 = vunpack.c.l.b16 %v833
        %v2740 = vunpack.c.h.b16 %v833
        %v2741 = vunpack.c.l.b16 %v834
        %v2742 = vunpack.c.h.b16 %v834
        %v2743 = vunpack.c.l.b16 %v835
        %v2744 = vunpack.c.h.b16 %v835
        %v2745 = vunpack.c.l.b16 %v836
        %v2746 = vunpack.c.h.b16 %v836
        %v2747 = vunpack.c.l.b16 %v837
        %v2748 = vunpack.c.h.b16 %v837
        %v2749 = vunpack.c.l.b16 %v838
        %v2750 = vunpack.c.h.b16 %v838
        %v2751 = vunpack.c.l.b16 %v839
        %v2752 = vunpack.c.h.b16 %v839
        %v2753 = vunpack.c.l.b16 %v840
        %v2754 = vunpack.c.h.b16 %v840
        %v2755 = vunpack.c.l.b16 %v841
        %v2756 = vunpack.c.h.b16 %v841
        %v2757 = vunpack.c.l.b16 %v842
        %v2758 = vunpack.c.h.b16 %v842
        %v2759 = vunpack.c.l.b16 %v843
        %v2760 = vunpack.c.h.b16 %v843
        %v2761 = vunpack.c.l.b16 %v844
        %v2762 = vunpack.c.h.b16 %v844
        %v2763 = vunpack.c.l.b16 %v845
        %v2764 = vunpack.c.h.b16 %v845
        %v2765 = vunpack.c.l.b16 %v846
        %v2766 = vunpack.c.h.b16 %v846
        %v2767 = vunpack.c.l.b16 %v847
        %v2768 = vunpack.c.h.b16 %v847
        %v2769 = vunpack.c.l.b16 %v848
        %v2770 = vunpack.c.h.b16 %v848
        %v2771 = vunpack.c.l.b16 %v849
        %v2772 = vunpack.c.h.b16 %v849
        %v2773 = vunpack.c.l.b16 %v850
        %v2774 = vunpack.c.h.b16 %v850
        %v2775 = vunpack.c.l.b16 %v851
        %v2776 = vunpack.c.h.b16 %v851
        %v2777 = vunpack.c.l.b16 %v852
        %v2778 = vunpack.c.h.b16 %v852
        %v2779 = vunpack.c.l.b16 %v853
        %v2780 = vunpack.c.h.b16 %v853
        %v2781 = vunpack.c.l.b16 %v854
        %v2782 = vunpack.c.h.b16 %v854
        %v2783 = vunpack.c.l.b16 %v855
        %v2784 = vunpack.c.h.b16 %v855
        %v2785 = vunpack.c.l.b16 %v856
        %v2786 = vunpack.c.h.b16 %v856
        %v2787 = vunpack.c.l.b16 %v857
        %v2788 = vunpack.c.h.b16 %v857
        %v2789 = vunpack.c.l.b16 %v858
        %v2790 = vunpack.c.h.b16 %v858
        %v2791 = vunpack.c.l.b16 %v859
        %v2792 = vunpack.c.h.b16 %v859
        %v2793 = vunpack.c.l.b16 %v860
        %v2794 = vunpack.c.h.b16 %v860
        %v2795 = vunpack.c.l.b16 %v861
        %v2796 = vunpack.c.h.b16 %v861
        %v2797 = vunpack.c.l.b16 %v862
        %v2798 = vunpack.c.h.b16 %v862
        %v2799 = vunpack.c.l.b16 %v863
        %v2800 = vunpack.c.h.b16 %v863
        %v2801 = vunpack.c.l.b16 %v864
        %v2802 = vunpack.c.h.b16 %v864
        %v2803 = vunpack.c.l.b16 %v865
        %v2804 = vunpack.c.h.b16 %v865
        %v2805 = vunpack.c.l.b16 %v866
        %v2806 = vunpack.c.h.b16 %v866
        %v2807 = vunpack.c.l.b16 %v867
        %v2808 = vunpack.c.h.b16 %v867
        %v2809 = vunpack.c.l.b16 %v868
        %v2810 = vunpack.c.h.b16 %v868
        %v2811 = vunpack.c.l.b16 %v869
        %v2812 = vunpack.c.h.b16 %v869
        %v2813 = vunpack.c.l.b16 %v870
        %v2814 = vunpack.c.h.b16 %v870
        %v2815 = vunpack.c.l.b16 %v871
        %v2816 = vunpack.c.h.b16 %v871
        %v2817 = vunpack.c.l.b16 %v872
        %v2818 = vunpack.c.h.b16 %v872
        %v2819 = vunpack.c.l.b16 %v873
        %v2820 = vunpack.c.h.b16 %v873
        %v2821 = vunpack.c.l.b16 %v874
        %v2822 = vunpack.c.h.b16 %v874
        %v2823 = vunpack.c.l.b16 %v875
        %v2824 = vunpack.c.h.b16 %v875
        %v2825 = vunpack.c.l.b16 %v876
        %v2826 = vunpack.c.h.b16 %v876
        %v2827 = vunpack.c.l.b16 %v877
        %v2828 = vunpack.c.h.b16 %v877
        %v2829 = vunpack.c.l.b16 %v878
        %v2830 = vunpack.c.h.b16 %v878
        %v2831 = vunpack.c.l.b16 %v879
        %v2832 = vunpack.c.h.b16 %v879
        %v2833 = vunpack.c.l.b16 %v880
        %v2834 = vunpack.c.h.b16 %v880
        %v2835 = vunpack.c.l.b16 %v881
        %v2836 = vunpack.c.h.b16 %v881
        %v2837 = vunpack.c.l.b16 %v882
        %v2838 = vunpack.c.h.b16 %v882
        %v2839 = vunpack.c.l.b16 %v883
        %v2840 = vunpack.c.h.b16 %v883
        %v2841 = vunpack.c.l.b16 %v884
        %v2842 = vunpack.c.h.b16 %v884
        %v2843 = vunpack.c.l.b16 %v885
        %v2844 = vunpack.c.h.b16 %v885
        %v2845 = vunpack.c.l.b16 %v886
        %v2846 = vunpack.c.h.b16 %v886
        %v2847 = vunpack.c.l.b16 %v887
        %v2848 = vunpack.c.h.b16 %v887
        %v2849 = vunpack.c.l.b16 %v888
        %v2850 = vunpack.c.h.b16 %v888
        %v2851 = vunpack.c.l.b16 %v889
        %v2852 = vunpack.c.h.b16 %v889
        %v2853 = vunpack.c.l.b16 %v890
        %v2854 = vunpack.c.h.b16 %v890
        %v2855 = vunpack.c.l.b16 %v891
        %v2856 = vunpack.c.h.b16 %v891
        %v2857 = vunpack.c.l.b16 %v892
        %v2858 = vunpack.c.h.b16 %v892
        %v2859 = vunpack.c.l.b16 %v893
        %v2860 = vunpack.c.h.b16 %v893
        %v2861 = vunpack.c.l.b16 %v894
        %v2862 = vunpack.c.h.b16 %v894
        %v2863 = vunpack.c.l.b16 %v895
        %v2864 = vunpack.c.h.b16 %v895
        %v2865 = vunpack.c.l.b16 %v896
        %v2866 = vunpack.c.h.b16 %v896
        %v2867 = vunpack.c.l.b16 %v897
        %v2868 = vunpack.c.h.b16 %v897
        %v2869 = vunpack.c.l.b16 %v898
        %v2870 = vunpack.c.h.b16 %v898
        %v2871 = vunpack.c.l.b16 %v899
        %v2872 = vunpack.c.h.b16 %v899
        %v2873 = vunpack.c.l.b16 %v900
        %v2874 = vunpack.c.h.b16 %v900
        %v2875 = vunpack.c.l.b16 %v901
        %v2876 = vunpack.c.h.b16 %v901
        %v2877 = vunpack.c.l.b16 %v902
        %v2878 = vunpack.c.h.b16 %v902
        %v2879 = vunpack.c.l.b16 %v903
        %v2880 = vunpack.c.h.b16 %v903
        %v2881 = vunpack.c.l.b16 %v904
        %v2882 = vunpack.c.h.b16 %v904
        %v2883 = vunpack.c.l.b16 %v905
        %v2884 = vunpack.c.h.b16 %v905
        %v2885 = vunpack.c.l.b16 %v906
        %v2886 = vunpack.c.h.b16 %v906
        %v2887 = vunpack.c.l.b16 %v907
        %v2888 = vunpack.c.h.b16 %v907
        %v2889 = vunpack.c.l.b16 %v908
        %v2890 = vunpack.c.h.b16 %v908
        %v2891 = vunpack.c.l.b16 %v909
        %v2892 = vunpack.c.h.b16 %v909
        %v2893 = vunpack.c.l.b16 %v910
        %v2894 = vunpack.c.h.b16 %v910
        %v2895 = vunpack.c.l.b16 %v911
        %v2896 = vunpack.c.h.b16 %v911
        %v2897 = vunpack.c.l.b16 %v912
        %v2898 = vunpack.c.h.b16 %v912
        %v2899 = vunpack.c.l.b16 %v913
        %v2900 = vunpack.c.h.b16 %v913
        %v2901 = vunpack.c.l.b16 %v914
        %v2902 = vunpack.c.h.b16 %v914
        %v2903 = vunpack.c.l.b16 %v915
        %v2904 = vunpack.c.h.b16 %v915
        %v2905 = vunpack.c.l.b16 %v916
        %v2906 = vunpack.c.h.b16 %v916
        %v2907 = vunpack.c.l.b16 %v917
        %v2908 = vunpack.c.h.b16 %v917
        %v2909 = vunpack.c.l.b16 %v918
        %v2910 = vunpack.c.h.b16 %v918
        %v2911 = vunpack.c.l.b16 %v919
        %v2912 = vunpack.c.h.b16 %v919
        %v2913 = vunpack.c.l.b16 %v920
        %v2914 = vunpack.c.h.b16 %v920
        %v2915 = vunpack.c.l.b16 %v921
        %v2916 = vunpack.c.h.b16 %v921
        %v2917 = vunpack.c.l.b16 %v922
        %v2918 = vunpack.c.h.b16 %v922
        %v2919 = vunpack.c.l.b16 %v923
        %v2920 = vunpack.c.h.b16 %v923
        %v2921 = vunpack.c.l.b16 %v924
        %v2922 = vunpack.c.h.b16 %v924
        %v2923 = vunpack.c.l.b16 %v925
        %v2924 = vunpack.c.h.b16 %v925
        %v2925 = vunpack.c.l.b16 %v926
        %v2926 = vunpack.c.h.b16 %v926
        %v2927 = vunpack.c.l.b16 %v927
        %v2928 = vunpack.c.h.b16 %v927
        %v2929 = vunpack.c.l.b16 %v928
        %v2930 = vunpack.c.h.b16 %v928
        %v2931 = vunpack.c.l.b16 %v929
        %v2932 = vunpack.c.h.b16 %v929
        %v2933 = vunpack.c.l.b16 %v930
        %v2934 = vunpack.c.h.b16 %v930
        %v2935 = vunpack.c.l.b16 %v931
        %v2936 = vunpack.c.h.b16 %v931
        %v2937 = vunpack.c.l.b16 %v932
        %v2938 = vunpack.c.h.b16 %v932
        %v2939 = vunpack.c.l.b16 %v933
        %v2940 = vunpack.c.h.b16 %v933
        %v2941 = vunpack.c.l.b16 %v934
        %v2942 = vunpack.c.h.b16 %v934
        %v2943 = vunpack.c.l.b16 %v935
        %v2944 = vunpack.c.h.b16 %v935
        %v2945 = vunpack.c.l.b16 %v936
        %v2946 = vunpack.c.h.b16 %v936
        %v2947 = vunpack.c.l.b16 %v937
        %v2948 = vunpack.c.h.b16 %v937
        %v2949 = vunpack.c.l.b16 %v938
        %v2950 = vunpack.c.h.b16 %v938
        %v2951 = vunpack.c.l.b16 %v939
        %v2952 = vunpack.c.h.b16 %v939
        %v2953 = vunpack.c.l.b16 %v940
        %v2954 = vunpack.c.h.b16 %v940
        %v2955 = vunpack.c.l.b16 %v941
        %v2956 = vunpack.c.h.b16 %v941
        %v2957 = vunpack.c.l.b16 %v942
        %v2958 = vunpack.c.h.b16 %v942
        %v2959 = vunpack.c.l.b16 %v943
        %v2960 = vunpack.c.h.b16 %v943
        %v2961 = vunpack.c.l.b16 %v944
        %v2962 = vunpack.c.h.b16 %v944
        %v2963 = vunpack.c.l.b16 %v945
        %v2964 = vunpack.c.h.b16 %v945
        %v2965 = vunpack.c.l.b16 %v946
        %v2966 = vunpack.c.h.b16 %v946
        %v2967 = vunpack.c.l.b16 %v947
        %v2968 = vunpack.c.h.b16 %v947
        %v2969 = vunpack.c.l.b16 %v948
        %v2970 = vunpack.c.h.b16 %v948
        %v2971 = vunpack.c.l.b16 %v949
        %v2972 = vunpack.c.h.b16 %v949
        %v2973 = vunpack.c.l.b16 %v950
        %v2974 = vunpack.c.h.b16 %v950
        %v2975 = vunpack.c.l.b16 %v951
        %v2976 = vunpack.c.h.b16 %v951
        %v2977 = vunpack.c.l.b16 %v952
        %v2978 = vunpack.c.h.b16 %v952
        %v2979 = vunpack.c.l.b16 %v953
        %v2980 = vunpack.c.h.b16 %v953
        %v2981 = vunpack.c.l.b16 %v954
        %v2982 = vunpack.c.h.b16 %v954
        %v2983 = vunpack.c.l.b16 %v955
        %v2984 = vunpack.c.h.b16 %v955
        %v2985 = vunpack.c.l.b16 %v956
        %v2986 = vunpack.c.h.b16 %v956
        %v2987 = vunpack.c.l.b16 %v957
        %v2988 = vunpack.c.h.b16 %v957
        %v2989 = vunpack.c.l.b16 %v958
        %v2990 = vunpack.c.h.b16 %v958
        %v2991 = vunpack.c.l.b16 %v959
        %v2992 = vunpack.c.h.b16 %v959
        %v2993 = vunpack.c.l.b16 %v960
        %v2994 = vunpack.c.h.b16 %v960
        %v2995 = vunpack.c.l.b16 %v961
        %v2996 = vunpack.c.h.b16 %v961
        %v2997 = vunpack.c.l.b16 %v962
        %v2998 = vunpack.c.h.b16 %v962
        %v2999 = vunpack.c.l.b16 %v963
        %v3000 = vunpack.c.h.b16 %v963
        %v3001 = vunpack.c.l.b16 %v964
        %v3002 = vunpack.c.h.b16 %v964
        %v3003 = vunpack.c.l.b16 %v965
        %v3004 = vunpack.c.h.b16 %v965
        %v3005 = vunpack.c.l.b16 %v966
        %v3006 = vunpack.c.h.b16 %v966
        %v3007 = vunpack.c.l.b16 %v967
        %v3008 = vunpack.c.h.b16 %v967
        %v3009 = vunpack.c.l.b16 %v968
        %v3010 = vunpack.c.h.b16 %v968
        %v3011 = vunpack.c.l.b16 %v969
        %v3012 = vunpack.c.h.b16 %v969
        %v3013 = vunpack.c.l.b16 %v970
        %v3014 = vunpack.c.h.b16 %v970
        %v3015 = vunpack.c.l.b16 %v971
        %v3016 = vunpack.c.h.b16 %v971
        %v3017 = vunpack.c.l.b16 %v972
        %v3018 = vunpack.c.h.b16 %v972
        %v3019 = vunpack.c.l.b16 %v973
        %v3020 = vunpack.c.h.b16 %v973
        %v3021 = vunpack.c.l.b16 %v974
        %v3022 = vunpack.c.h.b16 %v974
        %v3023 = vunpack.c.l.b16 %v975
        %v3024 = vunpack.c.h.b16 %v975
        %v3025 = vunpack.c.l.b16 %v976
        %v3026 = vunpack.c.h.b16 %v976
        %v3027 = vunpack.c.l.b16 %v977
        %v3028 = vunpack.c.h.b16 %v977
        %v3029 = vunpack.c.l.b16 %v978
        %v3030 = vunpack.c.h.b16 %v978
        %v3031 = vunpack.c.l.b16 %v979
        %v3032 = vunpack.c.h.b16 %v979
        %v3033 = vunpack.c.l.b16 %v980
        %v3034 = vunpack.c.h.b16 %v980
        %v3035 = vunpack.c.l.b16 %v981
        %v3036 = vunpack.c.h.b16 %v981
        %v3037 = vunpack.c.l.b16 %v982
        %v3038 = vunpack.c.h.b16 %v982
        %v3039 = vunpack.c.l.b16 %v983
        %v3040 = vunpack.c.h.b16 %v983
        %v3041 = vunpack.c.l.b16 %v984
        %v3042 = vunpack.c.h.b16 %v984
        %v3043 = vunpack.c.l.b16 %v985
        %v3044 = vunpack.c.h.b16 %v985
        %v3045 = vunpack.c.l.b16 %v986
        %v3046 = vunpack.c.h.b16 %v986
        %v3047 = vunpack.c.l.b16 %v987
        %v3048 = vunpack.c.h.b16 %v987
        %v3049 = vunpack.c.l.b16 %v988
        %v3050 = vunpack.c.h.b16 %v988
        %v3051 = vunpack.c.l.b16 %v989
        %v3052 = vunpack.c.h.b16 %v989
        %v3053 = vunpack.c.l.b16 %v990
        %v3054 = vunpack.c.h.b16 %v990
        %v3055 = vunpack.c.l.b16 %v991
        %v3056 = vunpack.c.h.b16 %v991
        %v3057 = vunpack.c.l.b16 %v992
        %v3058 = vunpack.c.h.b16 %v992
        %v3059 = vunpack.c.l.b16 %v993
        %v3060 = vunpack.c.h.b16 %v993
        %v3061 = vunpack.c.l.b16 %v994
        %v3062 = vunpack.c.h.b16 %v994
        %v3063 = vunpack.c.l.b16 %v995
        %v3064 = vunpack.c.h.b16 %v995
        %v3065 = vunpack.c.l.b16 %v996
        %v3066 = vunpack.c.h.b16 %v996
        %v3067 = vunpack.c.l.b16 %v997
        %v3068 = vunpack.c.h.b16 %v997
        %v3069 = vunpack.c.l.b16 %v998
        %v3070 = vunpack.c.h.b16 %v998
        %v3071 = vunpack.c.l.b16 %v999
        %v3072 = vunpack.c.h.b16 %v999
        %v3073 = vunpack.c.l.b16 %v1000
        %v3074 = vunpack.c.h.b16 %v1000
        %v3075 = vunpack.c.l.b16 %v1001
        %v3076 = vunpack.c.h.b16 %v1001
        %v3077 = vunpack.c.l.b16 %v1002
        %v3078 = vunpack.c.h.b16 %v1002
        %v3079 = vunpack.c.l.b16 %v1003
        %v3080 = vunpack.c.h.b16 %v1003
        %v3081 = vunpack.c.l.b16 %v1004
        %v3082 = vunpack.c.h.b16 %v1004
        %v3083 = vunpack.c.l.b16 %v1005
        %v3084 = vunpack.c.h.b16 %v1005
        %v3085 = vunpack.c.l.b16 %v1006
        %v3086 = vunpack.c.h.b16 %v1006
        %v3087 = vunpack.c.l.b16 %v1007
        %v3088 = vunpack.c.h.b16 %v1007
        %v3089 = vunpack.c.l.b16 %v1008
        %v3090 = vunpack.c.h.b16 %v1008
        %v3091 = vunpack.c.l.b16 %v1009
        %v3092 = vunpack.c.h.b16 %v1009
        %v3093 = vunpack.c.l.b16 %v1010
        %v3094 = vunpack.c.h.b16 %v1010
        %v3095 = vunpack.c.l.b16 %v1011
        %v3096 = vunpack.c.h.b16 %v1011
        %v3097 = vunpack.c.l.b16 %v1012
        %v3098 = vunpack.c.h.b16 %v1012
        %v3099 = vunpack.c.l.b16 %v1013
        %v3100 = vunpack.c.h.b16 %v1013
        %v3101 = vunpack.c.l.b16 %v1014
        %v3102 = vunpack.c.h.b16 %v1014
        %v3103 = vunpack.c.l.b16 %v1015
        %v3104 = vunpack.c.h.b16 %v1015
        %v3105 = vunpack.c.l.b16 %v1016
        %v3106 = vunpack.c.h.b16 %v1016
        %v3107 = vunpack.c.l.b16 %v1017
        %v3108 = vunpack.c.h.b16 %v1017
        %v3109 = vunpack.c.l.b16 %v1018
        %v3110 = vunpack.c.h.b16 %v1018
        %v3111 = vunpack.c.l.b16 %v1019
        %v3112 = vunpack.c.h.b16 %v1019
        %v3113 = vunpack.c.l.b16 %v1020
        %v3114 = vunpack.c.h.b16 %v1020
        %v3115 = vunpack.c.l.b16 %v1021
        %v3116 = vunpack.c.h.b16 %v1021
        %v3117 = vunpack.c.l.b16 %v1022
        %v3118 = vunpack.c.h.b16 %v1022
        %v3119 = vunpack.c.l.b16 %v1023
        %v3120 = vunpack.c.h.b16 %v1023
        %v3121 = vunpack.c.l.b16 %v1024
        %v3122 = vunpack.c.h.b16 %v1024
        %v3123 = vunpack.c.l.b16 %v1025
        %v3124 = vunpack.c.h.b16 %v1025
        %v3125 = vunpack.c.l.b16 %v1026
        %v3126 = vunpack.c.h.b16 %v1026
        %v3127 = vunpack.c.l.b16 %v1027
        %v3128 = vunpack.c.h.b16 %v1027
        %v3129 = vunpack.c.l.b16 %v1028
        %v3130 = vunpack.c.h.b16 %v1028
        %v3131 = vunpack.c.l.b16 %v1029
        %v3132 = vunpack.c.h.b16 %v1029
        %v3133 = vunpack.c.l.b16 %v1030
        %v3134 = vunpack.c.h.b16 %v1030
        %v3135 = vunpack.c.l.b16 %v1031
        %v3136 = vunpack.c.h.b16 %v1031
        %v3137 = vunpack.c.l.b16 %v1032
        %v3138 = vunpack.c.h.b16 %v1032
        %v3139 = vunpack.c.l.b16 %v1033
        %v3140 = vunpack.c.h.b16 %v1033
        %v3141 = vunpack.c.l.b16 %v1034
        %v3142 = vunpack.c.h.b16 %v1034
        %v3143 = vunpack.c.l.b16 %v1035
        %v3144 = vunpack.c.h.b16 %v1035
        %v3145 = vunpack.c.l.b16 %v1036
        %v3146 = vunpack.c.h.b16 %v1036
        %v3147 = vunpack.c.l.b16 %v1037
        %v3148 = vunpack.c.h.b16 %v1037
        %v3149 = vunpack.c.l.b16 %v1038
        %v3150 = vunpack.c.h.b16 %v1038
        %v3151 = vunpack.c.l.b16 %v1039
        %v3152 = vunpack.c.h.b16 %v1039
        %v3153 = vunpack.c.l.b16 %v1040
        %v3154 = vunpack.c.h.b16 %v1040
        %v3155 = vunpack.c.l.b16 %v1041
        %v3156 = vunpack.c.h.b16 %v1041
        %v3157 = vunpack.c.l.b16 %v1042
        %v3158 = vunpack.c.h.b16 %v1042
        %v3159 = vunpack.c.l.b16 %v1043
        %v3160 = vunpack.c.h.b16 %v1043
        %v3161 = vunpack.c.l.b16 %v1044
        %v3162 = vunpack.c.h.b16 %v1044
        %v3163 = vunpack.c.l.b16 %v1045
        %v3164 = vunpack.c.h.b16 %v1045
        %v3165 = vunpack.c.l.b16 %v1046
        %v3166 = vunpack.c.h.b16 %v1046
        %v3167 = vunpack.c.l.b16 %v1047
        %v3168 = vunpack.c.h.b16 %v1047
        %v3169 = vunpack.c.l.b16 %v1048
        %v3170 = vunpack.c.h.b16 %v1048
        %v3171 = vunpack.c.l.b16 %v1049
        %v3172 = vunpack.c.h.b16 %v1049
        %v3173 = vunpack.c.l.b16 %v1050
        %v3174 = vunpack.c.h.b16 %v1050
        %v3175 = vunpack.c.l.b16 %v1051
        %v3176 = vunpack.c.h.b16 %v1051
        %v3177 = vunpack.c.l.b16 %v1052
        %v3178 = vunpack.c.h.b16 %v1052
        %v3179 = vunpack.c.l.b16 %v1053
        %v3180 = vunpack.c.h.b16 %v1053
        %v3181 = vunpack.c.l.b16 %v1054
        %v3182 = vunpack.c.h.b16 %v1054
        %v3183 = vunpack.c.l.b16 %v1055
        %v3184 = vunpack.c.h.b16 %v1055
        %v3185 = vunpack.c.l.b16 %v1056
        %v3186 = vunpack.c.h.b16 %v1056
        %v3187 = vunpack.c.l.b16 %v1057
        %v3188 = vunpack.c.h.b16 %v1057
        %v3189 = vunpack.c.l.b16 %v1058
        %v3190 = vunpack.c.h.b16 %v1058
        %v3191 = vunpack.c.l.b16 %v1059
        %v3192 = vunpack.c.h.b16 %v1059
        %v3193 = vunpack.c.l.b16 %v1060
        %v3194 = vunpack.c.h.b16 %v1060
        %v3195 = vunpack.c.l.b16 %v1061
        %v3196 = vunpack.c.h.b16 %v1061
        %v3197 = vunpack.c.l.b16 %v1062
        %v3198 = vunpack.c.h.b16 %v1062
        %v3199 = vunpack.c.l.b16 %v1063
        %v3200 = vunpack.c.h.b16 %v1063
        %v3201 = vunpack.c.l.b16 %v1064
        %v3202 = vunpack.c.h.b16 %v1064
        %v3203 = vunpack.c.l.b16 %v1065
        %v3204 = vunpack.c.h.b16 %v1065
        %v3205 = vunpack.c.l.b16 %v1066
        %v3206 = vunpack.c.h.b16 %v1066
        %v3207 = vunpack.c.l.b16 %v1067
        %v3208 = vunpack.c.h.b16 %v1067
        %v3209 = vunpack.c.l.b16 %v1068
        %v3210 = vunpack.c.h.b16 %v1068
        %v3211 = vunpack.c.l.b16 %v1069
        %v3212 = vunpack.c.h.b16 %v1069
        %v3213 = vunpack.c.l.b16 %v1070
        %v3214 = vunpack.c.h.b16 %v1070
        %v3215 = vunpack.c.l.b16 %v1071
        %v3216 = vunpack.c.h.b16 %v1071
        %v3217 = vunpack.c.l.b16 %v1072
        %v3218 = vunpack.c.h.b16 %v1072
        %v3219 = vunpack.c.l.b16 %v1073
        %v3220 = vunpack.c.h.b16 %v1073
        %v3221 = vunpack.c.l.b16 %v1074
        %v3222 = vunpack.c.h.b16 %v1074
        %v3223 = vunpack.c.l.b16 %v1075
        %v3224 = vunpack.c.h.b16 %v1075
        %v3225 = vunpack.c.l.b16 %v1076
        %v3226 = vunpack.c.h.b16 %v1076
        %v3227 = vunpack.c.l.b16 %v1077
        %v3228 = vunpack.c.h.b16 %v1077
        %v3229 = vunpack.c.l.b16 %v1078
        %v3230 = vunpack.c.h.b16 %v1078
        %v3231 = vunpack.c.l.b16 %v1079
        %v3232 = vunpack.c.h.b16 %v1079
        %v3233 = vunpack.c.l.b16 %v1080
        %v3234 = vunpack.c.h.b16 %v1080
        %v3235 = vunpack.c.l.b16 %v1081
        %v3236 = vunpack.c.h.b16 %v1081
        %v3237 = vunpack.c.l.b16 %v1082
        %v3238 = vunpack.c.h.b16 %v1082
        %v3239 = vunpack.c.l.b16 %v1083
        %v3240 = vunpack.c.h.b16 %v1083
        %v3241 = vunpack.c.l.b16 %v1084
        %v3242 = vunpack.c.h.b16 %v1084
        %v3243 = vunpack.c.l.b16 %v1085
        %v3244 = vunpack.c.h.b16 %v1085
        %v3245 = vunpack.c.l.b16 %v1086
        %v3246 = vunpack.c.h.b16 %v1086
        %v3247 = vunpack.c.l.b16 %v1087
        %v3248 = vunpack.c.h.b16 %v1087
        %v3249 = vunpack.c.l.b16 %v1088
        %v3250 = vunpack.c.h.b16 %v1088
        %v3251 = vunpack.c.l.b16 %v1089
        %v3252 = vunpack.c.h.b16 %v1089
        %v3253 = vunpack.c.l.b16 %v1090
        %v3254 = vunpack.c.h.b16 %v1090
        %v3255 = vunpack.c.l.b16 %v1091
        %v3256 = vunpack.c.h.b16 %v1091
        %v3257 = vunpack.c.l.b16 %v1092
        %v3258 = vunpack.c.h.b16 %v1092
        %v3259 = vunpack.c.l.b16 %v1093
        %v3260 = vunpack.c.h.b16 %v1093
        %v3261 = vunpack.c.l.b16 %v1094
        %v3262 = vunpack.c.h.b16 %v1094
        %v3263 = vunpack.c.l.b16 %v1095
        %v3264 = vunpack.c.h.b16 %v1095
        %v3265 = vunpack.c.l.b16 %v1096
        %v3266 = vunpack.c.h.b16 %v1096
        %v3267 = vunpack.c.l.b16 %v1097
        %v3268 = vunpack.c.h.b16 %v1097
        %v3269 = vunpack.c.l.b16 %v1098
        %v3270 = vunpack.c.h.b16 %v1098
        %v3271 = vunpack.c.l.b16 %v1099
        %v3272 = vunpack.c.h.b16 %v1099
        %v3273 = vunpack.c.l.b16 %v1100
        %v3274 = vunpack.c.h.b16 %v1100
        %v3275 = vunpack.c.l.b16 %v1101
        %v3276 = vunpack.c.h.b16 %v1101
        %v3277 = vunpack.c.l.b16 %v1102
        %v3278 = vunpack.c.h.b16 %v1102
        %v3279 = vunpack.c.l.b16 %v1103
        %v3280 = vunpack.c.h.b16 %v1103
        %v3281 = vunpack.c.l.b16 %v1104
        %v3282 = vunpack.c.h.b16 %v1104
        %v3283 = vunpack.c.l.b16 %v1105
        %v3284 = vunpack.c.h.b16 %v1105
        %v3285 = vunpack.c.l.b16 %v1106
        %v3286 = vunpack.c.h.b16 %v1106
        %v3287 = vunpack.c.l.b16 %v1107
        %v3288 = vunpack.c.h.b16 %v1107
        %v3289 = vunpack.c.l.b16 %v1108
        %v3290 = vunpack.c.h.b16 %v1108
        %v3291 = vunpack.c.l.b16 %v1109
        %v3292 = vunpack.c.h.b16 %v1109
        %v3293 = vunpack.c.l.b16 %v1110
        %v3294 = vunpack.c.h.b16 %v1110
        %v3295 = vunpack.c.l.b16 %v1111
        %v3296 = vunpack.c.h.b16 %v1111
        %v3297 = vunpack.c.l.b16 %v1112
        %v3298 = vunpack.c.h.b16 %v1112
        %v3299 = vunpack.c.l.b16 %v1113
        %v3300 = vunpack.c.h.b16 %v1113
        %v3301 = vunpack.c.l.b16 %v1114
        %v3302 = vunpack.c.h.b16 %v1114
        %v3303 = vunpack.c.l.b16 %v1115
        %v3304 = vunpack.c.h.b16 %v1115
        %v3305 = vunpack.c.l.b16 %v1116
        %v3306 = vunpack.c.h.b16 %v1116
        %v3307 = vunpack.c.l.b16 %v1117
        %v3308 = vunpack.c.h.b16 %v1117
        %v3309 = vunpack.c.l.b16 %v1118
        %v3310 = vunpack.c.h.b16 %v1118
        %v3311 = vunpack.c.l.b16 %v1119
        %v3312 = vunpack.c.h.b16 %v1119
        %v3313 = vunpack.c.l.b16 %v1120
        %v3314 = vunpack.c.h.b16 %v1120
        %v3315 = vunpack.c.l.b16 %v1121
        %v3316 = vunpack.c.h.b16 %v1121
        %v3317 = vunpack.c.l.b16 %v1122
        %v3318 = vunpack.c.h.b16 %v1122
        %v3319 = vunpack.c.l.b16 %v1123
        %v3320 = vunpack.c.h.b16 %v1123
        %v3321 = vunpack.c.l.b16 %v1124
        %v3322 = vunpack.c.h.b16 %v1124
        %v3323 = vunpack.c.l.b16 %v1125
        %v3324 = vunpack.c.h.b16 %v1125
        %v3325 = vunpack.c.l.b16 %v1126
        %v3326 = vunpack.c.h.b16 %v1126
        %v3327 = vunpack.c.l.b16 %v1127
        %v3328 = vunpack.c.h.b16 %v1127
        %v3329 = vunpack.c.l.b16 %v1128
        %v3330 = vunpack.c.h.b16 %v1128
        %v3331 = vunpack.c.l.b16 %v1129
        %v3332 = vunpack.c.h.b16 %v1129
        %v3333 = vunpack.c.l.b16 %v1130
        %v3334 = vunpack.c.h.b16 %v1130
        %v3335 = vunpack.c.l.b16 %v1131
        %v3336 = vunpack.c.h.b16 %v1131
        %v3337 = vunpack.c.l.b16 %v1132
        %v3338 = vunpack.c.h.b16 %v1132
        %v3339 = vunpack.c.l.b16 %v1133
        %v3340 = vunpack.c.h.b16 %v1133
        %v3341 = vunpack.c.l.b16 %v1134
        %v3342 = vunpack.c.h.b16 %v1134
        %v3343 = vunpack.c.l.b16 %v1135
        %v3344 = vunpack.c.h.b16 %v1135
        %v3345 = vunpack.c.l.b16 %v1136
        %v3346 = vunpack.c.h.b16 %v1136
        %v3347 = vunpack.c.l.b16 %v1137
        %v3348 = vunpack.c.h.b16 %v1137
        %v3349 = vunpack.c.l.b16 %v1138
        %v3350 = vunpack.c.h.b16 %v1138
        %v3351 = vunpack.c.l.b16 %v1139
        %v3352 = vunpack.c.h.b16 %v1139
        %v3353 = vunpack.c.l.b16 %v1140
        %v3354 = vunpack.c.h.b16 %v1140
        %v3355 = vunpack.c.l.b16 %v1141
        %v3356 = vunpack.c.h.b16 %v1141
        %v3357 = vunpack.c.l.b16 %v1142
        %v3358 = vunpack.c.h.b16 %v1142
        %v3359 = vunpack.c.l.b16 %v1143
        %v3360 = vunpack.c.h.b16 %v1143
        %v3361 = vunpack.c.l.b16 %v1144
        %v3362 = vunpack.c.h.b16 %v1144
        %v3363 = vunpack.c.l.b16 %v1145
        %v3364 = vunpack.c.h.b16 %v1145
        %v3365 = vunpack.c.l.b16 %v1146
        %v3366 = vunpack.c.h.b16 %v1146
        %v3367 = vunpack.c.l.b16 %v1147
        %v3368 = vunpack.c.h.b16 %v1147
        %v3369 = vunpack.c.l.b16 %v1148
        %v3370 = vunpack.c.h.b16 %v1148
        %v3371 = vunpack.c.l.b16 %v1149
        %v3372 = vunpack.c.h.b16 %v1149
        %v3373 = vunpack.c.l.b16 %v1150
        %v3374 = vunpack.c.h.b16 %v1150
        %v3375 = vunpack.c.l.b16 %v1151
        %v3376 = vunpack.c.h.b16 %v1151
        %v3377 = vunpack.c.l.b16 %v1152
        %v3378 = vunpack.c.h.b16 %v1152
        %v3379 = vunpack.c.l.b16 %v1153
        %v3380 = vunpack.c.h.b16 %v1153
        %v3381 = vunpack.c.l.b16 %v1154
        %v3382 = vunpack.c.h.b16 %v1154
        %v3383 = vunpack.c.l.b16 %v1155
        %v3384 = vunpack.c.h.b16 %v1155
        %v3385 = vunpack.c.l.b16 %v1156
        %v3386 = vunpack.c.h.b16 %v1156
        %v3387 = vunpack.c.l.b16 %v1157
        %v3388 = vunpack.c.h.b16 %v1157
        %v3389 = vunpack.c.l.b16 %v1158
        %v3390 = vunpack.c.h.b16 %v1158
        %v3391 = vunpack.c.l.b16 %v1159
        %v3392 = vunpack.c.h.b16 %v1159
        %v3393 = vunpack.c.l.b16 %v1160
        %v3394 = vunpack.c.h.b16 %v1160
        %v3395 = vunpack.c.l.b16 %v1161
        %v3396 = vunpack.c.h.b16 %v1161
        %v3397 = vunpack.c.l.b16 %v1162
        %v3398 = vunpack.c.h.b16 %v1162
        %v3399 = vunpack.c.l.b16 %v1163
        %v3400 = vunpack.c.h.b16 %v1163
        %v3401 = vunpack.c.l.b16 %v1164
        %v3402 = vunpack.c.h.b16 %v1164
        %v3403 = vunpack.c.l.b16 %v1165
        %v3404 = vunpack.c.h.b16 %v1165
        %v3405 = vunpack.c.l.b16 %v1166
        %v3406 = vunpack.c.h.b16 %v1166
        %v3407 = vunpack.c.l.b16 %v1167
        %v3408 = vunpack.c.h.b16 %v1167
        %v3409 = vunpack.c.l.b16 %v1168
        %v3410 = vunpack.c.h.b16 %v1168
        %v3411 = vunpack.c.l.b16 %v1169
        %v3412 = vunpack.c.h.b16 %v1169
        %v3413 = vunpack.c.l.b16 %v1170
        %v3414 = vunpack.c.h.b16 %v1170
        %v3415 = vunpack.c.l.b16 %v1171
        %v3416 = vunpack.c.h.b16 %v1171
        %v3417 = vunpack.c.l.b16 %v1172
        %v3418 = vunpack.c.h.b16 %v1172
        %v3419 = vunpack.c.l.b16 %v1173
        %v3420 = vunpack.c.h.b16 %v1173
        %v3421 = vunpack.c.l.b16 %v1174
        %v3422 = vunpack.c.h.b16 %v1174
        %v3423 = vunpack.c.l.b16 %v1175
        %v3424 = vunpack.c.h.b16 %v1175
        %v3425 = vunpack.c.l.b16 %v1176
        %v3426 = vunpack.c.h.b16 %v1176
        %v3427 = vunpack.c.l.b16 %v1177
        %v3428 = vunpack.c.h.b16 %v1177
        %v3429 = vunpack.c.l.b16 %v1178
        %v3430 = vunpack.c.h.b16 %v1178
        %v3431 = vunpack.c.l.b16 %v1179
        %v3432 = vunpack.c.h.b16 %v1179
        %v3433 = vunpack.c.l.b16 %v1180
        %v3434 = vunpack.c.h.b16 %v1180
        %v3435 = vunpack.c.l.b16 %v1181
        %v3436 = vunpack.c.h.b16 %v1181
        %v3437 = vunpack.c.l.b16 %v1182
        %v3438 = vunpack.c.h.b16 %v1182
        %v3439 = vunpack.c.l.b16 %v1183
        %v3440 = vunpack.c.h.b16 %v1183
        %v3441 = vunpack.c.l.b16 %v1184
        %v3442 = vunpack.c.h.b16 %v1184
        %v3443 = vunpack.c.l.b16 %v1185
        %v3444 = vunpack.c.h.b16 %v1185
        %v3445 = vunpack.c.l.b16 %v1186
        %v3446 = vunpack.c.h.b16 %v1186
        %v3447 = vunpack.c.l.b16 %v1187
        %v3448 = vunpack.c.h.b16 %v1187
        %v3449 = vunpack.c.l.b16 %v1188
        %v3450 = vunpack.c.h.b16 %v1188
        %v3451 = vunpack.c.l.b16 %v1189
        %v3452 = vunpack.c.h.b16 %v1189
        %v3453 = vunpack.c.l.b16 %v1190
        %v3454 = vunpack.c.h.b16 %v1190
        %v3455 = vunpack.c.l.b16 %v1191
        %v3456 = vunpack.c.h.b16 %v1191
        %v3457 = vunpack.c.l.b16 %v1192
        %v3458 = vunpack.c.h.b16 %v1192
        %v3459 = vunpack.c.l.b16 %v1193
        %v3460 = vunpack.c.h.b16 %v1193
        %v3461 = vunpack.c.l.b16 %v1194
        %v3462 = vunpack.c.h.b16 %v1194
        %v3463 = vunpack.c.l.b16 %v1195
        %v3464 = vunpack.c.h.b16 %v1195
        %v3465 = vunpack.c.l.b16 %v1196
        %v3466 = vunpack.c.h.b16 %v1196
        %v3467 = vunpack.c.l.b16 %v1197
        %v3468 = vunpack.c.h.b16 %v1197
        %v3469 = vunpack.c.l.b16 %v1198
        %v3470 = vunpack.c.h.b16 %v1198
        %v3471 = vunpack.c.l.b16 %v1199
        %v3472 = vunpack.c.h.b16 %v1199
        %v3473 = vunpack.c.l.b16 %v1200
        %v3474 = vunpack.c.h.b16 %v1200
        %v3475 = vunpack.c.l.b16 %v1201
        %v3476 = vunpack.c.h.b16 %v1201
        %v3477 = vunpack.c.l.b16 %v1202
        %v3478 = vunpack.c.h.b16 %v1202
        %v3479 = vunpack.c.l.b16 %v1203
        %v3480 = vunpack.c.h.b16 %v1203
        %v3481 = vunpack.c.l.b16 %v1204
        %v3482 = vunpack.c.h.b16 %v1204
        %v3483 = vunpack.c.l.b16 %v1205
        %v3484 = vunpack.c.h.b16 %v1205
        %v3485 = vunpack.c.l.b16 %v1206
        %v3486 = vunpack.c.h.b16 %v1206
        %v3487 = vunpack.c.l.b16 %v1207
        %v3488 = vunpack.c.h.b16 %v1207
        %v3489 = vunpack.c.l.b16 %v1208
        %v3490 = vunpack.c.h.b16 %v1208
        %v3491 = vunpack.c.l.b16 %v1209
        %v3492 = vunpack.c.h.b16 %v1209
        %v3493 = vunpack.c.l.b16 %v1210
        %v3494 = vunpack.c.h.b16 %v1210
        %v3495 = vunpack.c.l.b16 %v1211
        %v3496 = vunpack.c.h.b16 %v1211
        %v3497 = vunpack.c.l.b16 %v1212
        %v3498 = vunpack.c.h.b16 %v1212
        %v3499 = vunpack.c.l.b16 %v1213
        %v3500 = vunpack.c.h.b16 %v1213
        %v3501 = vunpack.c.l.b16 %v1214
        %v3502 = vunpack.c.h.b16 %v1214
        %v3503 = vunpack.c.l.b16 %v1215
        %v3504 = vunpack.c.h.b16 %v1215
        %v3505 = vunpack.c.l.b16 %v1216
        %v3506 = vunpack.c.h.b16 %v1216
        %v3507 = vunpack.c.l.b16 %v1217
        %v3508 = vunpack.c.h.b16 %v1217
        %v3509 = vunpack.c.l.b16 %v1218
        %v3510 = vunpack.c.h.b16 %v1218
        %v3511 = vunpack.c.l.b16 %v1219
        %v3512 = vunpack.c.h.b16 %v1219
        %v3513 = vunpack.c.l.b16 %v1220
        %v3514 = vunpack.c.h.b16 %v1220
        %v3515 = vunpack.c.l.b16 %v1221
        %v3516 = vunpack.c.h.b16 %v1221
        %v3517 = vunpack.c.l.b16 %v1222
        %v3518 = vunpack.c.h.b16 %v1222
        %v3519 = vunpack.c.l.b16 %v1223
        %v3520 = vunpack.c.h.b16 %v1223
        %v3521 = vunpack.c.l.b16 %v1224
        %v3522 = vunpack.c.h.b16 %v1224
        %v3523 = vunpack.c.l.b16 %v1225
        %v3524 = vunpack.c.h.b16 %v1225
        %v3525 = vunpack.c.l.b16 %v1226
        %v3526 = vunpack.c.h.b16 %v1226
        %v3527 = vunpack.c.l.b16 %v1227
        %v3528 = vunpack.c.h.b16 %v1227
        %v3529 = vunpack.c.l.b16 %v1228
        %v3530 = vunpack.c.h.b16 %v1228
        %v3531 = vunpack.c.l.b16 %v1229
        %v3532 = vunpack.c.h.b16 %v1229
        %v3533 = vunpack.c.l.b16 %v1230
        %v3534 = vunpack.c.h.b16 %v1230
        %v3535 = vpack.c.b16 %v2003, %v1999
        %v3536 = vpack.c.b16 %v2004, %v2000
        %v3537 = vpack.c.b16 %v2005, %v2001
        %v3538 = vpack.c.b16 %v2006, %v2002
        %v3539 = vpack.c.b16 %v2011, %v2007
        %v3540 = vpack.c.b16 %v2012, %v2008
        %v3541 = vpack.c.b16 %v2013, %v2009
        %v3542 = vpack.c.b16 %v2014, %v2010
        %v3543 = vpack.c.b16 %v2019, %v2015
        %v3544 = vpack.c.b16 %v2020, %v2016
        %v3545 = vpack.c.b16 %v2021, %v2017
        %v3546 = vpack.c.b16 %v2022, %v2018
        %v3547 = vpack.c.b16 %v2027, %v2023
        %v3548 = vpack.c.b16 %v2028, %v2024
        %v3549 = vpack.c.b16 %v2029, %v2025
        %v3550 = vpack.c.b16 %v2030, %v2026
        %v3551 = vpack.c.b16 %v2035, %v2031
        %v3552 = vpack.c.b16 %v2036, %v2032
        %v3553 = vpack.c.b16 %v2037, %v2033
        %v3554 = vpack.c.b16 %v2038, %v2034
        %v3555 = vpack.c.b16 %v2043, %v2039
        %v3556 = vpack.c.b16 %v2044, %v2040
        %v3557 = vpack.c.b16 %v2045, %v2041
        %v3558 = vpack.c.b16 %v2046, %v2042
        %v3559 = vpack.c.b16 %v2051, %v2047
        %v3560 = vpack.c.b16 %v2052, %v2048
        %v3561 = vpack.c.b16 %v2053, %v2049
        %v3562 = vpack.c.b16 %v2054, %v2050
        %v3563 = vpack.c.b16 %v2059, %v2055
        %v3564 = vpack.c.b16 %v2060, %v2056
        %v3565 = vpack.c.b16 %v2061, %v2057
        %v3566 = vpack.c.b16 %v2062, %v2058
        %v3567 = vpack.c.b16 %v2067, %v2063
        %v3568 = vpack.c.b16 %v2068, %v2064
        %v3569 = vpack.c.b16 %v2069, %v2065
        %v3570 = vpack.c.b16 %v2070, %v2066
        %v3571 = vpack.c.b16 %v2075, %v2071
        %v3572 = vpack.c.b16 %v2076, %v2072
        %v3573 = vpack.c.b16 %v2077, %v2073
        %v3574 = vpack.c.b16 %v2078, %v2074
        %v3575 = vpack.c.b16 %v2083, %v2079
        %v3576 = vpack.c.b16 %v2084, %v2080
        %v3577 = vpack.c.b16 %v2085, %v2081
        %v3578 = vpack.c.b16 %v2086, %v2082
        %v3579 = vpack.c.b16 %v2091, %v2087
        %v3580 = vpack.c.b16 %v2092, %v2088
        %v3581 = vpack.c.b16 %v2093, %v2089
        %v3582 = vpack.c.b16 %v2094, %v2090
        %v3583 = vpack.c.b16 %v2099, %v2095
        %v3584 = vpack.c.b16 %v2100, %v2096
        %v3585 = vpack.c.b16 %v2101, %v2097
        %v3586 = vpack.c.b16 %v2102, %v2098
        %v3587 = vpack.c.b16 %v2107, %v2103
        %v3588 = vpack.c.b16 %v2108, %v2104
        %v3589 = vpack.c.b16 %v2109, %v2105
        %v3590 = vpack.c.b16 %v2110, %v2106
        %v3591 = vpack.c.b16 %v2115, %v2111
        %v3592 = vpack.c.b16 %v2116, %v2112
        %v3593 = vpack.c.b16 %v2117, %v2113
        %v3594 = vpack.c.b16 %v2118, %v2114
        %v3595 = vpack.c.b16 %v2123, %v2119
        %v3596 = vpack.c.b16 %v2124, %v2120
        %v3597 = vpack.c.b16 %v2125, %v2121
        %v3598 = vpack.c.b16 %v2126, %v2122
        %v3599 = vpack.c.b16 %v2131, %v2127
        %v3600 = vpack.c.b16 %v2132, %v2128
        %v3601 = vpack.c.b16 %v2133, %v2129
        %v3602 = vpack.c.b16 %v2134, %v2130
        %v3603 = vpack.c.b16 %v2139, %v2135
        %v3604 = vpack.c.b16 %v2140, %v2136
        %v3605 = vpack.c.b16 %v2141, %v2137
        %v3606 = vpack.c.b16 %v2142, %v2138
        %v3607 = vpack.c.b16 %v2147, %v2143
        %v3608 = vpack.c.b16 %v2148, %v2144
        %v3609 = vpack.c.b16 %v2149, %v2145
        %v3610 = vpack.c.b16 %v2150, %v2146
        %v3611 = vpack.c.b16 %v2155, %v2151
        %v3612 = vpack.c.b16 %v2156, %v2152
        %v3613 = vpack.c.b16 %v2157, %v2153
        %v3614 = vpack.c.b16 %v2158, %v2154
        %v3615 = vpack.c.b16 %v2163, %v2159
        %v3616 = vpack.c.b16 %v2164, %v2160
        %v3617 = vpack.c.b16 %v2165, %v2161
        %v3618 = vpack.c.b16 %v2166, %v2162
        %v3619 = vpack.c.b16 %v2171, %v2167
        %v3620 = vpack.c.b16 %v2172, %v2168
        %v3621 = vpack.c.b16 %v2173, %v2169
        %v3622 = vpack.c.b16 %v2174, %v2170
        %v3623 = vpack.c.b16 %v2179, %v2175
        %v3624 = vpack.c.b16 %v2180, %v2176
        %v3625 = vpack.c.b16 %v2181, %v2177
        %v3626 = vpack.c.b16 %v2182, %v2178
        %v3627 = vpack.c.b16 %v2187, %v2183
        %v3628 = vpack.c.b16 %v2188, %v2184
        %v3629 = vpack.c.b16 %v2189, %v2185
        %v3630 = vpack.c.b16 %v2190, %v2186
        %v3631 = vpack.c.b16 %v2195, %v2191
        %v3632 = vpack.c.b16 %v2196, %v2192
        %v3633 = vpack.c.b16 %v2197, %v2193
        %v3634 = vpack.c.b16 %v2198, %v2194
        %v3635 = vpack.c.b16 %v2203, %v2199
        %v3636 = vpack.c.b16 %v2204, %v2200
        %v3637 = vpack.c.b16 %v2205, %v2201
        %v3638 = vpack.c.b16 %v2206, %v2202
        %v3639 = vpack.c.b16 %v2211, %v2207
        %v3640 = vpack.c.b16 %v2212, %v2208
        %v3641 = vpack.c.b16 %v2213, %v2209
        %v3642 = vpack.c.b16 %v2214, %v2210
        %v3643 = vpack.c.b16 %v2219, %v2215
        %v3644 = vpack.c.b16 %v2220, %v2216
        %v3645 = vpack.c.b16 %v2221, %v2217
        %v3646 = vpack.c.b16 %v2222, %v2218
        %v3647 = vpack.c.b16 %v2227, %v2223
        %v3648 = vpack.c.b16 %v2228, %v2224
        %v3649 = vpack.c.b16 %v2229, %v2225
        %v3650 = vpack.c.b16 %v2230, %v2226
        %v3651 = vpack.c.b16 %v2235, %v2231
        %v3652 = vpack.c.b16 %v2236, %v2232
        %v3653 = vpack.c.b16 %v2237, %v2233
        %v3654 = vpack.c.b16 %v2238, %v2234
        %v3655 = vpack.c.b16 %v2243, %v2239
        %v3656 = vpack.c.b16 %v2244, %v2240
        %v3657 = vpack.c.b16 %v2245, %v2241
        %v3658 = vpack.c.b16 %v2246, %v2242
        %v3659 = vpack.c.b16 %v2251, %v2247
        %v3660 = vpack.c.b16 %v2252, %v2248
        %v3661 = vpack.c.b16 %v2253, %v2249
        %v3662 = vpack.c.b16 %v2254, %v2250
        %v3663 = vpack.c.b16 %v2259, %v2255
        %v3664 = vpack.c.b16 %v2260, %v2256
        %v3665 = vpack.c.b16 %v2261, %v2257
        %v3666 = vpack.c.b16 %v2262, %v2258
        %v3667 = vpack.c.b16 %v2267, %v2263
        %v3668 = vpack.c.b16 %v2268, %v2264
        %v3669 = vpack.c.b16 %v2269, %v2265
        %v3670 = vpack.c.b16 %v2270, %v2266
        %v3671 = vpack.c.b16 %v2275, %v2271
        %v3672 = vpack.c.b16 %v2276, %v2272
        %v3673 = vpack.c.b16 %v2277, %v2273
        %v3674 = vpack.c.b16 %v2278, %v2274
        %v3675 = vpack.c.b16 %v2283, %v2279
        %v3676 = vpack.c.b16 %v2284, %v2280
        %v3677 = vpack.c.b16 %v2285, %v2281
        %v3678 = vpack.c.b16 %v2286, %v2282
        %v3679 = vpack.c.b16 %v2291, %v2287
        %v3680 = vpack.c.b16 %v2292, %v2288
        %v3681 = vpack.c.b16 %v2293, %v2289
        %v3682 = vpack.c.b16 %v2294, %v2290
        %v3683 = vpack.c.b16 %v2299, %v2295
        %v3684 = vpack.c.b16 %v2300, %v2296
        %v3685 = vpack.c.b16 %v2301, %v2297
        %v3686 = vpack.c.b16 %v2302, %v2298
        %v3687 = vpack.c.b16 %v2307, %v2303
        %v3688 = vpack.c.b16 %v2308, %v2304
        %v3689 = vpack.c.b16 %v2309, %v2305
        %v3690 = vpack.c.b16 %v2310, %v2306
        %v3691 = vpack.c.b16 %v2315, %v2311
        %v3692 = vpack.c.b16 %v2316, %v2312
        %v3693 = vpack.c.b16 %v2317, %v2313
        %v3694 = vpack.c.b16 %v2318, %v2314
        %v3695 = vpack.c.b16 %v2323, %v2319
        %v3696 = vpack.c.b16 %v2324, %v2320
        %v3697 = vpack.c.b16 %v2325, %v2321
        %v3698 = vpack.c.b16 %v2326, %v2322
        %v3699 = vpack.c.b16 %v2331, %v2327
        %v3700 = vpack.c.b16 %v2332, %v2328
        %v3701 = vpack.c.b16 %v2333, %v2329
        %v3702 = vpack.c.b16 %v2334, %v2330
        %v3703 = vpack.c.b16 %v2339, %v2335
        %v3704 = vpack.c.b16 %v2340, %v2336
        %v3705 = vpack.c.b16 %v2341, %v2337
        %v3706 = vpack.c.b16 %v2342, %v2338
        %v3707 = vpack.c.b16 %v2347, %v2343
        %v3708 = vpack.c.b16 %v2348, %v2344
        %v3709 = vpack.c.b16 %v2349, %v2345
        %v3710 = vpack.c.b16 %v2350, %v2346
        %v3711 = vpack.c.b16 %v2355, %v2351
        %v3712 = vpack.c.b16 %v2356, %v2352
        %v3713 = vpack.c.b16 %v2357, %v2353
        %v3714 = vpack.c.b16 %v2358, %v2354
        %v3715 = vpack.c.b16 %v2363, %v2359
        %v3716 = vpack.c.b16 %v2364, %v2360
        %v3717 = vpack.c.b16 %v2365, %v2361
        %v3718 = vpack.c.b16 %v2366, %v2362
        %v3719 = vpack.c.b16 %v2371, %v2367
        %v3720 = vpack.c.b16 %v2372, %v2368
        %v3721 = vpack.c.b16 %v2373, %v2369
        %v3722 = vpack.c.b16 %v2374, %v2370
        %v3723 = vpack.c.b16 %v2379, %v2375
        %v3724 = vpack.c.b16 %v2380, %v2376
        %v3725 = vpack.c.b16 %v2381, %v2377
        %v3726 = vpack.c.b16 %v2382, %v2378
        %v3727 = vpack.c.b16 %v2387, %v2383
        %v3728 = vpack.c.b16 %v2388, %v2384
        %v3729 = vpack.c.b16 %v2389, %v2385
        %v3730 = vpack.c.b16 %v2390, %v2386
        %v3731 = vpack.c.b16 %v2395, %v2391
        %v3732 = vpack.c.b16 %v2396, %v2392
        %v3733 = vpack.c.b16 %v2397, %v2393
        %v3734 = vpack.c.b16 %v2398, %v2394
        %v3735 = vpack.c.b16 %v2403, %v2399
        %v3736 = vpack.c.b16 %v2404, %v2400
        %v3737 = vpack.c.b16 %v2405, %v2401
        %v3738 = vpack.c.b16 %v2406, %v2402
        %v3739 = vpack.c.b16 %v2411, %v2407
        %v3740 = vpack.c.b16 %v2412, %v2408
        %v3741 = vpack.c.b16 %v2413, %v2409
        %v3742 = vpack.c.b16 %v2414, %v2410
        %v3743 = vpack.c.b16 %v2419, %v2415
        %v3744 = vpack.c.b16 %v2420, %v2416
        %v3745 = vpack.c.b16 %v2421, %v2417
        %v3746 = vpack.c.b16 %v2422, %v2418
        %v3747 = vpack.c.b16 %v2427, %v2423
        %v3748 = vpack.c.b16 %v2428, %v2424
        %v3749 = vpack.c.b16 %v2429, %v2425
        %v3750 = vpack.c.b16 %v2430, %v2426
        %v3751 = vpack.c.b16 %v2435, %v2431
        %v3752 = vpack.c.b16 %v2436, %v2432
        %v3753 = vpack.c.b16 %v2437, %v2433
        %v3754 = vpack.c.b16 %v2438, %v2434
        %v3755 = vpack.c.b16 %v2443, %v2439
        %v3756 = vpack.c.b16 %v2444, %v2440
        %v3757 = vpack.c.b16 %v2445, %v2441
        %v3758 = vpack.c.b16 %v2446, %v2442
        %v3759 = vpack.c.b16 %v2451, %v2447
        %v3760 = vpack.c.b16 %v2452, %v2448
        %v3761 = vpack.c.b16 %v2453, %v2449
        %v3762 = vpack.c.b16 %v2454, %v2450
        %v3763 = vpack.c.b16 %v2459, %v2455
        %v3764 = vpack.c.b16 %v2460, %v2456
        %v3765 = vpack.c.b16 %v2461, %v2457
        %v3766 = vpack.c.b16 %v2462, %v2458
        %v3767 = vpack.c.b16 %v2467, %v2463
        %v3768 = vpack.c.b16 %v2468, %v2464
        %v3769 = vpack.c.b16 %v2469, %v2465
        %v3770 = vpack.c.b16 %v2470, %v2466
        %v3771 = vpack.c.b16 %v2475, %v2471
        %v3772 = vpack.c.b16 %v2476, %v2472
        %v3773 = vpack.c.b16 %v2477, %v2473
        %v3774 = vpack.c.b16 %v2478, %v2474
        %v3775 = vpack.c.b16 %v2483, %v2479
        %v3776 = vpack.c.b16 %v2484, %v2480
        %v3777 = vpack.c.b16 %v2485, %v2481
        %v3778 = vpack.c.b16 %v2486, %v2482
        %v3779 = vpack.c.b16 %v2491, %v2487
        %v3780 = vpack.c.b16 %v2492, %v2488
        %v3781 = vpack.c.b16 %v2493, %v2489
        %v3782 = vpack.c.b16 %v2494, %v2490
        %v3783 = vpack.c.b16 %v2499, %v2495
        %v3784 = vpack.c.b16 %v2500, %v2496
        %v3785 = vpack.c.b16 %v2501, %v2497
        %v3786 = vpack.c.b16 %v2502, %v2498
        %v3787 = vpack.c.b16 %v2507, %v2503
        %v3788 = vpack.c.b16 %v2508, %v2504
        %v3789 = vpack.c.b16 %v2509, %v2505
        %v3790 = vpack.c.b16 %v2510, %v2506
        %v3791 = vpack.c.b16 %v2515, %v2511
        %v3792 = vpack.c.b16 %v2516, %v2512
        %v3793 = vpack.c.b16 %v2517, %v2513
        %v3794 = vpack.c.b16 %v2518, %v2514
        %v3795 = vpack.c.b16 %v2523, %v2519
        %v3796 = vpack.c.b16 %v2524, %v2520
        %v3797 = vpack.c.b16 %v2525, %v2521
        %v3798 = vpack.c.b16 %v2526, %v2522
        %v3799 = vpack.c.b16 %v2531, %v2527
        %v3800 = vpack.c.b16 %v2532, %v2528
        %v3801 = vpack.c.b16 %v2533, %v2529
        %v3802 = vpack.c.b16 %v2534, %v2530
        %v3803 = vpack.c.b16 %v2539, %v2535
        %v3804 = vpack.c.b16 %v2540, %v2536
        %v3805 = vpack.c.b16 %v2541, %v2537
        %v3806 = vpack.c.b16 %v2542, %v2538
        %v3807 = vpack.c.b16 %v2547, %v2543
        %v3808 = vpack.c.b16 %v2548, %v2544
        %v3809 = vpack.c.b16 %v2549, %v2545
        %v3810 = vpack.c.b16 %v2550, %v2546
        %v3811 = vpack.c.b16 %v2555, %v2551
        %v3812 = vpack.c.b16 %v2556, %v2552
        %v3813 = vpack.c.b16 %v2557, %v2553
        %v3814 = vpack.c.b16 %v2558, %v2554
        %v3815 = vpack.c.b16 %v2563, %v2559
        %v3816 = vpack.c.b16 %v2564, %v2560
        %v3817 = vpack.c.b16 %v2565, %v2561
        %v3818 = vpack.c.b16 %v2566, %v2562
        %v3819 = vpack.c.b16 %v2571, %v2567
        %v3820 = vpack.c.b16 %v2572, %v2568
        %v3821 = vpack.c.b16 %v2573, %v2569
        %v3822 = vpack.c.b16 %v2574, %v2570
        %v3823 = vpack.c.b16 %v2579, %v2575
        %v3824 = vpack.c.b16 %v2580, %v2576
        %v3825 = vpack.c.b16 %v2581, %v2577
        %v3826 = vpack.c.b16 %v2582, %v2578
        %v3827 = vpack.c.b16 %v2587, %v2583
        %v3828 = vpack.c.b16 %v2588, %v2584
        %v3829 = vpack.c.b16 %v2589, %v2585
        %v3830 = vpack.c.b16 %v2590, %v2586
        %v3831 = vpack.c.b16 %v2595, %v2591
        %v3832 = vpack.c.b16 %v2596, %v2592
        %v3833 = vpack.c.b16 %v2597, %v2593
        %v3834 = vpack.c.b16 %v2598, %v2594
        %v3835 = vpack.c.b16 %v2603, %v2599
        %v3836 = vpack.c.b16 %v2604, %v2600
        %v3837 = vpack.c.b16 %v2605, %v2601
        %v3838 = vpack.c.b16 %v2606, %v2602
        %v3839 = vpack.c.b16 %v2611, %v2607
        %v3840 = vpack.c.b16 %v2612, %v2608
        %v3841 = vpack.c.b16 %v2613, %v2609
        %v3842 = vpack.c.b16 %v2614, %v2610
        %v3843 = vpack.c.b16 %v2619, %v2615
        %v3844 = vpack.c.b16 %v2620, %v2616
        %v3845 = vpack.c.b16 %v2621, %v2617
        %v3846 = vpack.c.b16 %v2622, %v2618
        %v3847 = vpack.c.b16 %v2627, %v2623
        %v3848 = vpack.c.b16 %v2628, %v2624
        %v3849 = vpack.c.b16 %v2629, %v2625
        %v3850 = vpack.c.b16 %v2630, %v2626
        %v3851 = vpack.c.b16 %v2635, %v2631
        %v3852 = vpack.c.b16 %v2636, %v2632
        %v3853 = vpack.c.b16 %v2637, %v2633
        %v3854 = vpack.c.b16 %v2638, %v2634
        %v3855 = vpack.c.b16 %v2643, %v2639
        %v3856 = vpack.c.b16 %v2644, %v2640
        %v3857 = vpack.c.b16 %v2645, %v2641
        %v3858 = vpack.c.b16 %v2646, %v2642
        %v3859 = vpack.c.b16 %v2651, %v2647
        %v3860 = vpack.c.b16 %v2652, %v2648
        %v3861 = vpack.c.b16 %v2653, %v2649
        %v3862 = vpack.c.b16 %v2654, %v2650
        %v3863 = vpack.c.b16 %v2659, %v2655
        %v3864 = vpack.c.b16 %v2660, %v2656
        %v3865 = vpack.c.b16 %v2661, %v2657
        %v3866 = vpack.c.b16 %v2662, %v2658
        %v3867 = vpack.c.b16 %v2667, %v2663
        %v3868 = vpack.c.b16 %v2668, %v2664
        %v3869 = vpack.c.b16 %v2669, %v2665
        %v3870 = vpack.c.b16 %v2670, %v2666
        %v3871 = vpack.c.b16 %v2675, %v2671
        %v3872 = vpack.c.b16 %v2676, %v2672
        %v3873 = vpack.c.b16 %v2677, %v2673
        %v3874 = vpack.c.b16 %v2678, %v2674
        %v3875 = vpack.c.b16 %v2683, %v2679
        %v3876 = vpack.c.b16 %v2684, %v2680
        %v3877 = vpack.c.b16 %v2685, %v2681
        %v3878 = vpack.c.b16 %v2686, %v2682
        %v3879 = vpack.c.b16 %v2691, %v2687
        %v3880 = vpack.c.b16 %v2692, %v2688
        %v3881 = vpack.c.b16 %v2693, %v2689
        %v3882 = vpack.c.b16 %v2694, %v2690
        %v3883 = vpack.c.b16 %v2699, %v2695
        %v3884 = vpack.c.b16 %v2700, %v2696
        %v3885 = vpack.c.b16 %v2701, %v2697
        %v3886 = vpack.c.b16 %v2702, %v2698
        %v3887 = vpack.c.b16 %v2707, %v2703
        %v3888 = vpack.c.b16 %v2708, %v2704
        %v3889 = vpack.c.b16 %v2709, %v2705
        %v3890 = vpack.c.b16 %v2710, %v2706
        %v3891 = vpack.c.b16 %v2715, %v2711
        %v3892 = vpack.c.b16 %v2716, %v2712
        %v3893 = vpack.c.b16 %v2717, %v2713
        %v3894 = vpack.c.b16 %v2718, %v2714
        %v3895 = vpack.c.b16 %v2723, %v2719
        %v3896 = vpack.c.b16 %v2724, %v2720
        %v3897 = vpack.c.b16 %v2725, %v2721
        %v3898 = vpack.c.b16 %v2726, %v2722
        %v3899 = vpack.c.b16 %v2731, %v2727
        %v3900 = vpack.c.b16 %v2732, %v2728
        %v3901 = vpack.c.b16 %v2733, %v2729
        %v3902 = vpack.c.b16 %v2734, %v2730
        %v3903 = vpack.c.b16 %v2739, %v2735
        %v3904 = vpack.c.b16 %v2740, %v2736
        %v3905 = vpack.c.b16 %v2741, %v2737
        %v3906 = vpack.c.b16 %v2742, %v2738
        %v3907 = vpack.c.b16 %v2747, %v2743
        %v3908 = vpack.c.b16 %v2748, %v2744
        %v3909 = vpack.c.b16 %v2749, %v2745
        %v3910 = vpack.c.b16 %v2750, %v2746
        %v3911 = vpack.c.b16 %v2755, %v2751
        %v3912 = vpack.c.b16 %v2756, %v2752
        %v3913 = vpack.c.b16 %v2757, %v2753
        %v3914 = vpack.c.b16 %v2758, %v2754
        %v3915 = vpack.c.b16 %v2763, %v2759
        %v3916 = vpack.c.b16 %v2764, %v2760
        %v3917 = vpack.c.b16 %v2765, %v2761
        %v3918 = vpack.c.b16 %v2766, %v2762
        %v3919 = vpack.c.b16 %v2771, %v2767
        %v3920 = vpack.c.b16 %v2772, %v2768
        %v3921 = vpack.c.b16 %v2773, %v2769
        %v3922 = vpack.c.b16 %v2774, %v2770
        %v3923 = vpack.c.b16 %v2779, %v2775
        %v3924 = vpack.c.b16 %v2780, %v2776
        %v3925 = vpack.c.b16 %v2781, %v2777
        %v3926 = vpack.c.b16 %v2782, %v2778
        %v3927 = vpack.c.b16 %v2787, %v2783
        %v3928 = vpack.c.b16 %v2788, %v2784
        %v3929 = vpack.c.b16 %v2789, %v2785
        %v3930 = vpack.c.b16 %v2790, %v2786
        %v3931 = vpack.c.b16 %v2795, %v2791
        %v3932 = vpack.c.b16 %v2796, %v2792
        %v3933 = vpack.c.b16 %v2797, %v2793
        %v3934 = vpack.c.b16 %v2798, %v2794
        %v3935 = vpack.c.b16 %v2803, %v2799
        %v3936 = vpack.c.b16 %v2804, %v2800
        %v3937 = vpack.c.b16 %v2805, %v2801
        %v3938 = vpack.c.b16 %v2806, %v2802
        %v3939 = vpack.c.b16 %v2811, %v2807
        %v3940 = vpack.c.b16 %v2812, %v2808
        %v3941 = vpack.c.b16 %v2813, %v2809
        %v3942 = vpack.c.b16 %v2814, %v2810
        %v3943 = vpack.c.b16 %v2819, %v2815
        %v3944 = vpack.c.b16 %v2820, %v2816
        %v3945 = vpack.c.b16 %v2821, %v2817
        %v3946 = vpack.c.b16 %v2822, %v2818
        %v3947 = vpack.c.b16 %v2827, %v2823
        %v3948 = vpack.c.b16 %v2828, %v2824
        %v3949 = vpack.c.b16 %v2829, %v2825
        %v3950 = vpack.c.b16 %v2830, %v2826
        %v3951 = vpack.c.b16 %v2835, %v2831
        %v3952 = vpack.c.b16 %v2836, %v2832
        %v3953 = vpack.c.b16 %v2837, %v2833
        %v3954 = vpack.c.b16 %v2838, %v2834
        %v3955 = vpack.c.b16 %v2843, %v2839
        %v3956 = vpack.c.b16 %v2844, %v2840
        %v3957 = vpack.c.b16 %v2845, %v2841
        %v3958 = vpack.c.b16 %v2846, %v2842
        %v3959 = vpack.c.b16 %v2851, %v2847
        %v3960 = vpack.c.b16 %v2852, %v2848
        %v3961 = vpack.c.b16 %v2853, %v2849
        %v3962 = vpack.c.b16 %v2854, %v2850
        %v3963 = vpack.c.b16 %v2859, %v2855
        %v3964 = vpack.c.b16 %v2860, %v2856
        %v3965 = vpack.c.b16 %v2861, %v2857
        %v3966 = vpack.c.b16 %v2862, %v2858
        %v3967 = vpack.c.b16 %v2867, %v2863
        %v3968 = vpack.c.b16 %v2868, %v2864
        %v3969 = vpack.c.b16 %v2869, %v2865
        %v3970 = vpack.c.b16 %v2870, %v2866
        %v3971 = vpack.c.b16 %v2875, %v2871
        %v3972 = vpack.c.b16 %v2876, %v2872
        %v3973 = vpack.c.b16 %v2877, %v2873
        %v3974 = vpack.c.b16 %v2878, %v2874
        %v3975 = vpack.c.b16 %v2883, %v2879
        %v3976 = vpack.c.b16 %v2884, %v2880
        %v3977 = vpack.c.b16 %v2885, %v2881
        %v3978 = vpack.c.b16 %v2886, %v2882
        %v3979 = vpack.c.b16 %v2891, %v2887
        %v3980 = vpack.c.b16 %v2892, %v2888
        %v3981 = vpack.c.b16 %v2893, %v2889
        %v3982 = vpack.c.b16 %v2894, %v2890
        %v3983 = vpack.c.b16 %v2899, %v2895
        %v3984 = vpack.c.b16 %v2900, %v2896
        %v3985 = vpack.c.b16 %v2901, %v2897
        %v3986 = vpack.c.b16 %v2902, %v2898
        %v3987 = vpack.c.b16 %v2907, %v2903
        %v3988 = vpack.c.b16 %v2908, %v2904
        %v3989 = vpack.c.b16 %v2909, %v2905
        %v3990 = vpack.c.b16 %v2910, %v2906
        %v3991 = vpack.c.b16 %v2915, %v2911
        %v3992 = vpack.c.b16 %v2916, %v2912
        %v3993 = vpack.c.b16 %v2917, %v2913
        %v3994 = vpack.c.b16 %v2918, %v2914
        %v3995 = vpack.c.b16 %v2923, %v2919
        %v3996 = vpack.c.b16 %v2924, %v2920
        %v3997 = vpack.c.b16 %v2925, %v2921
        %v3998 = vpack.c.b16 %v2926, %v2922
        %v3999 = vpack.c.b16 %v2931, %v2927
        %v4000 = vpack.c.b16 %v2932, %v2928
        %v4001 = vpack.c.b16 %v2933, %v2929
        %v4002 = vpack.c.b16 %v2934, %v2930
        %v4003 = vpack.c.b16 %v2939, %v2935
        %v4004 = vpack.c.b16 %v2940, %v2936
        %v4005 = vpack.c.b16 %v2941, %v2937
        %v4006 = vpack.c.b16 %v2942, %v2938
        %v4007 = vpack.c.b16 %v2947, %v2943
        %v4008 = vpack.c.b16 %v2948, %v2944
        %v4009 = vpack.c.b16 %v2949, %v2945
        %v4010 = vpack.c.b16 %v2950, %v2946
        %v4011 = vpack.c.b16 %v2955, %v2951
        %v4012 = vpack.c.b16 %v2956, %v2952
        %v4013 = vpack.c.b16 %v2957, %v2953
        %v4014 = vpack.c.b16 %v2958, %v2954
        %v4015 = vpack.c.b16 %v2963, %v2959
        %v4016 = vpack.c.b16 %v2964, %v2960
        %v4017 = vpack.c.b16 %v2965, %v2961
        %v4018 = vpack.c.b16 %v2966, %v2962
        %v4019 = vpack.c.b16 %v2971, %v2967
        %v4020 = vpack.c.b16 %v2972, %v2968
        %v4021 = vpack.c.b16 %v2973, %v2969
        %v4022 = vpack.c.b16 %v2974, %v2970
        %v4023 = vpack.c.b16 %v2979, %v2975
        %v4024 = vpack.c.b16 %v2980, %v2976
        %v4025 = vpack.c.b16 %v2981, %v2977
        %v4026 = vpack.c.b16 %v2982, %v2978
        %v4027 = vpack.c.b16 %v2987, %v2983
        %v4028 = vpack.c.b16 %v2988, %v2984
        %v4029 = vpack.c.b16 %v2989, %v2985
        %v4030 = vpack.c.b16 %v2990, %v2986
        %v4031 = vpack.c.b16 %v2995, %v2991
        %v4032 = vpack.c.b16 %v2996, %v2992
        %v4033 = vpack.c.b16 %v2997, %v2993
        %v4034 = vpack.c.b16 %v2998, %v2994
        %v4035 = vpack.c.b16 %v3003, %v2999
        %v4036 = vpack.c.b16 %v3004, %v3000
        %v4037 = vpack.c.b16 %v3005, %v3001
        %v4038 = vpack.c.b16 %v3006, %v3002
        %v4039 = vpack.c.b16 %v3011, %v3007
        %v4040 = vpack.c.b16 %v3012, %v3008
        %v4041 = vpack.c.b16 %v3013, %v3009
        %v4042 = vpack.c.b16 %v3014, %v3010
        %v4043 = vpack.c.b16 %v3019, %v3015
        %v4044 = vpack.c.b16 %v3020, %v3016
        %v4045 = vpack.c.b16 %v3021, %v3017
        %v4046 = vpack.c.b16 %v3022, %v3018
        %v4047 = vpack.c.b16 %v3027, %v3023
        %v4048 = vpack.c.b16 %v3028, %v3024
        %v4049 = vpack.c.b16 %v3029, %v3025
        %v4050 = vpack.c.b16 %v3030, %v3026
        %v4051 = vpack.c.b16 %v3035, %v3031
        %v4052 = vpack.c.b16 %v3036, %v3032
        %v4053 = vpack.c.b16 %v3037, %v3033
        %v4054 = vpack.c.b16 %v3038, %v3034
        %v4055 = vpack.c.b16 %v3043, %v3039
        %v4056 = vpack.c.b16 %v3044, %v3040
        %v4057 = vpack.c.b16 %v3045, %v3041
        %v4058 = vpack.c.b16 %v3046, %v3042
        %v4059 = vpack.c.b16 %v3051, %v3047
        %v4060 = vpack.c.b16 %v3052, %v3048
        %v4061 = vpack.c.b16 %v3053, %v3049
        %v4062 = vpack.c.b16 %v3054, %v3050
        %v4063 = vpack.c.b16 %v3059, %v3055
        %v4064 = vpack.c.b16 %v3060, %v3056
        %v4065 = vpack.c.b16 %v3061, %v3057
        %v4066 = vpack.c.b16 %v3062, %v3058
        %v4067 = vpack.c.b16 %v3067, %v3063
        %v4068 = vpack.c.b16 %v3068, %v3064
        %v4069 = vpack.c.b16 %v3069, %v3065
        %v4070 = vpack.c.b16 %v3070, %v3066
        %v4071 = vpack.c.b16 %v3075, %v3071
        %v4072 = vpack.c.b16 %v3076, %v3072
        %v4073 = vpack.c.b16 %v3077, %v3073
        %v4074 = vpack.c.b16 %v3078, %v3074
        %v4075 = vpack.c.b16 %v3083, %v3079
        %v4076 = vpack.c.b16 %v3084, %v3080
        %v4077 = vpack.c.b16 %v3085, %v3081
        %v4078 = vpack.c.b16 %v3086, %v3082
        %v4079 = vpack.c.b16 %v3091, %v3087
        %v4080 = vpack.c.b16 %v3092, %v3088
        %v4081 = vpack.c.b16 %v3093, %v3089
        %v4082 = vpack.c.b16 %v3094, %v3090
        %v4083 = vpack.c.b16 %v3099, %v3095
        %v4084 = vpack.c.b16 %v3100, %v3096
        %v4085 = vpack.c.b16 %v3101, %v3097
        %v4086 = vpack.c.b16 %v3102, %v3098
        %v4087 = vpack.c.b16 %v3107, %v3103
        %v4088 = vpack.c.b16 %v3108, %v3104
        %v4089 = vpack.c.b16 %v3109, %v3105
        %v4090 = vpack.c.b16 %v3110, %v3106
        %v4091 = vpack.c.b16 %v3115, %v3111
        %v4092 = vpack.c.b16 %v3116, %v3112
        %v4093 = vpack.c.b16 %v3117, %v3113
        %v4094 = vpack.c.b16 %v3118, %v3114
        %v4095 = vpack.c.b16 %v3123, %v3119
        %v4096 = vpack.c.b16 %v3124, %v3120
        %v4097 = vpack.c.b16 %v3125, %v3121
        %v4098 = vpack.c.b16 %v3126, %v3122
        %v4099 = vpack.c.b16 %v3131, %v3127
        %v4100 = vpack.c.b16 %v3132, %v3128
        %v4101 = vpack.c.b16 %v3133, %v3129
        %v4102 = vpack.c.b16 %v3134, %v3130
        %v4103 = vpack.c.b16 %v3139, %v3135
        %v4104 = vpack.c.b16 %v3140, %v3136
        %v4105 = vpack.c.b16 %v3141, %v3137
        %v4106 = vpack.c.b16 %v3142, %v3138
        %v4107 = vpack.c.b16 %v3147, %v3143
        %v4108 = vpack.c.b16 %v3148, %v3144
        %v4109 = vpack.c.b16 %v3149, %v3145
        %v4110 = vpack.c.b16 %v3150, %v3146
        %v4111 = vpack.c.b16 %v3155, %v3151
        %v4112 = vpack.c.b16 %v3156, %v3152
        %v4113 = vpack.c.b16 %v3157, %v3153
        %v4114 = vpack.c.b16 %v3158, %v3154
        %v4115 = vpack.c.b16 %v3163, %v3159
        %v4116 = vpack.c.b16 %v3164, %v3160
        %v4117 = vpack.c.b16 %v3165, %v3161
        %v4118 = vpack.c.b16 %v3166, %v3162
        %v4119 = vpack.c.b16 %v3171, %v3167
        %v4120 = vpack.c.b16 %v3172, %v3168
        %v4121 = vpack.c.b16 %v3173, %v3169
        %v4122 = vpack.c.b16 %v3174, %v3170
        %v4123 = vpack.c.b16 %v3179, %v3175
        %v4124 = vpack.c.b16 %v3180, %v3176
        %v4125 = vpack.c.b16 %v3181, %v3177
        %v4126 = vpack.c.b16 %v3182, %v3178
        %v4127 = vpack.c.b16 %v3187, %v3183
        %v4128 = vpack.c.b16 %v3188, %v3184
        %v4129 = vpack.c.b16 %v3189, %v3185
        %v4130 = vpack.c.b16 %v3190, %v3186
        %v4131 = vpack.c.b16 %v3195, %v3191
        %v4132 = vpack.c.b16 %v3196, %v3192
        %v4133 = vpack.c.b16 %v3197, %v3193
        %v4134 = vpack.c.b16 %v3198, %v3194
        %v4135 = vpack.c.b16 %v3203, %v3199
        %v4136 = vpack.c.b16 %v3204, %v3200
        %v4137 = vpack.c.b16 %v3205, %v3201
        %v4138 = vpack.c.b16 %v3206, %v3202
        %v4139 = vpack.c.b16 %v3211, %v3207
        %v4140 = vpack.c.b16 %v3212, %v3208
        %v4141 = vpack.c.b16 %v3213, %v3209
        %v4142 = vpack.c.b16 %v3214, %v3210
        %v4143 = vpack.c.b16 %v3219, %v3215
        %v4144 = vpack.c.b16 %v3220, %v3216
        %v4145 = vpack.c.b16 %v3221, %v3217
        %v4146 = vpack.c.b16 %v3222, %v3218
        %v4147 = vpack.c.b16 %v3227, %v3223
        %v4148 = vpack.c.b16 %v3228, %v3224
        %v4149 = vpack.c.b16 %v3229, %v3225
        %v4150 = vpack.c.b16 %v3230, %v3226
        %v4151 = vpack.c.b16 %v3235, %v3231
        %v4152 = vpack.c.b16 %v3236, %v3232
        %v4153 = vpack.c.b16 %v3237, %v3233
        %v4154 = vpack.c.b16 %v3238, %v3234
        %v4155 = vpack.c.b16 %v3243, %v3239
        %v4156 = vpack.c.b16 %v3244, %v3240
        %v4157 = vpack.c.b16 %v3245, %v3241
        %v4158 = vpack.c.b16 %v3246, %v3242
        %v4159 = vpack.c.b16 %v3251, %v3247
        %v4160 = vpack.c.b16 %v3252, %v3248
        %v4161 = vpack.c.b16 %v3253, %v3249
        %v4162 = vpack.c.b16 %v3254, %v3250
        %v4163 = vpack.c.b16 %v3259, %v3255
        %v4164 = vpack.c.b16 %v3260, %v3256
        %v4165 = vpack.c.b16 %v3261, %v3257
        %v4166 = vpack.c.b16 %v3262, %v3258
        %v4167 = vpack.c.b16 %v3267, %v3263
        %v4168 = vpack.c.b16 %v3268, %v3264
        %v4169 = vpack.c.b16 %v3269, %v3265
        %v4170 = vpack.c.b16 %v3270, %v3266
        %v4171 = vpack.c.b16 %v3275, %v3271
        %v4172 = vpack.c.b16 %v3276, %v3272
        %v4173 = vpack.c.b16 %v3277, %v3273
        %v4174 = vpack.c.b16 %v3278, %v3274
        %v4175 = vpack.c.b16 %v3283, %v3279
        %v4176 = vpack.c.b16 %v3284, %v3280
        %v4177 = vpack.c.b16 %v3285, %v3281
        %v4178 = vpack.c.b16 %v3286, %v3282
        %v4179 = vpack.c.b16 %v3291, %v3287
        %v4180 = vpack.c.b16 %v3292, %v3288
        %v4181 = vpack.c.b16 %v3293, %v3289
        %v4182 = vpack.c.b16 %v3294, %v3290
        %v4183 = vpack.c.b16 %v3299, %v3295
        %v4184 = vpack.c.b16 %v3300, %v3296
        %v4185 = vpack.c.b16 %v3301, %v3297
        %v4186 = vpack.c.b16 %v3302, %v3298
        %v4187 = vpack.c.b16 %v3307, %v3303
        %v4188 = vpack.c.b16 %v3308, %v3304
        %v4189 = vpack.c.b16 %v3309, %v3305
        %v4190 = vpack.c.b16 %v3310, %v3306
        %v4191 = vpack.c.b16 %v3315, %v3311
        %v4192 = vpack.c.b16 %v3316, %v3312
        %v4193 = vpack.c.b16 %v3317, %v3313
        %v4194 = vpack.c.b16 %v3318, %v3314
        %v4195 = vpack.c.b16 %v3323, %v3319
        %v4196 = vpack.c.b16 %v3324, %v3320
        %v4197 = vpack.c.b16 %v3325, %v3321
        %v4198 = vpack.c.b16 %v3326, %v3322
        %v4199 = vpack.c.b16 %v3331, %v3327
        %v4200 = vpack.c.b16 %v3332, %v3328
        %v4201 = vpack.c.b16 %v3333, %v3329
        %v4202 = vpack.c.b16 %v3334, %v3330
        %v4203 = vpack.c.b16 %v3339, %v3335
        %v4204 = vpack.c.b16 %v3340, %v3336
        %v4205 = vpack.c.b16 %v3341, %v3337
        %v4206 = vpack.c.b16 %v3342, %v3338
        %v4207 = vpack.c.b16 %v3347, %v3343
        %v4208 = vpack.c.b16 %v3348, %v3344
        %v4209 = vpack.c.b16 %v3349, %v3345
        %v4210 = vpack.c.b16 %v3350, %v3346
        %v4211 = vpack.c.b16 %v3355, %v3351
        %v4212 = vpack.c.b16 %v3356, %v3352
        %v4213 = vpack.c.b16 %v3357, %v3353
        %v4214 = vpack.c.b16 %v3358, %v3354
        %v4215 = vpack.c.b16 %v3363, %v3359
        %v4216 = vpack.c.b16 %v3364, %v3360
        %v4217 = vpack.c.b16 %v3365, %v3361
        %v4218 = vpack.c.b16 %v3366, %v3362
        %v4219 = vpack.c.b16 %v3371, %v3367
        %v4220 = vpack.c.b16 %v3372, %v3368
        %v4221 = vpack.c.b16 %v3373, %v3369
        %v4222 = vpack.c.b16 %v3374, %v3370
        %v4223 = vpack.c.b16 %v3379, %v3375
        %v4224 = vpack.c.b16 %v3380, %v3376
        %v4225 = vpack.c.b16 %v3381, %v3377
        %v4226 = vpack.c.b16 %v3382, %v3378
        %v4227 = vpack.c.b16 %v3387, %v3383
        %v4228 = vpack.c.b16 %v3388, %v3384
        %v4229 = vpack.c.b16 %v3389, %v3385
        %v4230 = vpack.c.b16 %v3390, %v3386
        %v4231 = vpack.c.b16 %v3395, %v3391
        %v4232 = vpack.c.b16 %v3396, %v3392
        %v4233 = vpack.c.b16 %v3397, %v3393
        %v4234 = vpack.c.b16 %v3398, %v3394
        %v4235 = vpack.c.b16 %v3403, %v3399
        %v4236 = vpack.c.b16 %v3404, %v3400
        %v4237 = vpack.c.b16 %v3405, %v3401
        %v4238 = vpack.c.b16 %v3406, %v3402
        %v4239 = vpack.c.b16 %v3411, %v3407
        %v4240 = vpack.c.b16 %v3412, %v3408
        %v4241 = vpack.c.b16 %v3413, %v3409
        %v4242 = vpack.c.b16 %v3414, %v3410
        %v4243 = vpack.c.b16 %v3419, %v3415
        %v4244 = vpack.c.b16 %v3420, %v3416
        %v4245 = vpack.c.b16 %v3421, %v3417
        %v4246 = vpack.c.b16 %v3422, %v3418
        %v4247 = vpack.c.b16 %v3427, %v3423
        %v4248 = vpack.c.b16 %v3428, %v3424
        %v4249 = vpack.c.b16 %v3429, %v3425
        %v4250 = vpack.c.b16 %v3430, %v3426
        %v4251 = vpack.c.b16 %v3435, %v3431
        %v4252 = vpack.c.b16 %v3436, %v3432
        %v4253 = vpack.c.b16 %v3437, %v3433
        %v4254 = vpack.c.b16 %v3438, %v3434
        %v4255 = vpack.c.b16 %v3443, %v3439
        %v4256 = vpack.c.b16 %v3444, %v3440
        %v4257 = vpack.c.b16 %v3445, %v3441
        %v4258 = vpack.c.b16 %v3446, %v3442
        %v4259 = vpack.c.b16 %v3451, %v3447
        %v4260 = vpack.c.b16 %v3452, %v3448
        %v4261 = vpack.c.b16 %v3453, %v3449
        %v4262 = vpack.c.b16 %v3454, %v3450
        %v4263 = vpack.c.b16 %v3459, %v3455
        %v4264 = vpack.c.b16 %v3460, %v3456
        %v4265 = vpack.c.b16 %v3461, %v3457
        %v4266 = vpack.c.b16 %v3462, %v3458
        %v4267 = vpack.c.b16 %v3467, %v3463
        %v4268 = vpack.c.b16 %v3468, %v3464
        %v4269 = vpack.c.b16 %v3469, %v3465
        %v4270 = vpack.c.b16 %v3470, %v3466
        %v4271 = vpack.c.b16 %v3475, %v3471
        %v4272 = vpack.c.b16 %v3476, %v3472
        %v4273 = vpack.c.b16 %v3477, %v3473
        %v4274 = vpack.c.b16 %v3478, %v3474
        %v4275 = vpack.c.b16 %v3483, %v3479
        %v4276 = vpack.c.b16 %v3484, %v3480
        %v4277 = vpack.c.b16 %v3485, %v3481
        %v4278 = vpack.c.b16 %v3486, %v3482
        %v4279 = vpack.c.b16 %v3491, %v3487
        %v4280 = vpack.c.b16 %v3492, %v3488
        %v4281 = vpack.c.b16 %v3493, %v3489
        %v4282 = vpack.c.b16 %v3494, %v3490
        %v4283 = vpack.c.b16 %v3499, %v3495
        %v4284 = vpack.c.b16 %v3500, %v3496
        %v4285 = vpack.c.b16 %v3501, %v3497
        %v4286 = vpack.c.b16 %v3502, %v3498
        %v4287 = vpack.c.b16 %v3507, %v3503
        %v4288 = vpack.c.b16 %v3508, %v3504
        %v4289 = vpack.c.b16 %v3509, %v3505
        %v4290 = vpack.c.b16 %v3510, %v3506
        %v4291 = vpack.c.b16 %v3515, %v3511
        %v4292 = vpack.c.b16 %v3516, %v3512
        %v4293 = vpack.c.b16 %v3517, %v3513
        %v4294 = vpack.c.b16 %v3518, %v3514
        %v4295 = vpack.c.b16 %v3523, %v3519
        %v4296 = vpack.c.b16 %v3524, %v3520
        %v4297 = vpack.c.b16 %v3525, %v3521
        %v4298 = vpack.c.b16 %v3526, %v3522
        %v4299 = vpack.c.b16 %v3531, %v3527
        %v4300 = vpack.c.b16 %v3532, %v3528
        %v4301 = vpack.c.b16 %v3533, %v3529
        %v4302 = vpack.c.b16 %v3534, %v3530
        %5071 = vmatprep.subr.bf16.mxu0 %v3564
        %5072 = vmatpush1.bf16.msra.mxu0 %v3563
        %5073 = vmatprep.subr.bf16.mxu0 %v3560
        %5074 = vmatpush1.bf16.msra.mxu0 %v3559
        %5075 = vmatprep.subr.bf16.mxu0 %v3556
        %5076 = vmatpush1.bf16.msra.mxu0 %v3555
        %5077 = vmatprep.subr.bf16.mxu0 %v3552
        %5078 = vmatpush1.bf16.msra.mxu0 %v3551
        %5079 = vmatprep.subr.bf16.mxu0 %v3548
        %5080 = vmatpush1.bf16.msra.mxu0 %v3547
        %5081 = vmatprep.subr.bf16.mxu0 %v3544
        %5082 = vmatpush1.bf16.msra.mxu0 %v3543
        %5083 = vmatprep.subr.bf16.mxu0 %v3540
        %5084 = vmatpush1.bf16.msra.mxu0 %v3539
        %5085 = vmatprep.subr.bf16.mxu0 %v3536
        %5086 = vmatpush1.bf16.msra.mxu0 %v3535
        %5087 = vmatprep.subr.bf16.mxu0 %v3596
        %5088 = vmatpush2.bf16.msra.mxu0 %v3595
        %5089 = vmatprep.subr.bf16.mxu0 %v3592
        %5090 = vmatpush2.bf16.msra.mxu0 %v3591
        %5091 = vmatprep.subr.bf16.mxu0 %v3588
        %5092 = vmatpush2.bf16.msra.mxu0 %v3587
        %5093 = vmatprep.subr.bf16.mxu0 %v3584
        %5094 = vmatpush2.bf16.msra.mxu0 %v3583
        %5095 = vmatprep.subr.bf16.mxu0 %v3580
        %5096 = vmatpush2.bf16.msra.mxu0 %v3579
        %5097 = vmatprep.subr.bf16.mxu0 %v3576
        %5098 = vmatpush2.bf16.msra.mxu0 %v3575
        %5099 = vmatprep.subr.bf16.mxu0 %v3572
        %5100 = vmatpush2.bf16.msra.mxu0 %v3571
        %5101 = vmatprep.subr.bf16.mxu0 %v3568
        %5102 = vmatpush2.bf16.msra.mxu0 %v3567
        %5103 = vmatprep.mubr.bf16.mxu0 %v440
        %5104 = vmatmul.mubr.bf16.gmra.mxu0 %v439
        %v5105 = vpop.f32.mrf.mxu0
        %v5106 = vadd.f32 0.0, %v5105
        %v5107 = vpop.f32.mrf.mxu0
        %v5108 = vadd.f32 0.0, %v5107
        %v5109 = vpop.f32.mrf.mxu0
        %v5110 = vpop.f32.mrf.mxu0
        %5111 = vdwg.mxu0
        %5112 = vmatprep.subr.bf16.mxu0 %v3628
        %5113 = vmatpush1.bf16.msra.mxu0 %v3627
        %5114 = vmatprep.subr.bf16.mxu0 %v3624
        %5115 = vmatpush1.bf16.msra.mxu0 %v3623
        %5116 = vmatprep.subr.bf16.mxu0 %v3620
        %5117 = vmatpush1.bf16.msra.mxu0 %v3619
        %5118 = vmatprep.subr.bf16.mxu0 %v3616
        %5119 = vmatpush1.bf16.msra.mxu0 %v3615
        %5120 = vmatprep.subr.bf16.mxu0 %v3612
        %5121 = vmatpush1.bf16.msra.mxu0 %v3611
        %5122 = vmatprep.subr.bf16.mxu0 %v3608
        %5123 = vmatpush1.bf16.msra.mxu0 %v3607
        %5124 = vmatprep.subr.bf16.mxu0 %v3604
        %5125 = vmatpush1.bf16.msra.mxu0 %v3603
        %5126 = vmatprep.subr.bf16.mxu0 %v3600
        %5127 = vmatpush1.bf16.msra.mxu0 %v3599
        %5128 = vmatprep.subr.bf16.mxu0 %v3660
        %5129 = vmatpush2.bf16.msra.mxu0 %v3659
        %5130 = vmatprep.subr.bf16.mxu0 %v3656
        %5131 = vmatpush2.bf16.msra.mxu0 %v3655
        %5132 = vmatprep.subr.bf16.mxu0 %v3652
        %5133 = vmatpush2.bf16.msra.mxu0 %v3651
        %5134 = vmatprep.subr.bf16.mxu0 %v3648
        %5135 = vmatpush2.bf16.msra.mxu0 %v3647
        %5136 = vmatprep.subr.bf16.mxu0 %v3644
        %5137 = vmatpush2.bf16.msra.mxu0 %v3643
        %5138 = vmatprep.subr.bf16.mxu0 %v3640
        %5139 = vmatpush2.bf16.msra.mxu0 %v3639
        %5140 = vmatprep.subr.bf16.mxu0 %v3636
        %5141 = vmatpush2.bf16.msra.mxu0 %v3635
        %5142 = vmatprep.subr.bf16.mxu0 %v3632
        %5143 = vmatpush2.bf16.msra.mxu0 %v3631
        %5144 = vmatprep.mubr.bf16.mxu0 %v442
        %5145 = vmatmul.mubr.bf16.gmra.mxu0 %v441
        %v5146 = vpop.f32.mrf.mxu0
        %v5147 = vadd.f32 %v5106, %v5146
        %v5148 = vpop.f32.mrf.mxu0
        %v5149 = vadd.f32 %v5108, %v5148
        %v5150 = vpop.f32.mrf.mxu0
        %v5151 = vpop.f32.mrf.mxu0
        %5152 = vdwg.mxu0
        %5153 = vmatprep.subr.bf16.mxu0 %v3692
        %5154 = vmatpush1.bf16.msra.mxu0 %v3691
        %5155 = vmatprep.subr.bf16.mxu0 %v3688
        %5156 = vmatpush1.bf16.msra.mxu0 %v3687
        %5157 = vmatprep.subr.bf16.mxu0 %v3684
        %5158 = vmatpush1.bf16.msra.mxu0 %v3683
        %5159 = vmatprep.subr.bf16.mxu0 %v3680
        %5160 = vmatpush1.bf16.msra.mxu0 %v3679
        %5161 = vmatprep.subr.bf16.mxu0 %v3676
        %5162 = vmatpush1.bf16.msra.mxu0 %v3675
        %5163 = vmatprep.subr.bf16.mxu0 %v3672
        %5164 = vmatpush1.bf16.msra.mxu0 %v3671
        %5165 = vmatprep.subr.bf16.mxu0 %v3668
        %5166 = vmatpush1.bf16.msra.mxu0 %v3667
        %5167 = vmatprep.subr.bf16.mxu0 %v3664
        %5168 = vmatpush1.bf16.msra.mxu0 %v3663
        %5169 = vmatprep.subr.bf16.mxu0 %v3724
        %5170 = vmatpush2.bf16.msra.mxu0 %v3723
        %5171 = vmatprep.subr.bf16.mxu0 %v3720
        %5172 = vmatpush2.bf16.msra.mxu0 %v3719
        %5173 = vmatprep.subr.bf16.mxu0 %v3716
        %5174 = vmatpush2.bf16.msra.mxu0 %v3715
        %5175 = vmatprep.subr.bf16.mxu0 %v3712
        %5176 = vmatpush2.bf16.msra.mxu0 %v3711
        %5177 = vmatprep.subr.bf16.mxu0 %v3708
        %5178 = vmatpush2.bf16.msra.mxu0 %v3707
        %5179 = vmatprep.subr.bf16.mxu0 %v3704
        %5180 = vmatpush2.bf16.msra.mxu0 %v3703
        %5181 = vmatprep.subr.bf16.mxu0 %v3700
        %5182 = vmatpush2.bf16.msra.mxu0 %v3699
        %5183 = vmatprep.subr.bf16.mxu0 %v3696
        %5184 = vmatpush2.bf16.msra.mxu0 %v3695
        %5185 = vmatprep.mubr.bf16.mxu0 %v444
        %5186 = vmatmul.mubr.bf16.gmra.mxu0 %v443
        %v5187 = vpop.f32.mrf.mxu0
        %v5188 = vadd.f32 %v5147, %v5187
        %v5189 = vpop.f32.mrf.mxu0
        %v5190 = vadd.f32 %v5149, %v5189
        %v5191 = vpop.f32.mrf.mxu0
        %v5192 = vpop.f32.mrf.mxu0
        %5193 = vdwg.mxu0
        %5194 = vmatprep.subr.bf16.mxu0 %v3756
        %5195 = vmatpush1.bf16.msra.mxu0 %v3755
        %5196 = vmatprep.subr.bf16.mxu0 %v3752
        %5197 = vmatpush1.bf16.msra.mxu0 %v3751
        %5198 = vmatprep.subr.bf16.mxu0 %v3748
        %5199 = vmatpush1.bf16.msra.mxu0 %v3747
        %5200 = vmatprep.subr.bf16.mxu0 %v3744
        %5201 = vmatpush1.bf16.msra.mxu0 %v3743
        %5202 = vmatprep.subr.bf16.mxu0 %v3740
        %5203 = vmatpush1.bf16.msra.mxu0 %v3739
        %5204 = vmatprep.subr.bf16.mxu0 %v3736
        %5205 = vmatpush1.bf16.msra.mxu0 %v3735
        %5206 = vmatprep.subr.bf16.mxu0 %v3732
        %5207 = vmatpush1.bf16.msra.mxu0 %v3731
        %5208 = vmatprep.subr.bf16.mxu0 %v3728
        %5209 = vmatpush1.bf16.msra.mxu0 %v3727
        %5210 = vmatprep.subr.bf16.mxu0 %v3788
        %5211 = vmatpush2.bf16.msra.mxu0 %v3787
        %5212 = vmatprep.subr.bf16.mxu0 %v3784
        %5213 = vmatpush2.bf16.msra.mxu0 %v3783
        %5214 = vmatprep.subr.bf16.mxu0 %v3780
        %5215 = vmatpush2.bf16.msra.mxu0 %v3779
        %5216 = vmatprep.subr.bf16.mxu0 %v3776
        %5217 = vmatpush2.bf16.msra.mxu0 %v3775
        %5218 = vmatprep.subr.bf16.mxu0 %v3772
        %5219 = vmatpush2.bf16.msra.mxu0 %v3771
        %5220 = vmatprep.subr.bf16.mxu0 %v3768
        %5221 = vmatpush2.bf16.msra.mxu0 %v3767
        %5222 = vmatprep.subr.bf16.mxu0 %v3764
        %5223 = vmatpush2.bf16.msra.mxu0 %v3763
        %5224 = vmatprep.subr.bf16.mxu0 %v3760
        %5225 = vmatpush2.bf16.msra.mxu0 %v3759
        %5226 = vmatprep.mubr.bf16.mxu0 %v446
        %5227 = vmatmul.mubr.bf16.gmra.mxu0 %v445
        %v5228 = vpop.f32.mrf.mxu0
        %v5229 = vadd.f32 %v5188, %v5228
        %v5230 = vpop.f32.mrf.mxu0
        %v5231 = vadd.f32 %v5190, %v5230
        %v5232 = vpop.f32.mrf.mxu0
        %v5233 = vpop.f32.mrf.mxu0
        %5234 = vdwg.mxu0
        %5235 = vmatprep.subr.bf16.mxu0 %v3820
        %5236 = vmatpush1.bf16.msra.mxu0 %v3819
        %5237 = vmatprep.subr.bf16.mxu0 %v3816
        %5238 = vmatpush1.bf16.msra.mxu0 %v3815
        %5239 = vmatprep.subr.bf16.mxu0 %v3812
        %5240 = vmatpush1.bf16.msra.mxu0 %v3811
        %5241 = vmatprep.subr.bf16.mxu0 %v3808
        %5242 = vmatpush1.bf16.msra.mxu0 %v3807
        %5243 = vmatprep.subr.bf16.mxu0 %v3804
        %5244 = vmatpush1.bf16.msra.mxu0 %v3803
        %5245 = vmatprep.subr.bf16.mxu0 %v3800
        %5246 = vmatpush1.bf16.msra.mxu0 %v3799
        %5247 = vmatprep.subr.bf16.mxu0 %v3796
        %5248 = vmatpush1.bf16.msra.mxu0 %v3795
        %5249 = vmatprep.subr.bf16.mxu0 %v3792
        %5250 = vmatpush1.bf16.msra.mxu0 %v3791
        %5251 = vmatprep.subr.bf16.mxu0 %v3852
        %5252 = vmatpush2.bf16.msra.mxu0 %v3851
        %5253 = vmatprep.subr.bf16.mxu0 %v3848
        %5254 = vmatpush2.bf16.msra.mxu0 %v3847
        %5255 = vmatprep.subr.bf16.mxu0 %v3844
        %5256 = vmatpush2.bf16.msra.mxu0 %v3843
        %5257 = vmatprep.subr.bf16.mxu0 %v3840
        %5258 = vmatpush2.bf16.msra.mxu0 %v3839
        %5259 = vmatprep.subr.bf16.mxu0 %v3836
        %5260 = vmatpush2.bf16.msra.mxu0 %v3835
        %5261 = vmatprep.subr.bf16.mxu0 %v3832
        %5262 = vmatpush2.bf16.msra.mxu0 %v3831
        %5263 = vmatprep.subr.bf16.mxu0 %v3828
        %5264 = vmatpush2.bf16.msra.mxu0 %v3827
        %5265 = vmatprep.subr.bf16.mxu0 %v3824
        %5266 = vmatpush2.bf16.msra.mxu0 %v3823
        %5267 = vmatprep.mubr.bf16.mxu0 %v448
        %5268 = vmatmul.mubr.bf16.gmra.mxu0 %v447
        %v5269 = vpop.f32.mrf.mxu0
        %v5270 = vadd.f32 %v5229, %v5269
        %v5271 = vpop.f32.mrf.mxu0
        %v5272 = vadd.f32 %v5231, %v5271
        %v5273 = vpop.f32.mrf.mxu0
        %v5274 = vpop.f32.mrf.mxu0
        %5275 = vdwg.mxu0
        %5276 = vmatprep.subr.bf16.mxu0 %v3884
        %5277 = vmatpush1.bf16.msra.mxu0 %v3883
        %5278 = vmatprep.subr.bf16.mxu0 %v3880
        %5279 = vmatpush1.bf16.msra.mxu0 %v3879
        %5280 = vmatprep.subr.bf16.mxu0 %v3876
        %5281 = vmatpush1.bf16.msra.mxu0 %v3875
        %5282 = vmatprep.subr.bf16.mxu0 %v3872
        %5283 = vmatpush1.bf16.msra.mxu0 %v3871
        %5284 = vmatprep.subr.bf16.mxu0 %v3868
        %5285 = vmatpush1.bf16.msra.mxu0 %v3867
        %5286 = vmatprep.subr.bf16.mxu0 %v3864
        %5287 = vmatpush1.bf16.msra.mxu0 %v3863
        %5288 = vmatprep.subr.bf16.mxu0 %v3860
        %5289 = vmatpush1.bf16.msra.mxu0 %v3859
        %5290 = vmatprep.subr.bf16.mxu0 %v3856
        %5291 = vmatpush1.bf16.msra.mxu0 %v3855
        %5292 = vmatprep.subr.bf16.mxu0 %v3916
        %5293 = vmatpush2.bf16.msra.mxu0 %v3915
        %5294 = vmatprep.subr.bf16.mxu0 %v3912
        %5295 = vmatpush2.bf16.msra.mxu0 %v3911
        %5296 = vmatprep.subr.bf16.mxu0 %v3908
        %5297 = vmatpush2.bf16.msra.mxu0 %v3907
        %5298 = vmatprep.subr.bf16.mxu0 %v3904
        %5299 = vmatpush2.bf16.msra.mxu0 %v3903
        %5300 = vmatprep.subr.bf16.mxu0 %v3900
        %5301 = vmatpush2.bf16.msra.mxu0 %v3899
        %5302 = vmatprep.subr.bf16.mxu0 %v3896
        %5303 = vmatpush2.bf16.msra.mxu0 %v3895
        %5304 = vmatprep.subr.bf16.mxu0 %v3892
        %5305 = vmatpush2.bf16.msra.mxu0 %v3891
        %5306 = vmatprep.subr.bf16.mxu0 %v3888
        %5307 = vmatpush2.bf16.msra.mxu0 %v3887
        %5308 = vmatprep.mubr.bf16.mxu0 %v450
        %5309 = vmatmul.mubr.bf16.gmra.mxu0 %v449
        %v5310 = vpop.f32.mrf.mxu0
        %v5311 = vadd.f32 %v5270, %v5310
        %v5312 = vpop.f32.mrf.mxu0
        %v5313 = vadd.f32 %v5272, %v5312
        %v5314 = vpop.f32.mrf.mxu0
        %v5315 = vpop.f32.mrf.mxu0
        %5316 = vdwg.mxu0
        %5317 = vmatprep.subr.bf16.mxu0 %v3948
        %5318 = vmatpush1.bf16.msra.mxu0 %v3947
        %5319 = vmatprep.subr.bf16.mxu0 %v3944
        %5320 = vmatpush1.bf16.msra.mxu0 %v3943
        %5321 = vmatprep.subr.bf16.mxu0 %v3940
        %5322 = vmatpush1.bf16.msra.mxu0 %v3939
        %5323 = vmatprep.subr.bf16.mxu0 %v3936
        %5324 = vmatpush1.bf16.msra.mxu0 %v3935
        %5325 = vmatprep.subr.bf16.mxu0 %v3932
        %5326 = vmatpush1.bf16.msra.mxu0 %v3931
        %5327 = vmatprep.subr.bf16.mxu0 %v3928
        %5328 = vmatpush1.bf16.msra.mxu0 %v3927
        %5329 = vmatprep.subr.bf16.mxu0 %v3924
        %5330 = vmatpush1.bf16.msra.mxu0 %v3923
        %5331 = vmatprep.subr.bf16.mxu0 %v3920
        %5332 = vmatpush1.bf16.msra.mxu0 %v3919
        %5333 = vmatprep.subr.bf16.mxu0 %v3980
        %5334 = vmatpush2.bf16.msra.mxu0 %v3979
        %5335 = vmatprep.subr.bf16.mxu0 %v3976
        %5336 = vmatpush2.bf16.msra.mxu0 %v3975
        %5337 = vmatprep.subr.bf16.mxu0 %v3972
        %5338 = vmatpush2.bf16.msra.mxu0 %v3971
        %5339 = vmatprep.subr.bf16.mxu0 %v3968
        %5340 = vmatpush2.bf16.msra.mxu0 %v3967
        %5341 = vmatprep.subr.bf16.mxu0 %v3964
        %5342 = vmatpush2.bf16.msra.mxu0 %v3963
        %5343 = vmatprep.subr.bf16.mxu0 %v3960
        %5344 = vmatpush2.bf16.msra.mxu0 %v3959
        %5345 = vmatprep.subr.bf16.mxu0 %v3956
        %5346 = vmatpush2.bf16.msra.mxu0 %v3955
        %5347 = vmatprep.subr.bf16.mxu0 %v3952
        %5348 = vmatpush2.bf16.msra.mxu0 %v3951
        %5349 = vmatprep.mubr.bf16.mxu0 %v452
        %5350 = vmatmul.mubr.bf16.gmra.mxu0 %v451
        %v5351 = vpop.f32.mrf.mxu0
        %v5352 = vadd.f32 %v5311, %v5351
        %v5353 = vpop.f32.mrf.mxu0
        %v5354 = vadd.f32 %v5313, %v5353
        %v5355 = vpop.f32.mrf.mxu0
        %v5356 = vpop.f32.mrf.mxu0
        %5357 = vdwg.mxu0
        %5358 = vmatprep.subr.bf16.mxu0 %v4012
        %5359 = vmatpush1.bf16.msra.mxu0 %v4011
        %5360 = vmatprep.subr.bf16.mxu0 %v4008
        %5361 = vmatpush1.bf16.msra.mxu0 %v4007
        %5362 = vmatprep.subr.bf16.mxu0 %v4004
        %5363 = vmatpush1.bf16.msra.mxu0 %v4003
        %5364 = vmatprep.subr.bf16.mxu0 %v4000
        %5365 = vmatpush1.bf16.msra.mxu0 %v3999
        %5366 = vmatprep.subr.bf16.mxu0 %v3996
        %5367 = vmatpush1.bf16.msra.mxu0 %v3995
        %5368 = vmatprep.subr.bf16.mxu0 %v3992
        %5369 = vmatpush1.bf16.msra.mxu0 %v3991
        %5370 = vmatprep.subr.bf16.mxu0 %v3988
        %5371 = vmatpush1.bf16.msra.mxu0 %v3987
        %5372 = vmatprep.subr.bf16.mxu0 %v3984
        %5373 = vmatpush1.bf16.msra.mxu0 %v3983
        %5374 = vmatprep.subr.bf16.mxu0 %v4044
        %5375 = vmatpush2.bf16.msra.mxu0 %v4043
        %5376 = vmatprep.subr.bf16.mxu0 %v4040
        %5377 = vmatpush2.bf16.msra.mxu0 %v4039
        %5378 = vmatprep.subr.bf16.mxu0 %v4036
        %5379 = vmatpush2.bf16.msra.mxu0 %v4035
        %5380 = vmatprep.subr.bf16.mxu0 %v4032
        %5381 = vmatpush2.bf16.msra.mxu0 %v4031
        %5382 = vmatprep.subr.bf16.mxu0 %v4028
        %5383 = vmatpush2.bf16.msra.mxu0 %v4027
        %5384 = vmatprep.subr.bf16.mxu0 %v4024
        %5385 = vmatpush2.bf16.msra.mxu0 %v4023
        %5386 = vmatprep.subr.bf16.mxu0 %v4020
        %5387 = vmatpush2.bf16.msra.mxu0 %v4019
        %5388 = vmatprep.subr.bf16.mxu0 %v4016
        %5389 = vmatpush2.bf16.msra.mxu0 %v4015
        %5390 = vmatprep.mubr.bf16.mxu0 %v454
        %5391 = vmatmul.mubr.bf16.gmra.mxu0 %v453
        %v5392 = vpop.f32.mrf.mxu0
        %v5393 = vadd.f32 %v5352, %v5392
        %v5394 = vpop.f32.mrf.mxu0
        %v5395 = vadd.f32 %v5354, %v5394
        %v5396 = vpop.f32.mrf.mxu0
        %v5397 = vpop.f32.mrf.mxu0
        %5398 = vdwg.mxu0
        %5399 = vmatprep.subr.bf16.mxu0 %v4076
        %5400 = vmatpush1.bf16.msra.mxu0 %v4075
        %5401 = vmatprep.subr.bf16.mxu0 %v4072
        %5402 = vmatpush1.bf16.msra.mxu0 %v4071
        %5403 = vmatprep.subr.bf16.mxu0 %v4068
        %5404 = vmatpush1.bf16.msra.mxu0 %v4067
        %5405 = vmatprep.subr.bf16.mxu0 %v4064
        %5406 = vmatpush1.bf16.msra.mxu0 %v4063
        %5407 = vmatprep.subr.bf16.mxu0 %v4060
        %5408 = vmatpush1.bf16.msra.mxu0 %v4059
        %5409 = vmatprep.subr.bf16.mxu0 %v4056
        %5410 = vmatpush1.bf16.msra.mxu0 %v4055
        %5411 = vmatprep.subr.bf16.mxu0 %v4052
        %5412 = vmatpush1.bf16.msra.mxu0 %v4051
        %5413 = vmatprep.subr.bf16.mxu0 %v4048
        %5414 = vmatpush1.bf16.msra.mxu0 %v4047
        %5415 = vmatprep.subr.bf16.mxu0 %v4108
        %5416 = vmatpush2.bf16.msra.mxu0 %v4107
        %5417 = vmatprep.subr.bf16.mxu0 %v4104
        %5418 = vmatpush2.bf16.msra.mxu0 %v4103
        %5419 = vmatprep.subr.bf16.mxu0 %v4100
        %5420 = vmatpush2.bf16.msra.mxu0 %v4099
        %5421 = vmatprep.subr.bf16.mxu0 %v4096
        %5422 = vmatpush2.bf16.msra.mxu0 %v4095
        %5423 = vmatprep.subr.bf16.mxu0 %v4092
        %5424 = vmatpush2.bf16.msra.mxu0 %v4091
        %5425 = vmatprep.subr.bf16.mxu0 %v4088
        %5426 = vmatpush2.bf16.msra.mxu0 %v4087
        %5427 = vmatprep.subr.bf16.mxu0 %v4084
        %5428 = vmatpush2.bf16.msra.mxu0 %v4083
        %5429 = vmatprep.subr.bf16.mxu0 %v4080
        %5430 = vmatpush2.bf16.msra.mxu0 %v4079
        %5431 = vmatprep.mubr.bf16.mxu0 %v456
        %5432 = vmatmul.mubr.bf16.gmra.mxu0 %v455
        %v5433 = vpop.f32.mrf.mxu0
        %v5434 = vadd.f32 %v5393, %v5433
        %v5435 = vpop.f32.mrf.mxu0
        %v5436 = vadd.f32 %v5395, %v5435
        %v5437 = vpop.f32.mrf.mxu0
        %v5438 = vpop.f32.mrf.mxu0
        %5439 = vdwg.mxu0
        %5440 = vmatprep.subr.bf16.mxu0 %v4140
        %5441 = vmatpush1.bf16.msra.mxu0 %v4139
        %5442 = vmatprep.subr.bf16.mxu0 %v4136
        %5443 = vmatpush1.bf16.msra.mxu0 %v4135
        %5444 = vmatprep.subr.bf16.mxu0 %v4132
        %5445 = vmatpush1.bf16.msra.mxu0 %v4131
        %5446 = vmatprep.subr.bf16.mxu0 %v4128
        %5447 = vmatpush1.bf16.msra.mxu0 %v4127
        %5448 = vmatprep.subr.bf16.mxu0 %v4124
        %5449 = vmatpush1.bf16.msra.mxu0 %v4123
        %5450 = vmatprep.subr.bf16.mxu0 %v4120
        %5451 = vmatpush1.bf16.msra.mxu0 %v4119
        %5452 = vmatprep.subr.bf16.mxu0 %v4116
        %5453 = vmatpush1.bf16.msra.mxu0 %v4115
        %5454 = vmatprep.subr.bf16.mxu0 %v4112
        %5455 = vmatpush1.bf16.msra.mxu0 %v4111
        %5456 = vmatprep.subr.bf16.mxu0 %v4172
        %5457 = vmatpush2.bf16.msra.mxu0 %v4171
        %5458 = vmatprep.subr.bf16.mxu0 %v4168
        %5459 = vmatpush2.bf16.msra.mxu0 %v4167
        %5460 = vmatprep.subr.bf16.mxu0 %v4164
        %5461 = vmatpush2.bf16.msra.mxu0 %v4163
        %5462 = vmatprep.subr.bf16.mxu0 %v4160
        %5463 = vmatpush2.bf16.msra.mxu0 %v4159
        %5464 = vmatprep.subr.bf16.mxu0 %v4156
        %5465 = vmatpush2.bf16.msra.mxu0 %v4155
        %5466 = vmatprep.subr.bf16.mxu0 %v4152
        %5467 = vmatpush2.bf16.msra.mxu0 %v4151
        %5468 = vmatprep.subr.bf16.mxu0 %v4148
        %5469 = vmatpush2.bf16.msra.mxu0 %v4147
        %5470 = vmatprep.subr.bf16.mxu0 %v4144
        %5471 = vmatpush2.bf16.msra.mxu0 %v4143
        %5472 = vmatprep.mubr.bf16.mxu0 %v458
        %5473 = vmatmul.mubr.bf16.gmra.mxu0 %v457
        %v5474 = vpop.f32.mrf.mxu0
        %v5475 = vadd.f32 %v5434, %v5474
        %v5476 = vpop.f32.mrf.mxu0
        %v5477 = vadd.f32 %v5436, %v5476
        %v5478 = vpop.f32.mrf.mxu0
        %v5479 = vpop.f32.mrf.mxu0
        %5480 = vdwg.mxu0
        %5481 = vmatprep.subr.bf16.mxu0 %v4204
        %5482 = vmatpush1.bf16.msra.mxu0 %v4203
        %5483 = vmatprep.subr.bf16.mxu0 %v4200
        %5484 = vmatpush1.bf16.msra.mxu0 %v4199
        %5485 = vmatprep.subr.bf16.mxu0 %v4196
        %5486 = vmatpush1.bf16.msra.mxu0 %v4195
        %5487 = vmatprep.subr.bf16.mxu0 %v4192
        %5488 = vmatpush1.bf16.msra.mxu0 %v4191
        %5489 = vmatprep.subr.bf16.mxu0 %v4188
        %5490 = vmatpush1.bf16.msra.mxu0 %v4187
        %5491 = vmatprep.subr.bf16.mxu0 %v4184
        %5492 = vmatpush1.bf16.msra.mxu0 %v4183
        %5493 = vmatprep.subr.bf16.mxu0 %v4180
        %5494 = vmatpush1.bf16.msra.mxu0 %v4179
        %5495 = vmatprep.subr.bf16.mxu0 %v4176
        %5496 = vmatpush1.bf16.msra.mxu0 %v4175
        %5497 = vmatprep.subr.bf16.mxu0 %v4236
        %5498 = vmatpush2.bf16.msra.mxu0 %v4235
        %5499 = vmatprep.subr.bf16.mxu0 %v4232
        %5500 = vmatpush2.bf16.msra.mxu0 %v4231
        %5501 = vmatprep.subr.bf16.mxu0 %v4228
        %5502 = vmatpush2.bf16.msra.mxu0 %v4227
        %5503 = vmatprep.subr.bf16.mxu0 %v4224
        %5504 = vmatpush2.bf16.msra.mxu0 %v4223
        %5505 = vmatprep.subr.bf16.mxu0 %v4220
        %5506 = vmatpush2.bf16.msra.mxu0 %v4219
        %5507 = vmatprep.subr.bf16.mxu0 %v4216
        %5508 = vmatpush2.bf16.msra.mxu0 %v4215
        %5509 = vmatprep.subr.bf16.mxu0 %v4212
        %5510 = vmatpush2.bf16.msra.mxu0 %v4211
        %5511 = vmatprep.subr.bf16.mxu0 %v4208
        %5512 = vmatpush2.bf16.msra.mxu0 %v4207
        %5513 = vmatprep.mubr.bf16.mxu0 %v460
        %5514 = vmatmul.mubr.bf16.gmra.mxu0 %v459
        %v5515 = vpop.f32.mrf.mxu0
        %v5516 = vadd.f32 %v5475, %v5515
        %v5517 = vpop.f32.mrf.mxu0
        %v5518 = vadd.f32 %v5477, %v5517
        %v5519 = vpop.f32.mrf.mxu0
        %v5520 = vpop.f32.mrf.mxu0
        %5521 = vdwg.mxu0
        %5522 = vmatprep.subr.bf16.mxu0 %v4268
        %5523 = vmatpush1.bf16.msra.mxu0 %v4267
        %5524 = vmatprep.subr.bf16.mxu0 %v4264
        %5525 = vmatpush1.bf16.msra.mxu0 %v4263
        %5526 = vmatprep.subr.bf16.mxu0 %v4260
        %5527 = vmatpush1.bf16.msra.mxu0 %v4259
        %5528 = vmatprep.subr.bf16.mxu0 %v4256
        %5529 = vmatpush1.bf16.msra.mxu0 %v4255
        %5530 = vmatprep.subr.bf16.mxu0 %v4252
        %5531 = vmatpush1.bf16.msra.mxu0 %v4251
        %5532 = vmatprep.subr.bf16.mxu0 %v4248
        %5533 = vmatpush1.bf16.msra.mxu0 %v4247
        %5534 = vmatprep.subr.bf16.mxu0 %v4244
        %5535 = vmatpush1.bf16.msra.mxu0 %v4243
        %5536 = vmatprep.subr.bf16.mxu0 %v4240
        %5537 = vmatpush1.bf16.msra.mxu0 %v4239
        %5538 = vmatprep.subr.bf16.mxu0 %v4300
        %5539 = vmatpush2.bf16.msra.mxu0 %v4299
        %5540 = vmatprep.subr.bf16.mxu0 %v4296
        %5541 = vmatpush2.bf16.msra.mxu0 %v4295
        %5542 = vmatprep.subr.bf16.mxu0 %v4292
        %5543 = vmatpush2.bf16.msra.mxu0 %v4291
        %5544 = vmatprep.subr.bf16.mxu0 %v4288
        %5545 = vmatpush2.bf16.msra.mxu0 %v4287
        %5546 = vmatprep.subr.bf16.mxu0 %v4284
        %5547 = vmatpush2.bf16.msra.mxu0 %v4283
        %5548 = vmatprep.subr.bf16.mxu0 %v4280
        %5549 = vmatpush2.bf16.msra.mxu0 %v4279
        %5550 = vmatprep.subr.bf16.mxu0 %v4276
        %5551 = vmatpush2.bf16.msra.mxu0 %v4275
        %5552 = vmatprep.subr.bf16.mxu0 %v4272
        %5553 = vmatpush2.bf16.msra.mxu0 %v4271
        %5554 = vmatprep.mubr.bf16.mxu0 %v462
        %5555 = vmatmul.mubr.bf16.gmra.mxu0 %v461
        %v5556 = vpop.f32.mrf.mxu0
        %v5557 = vadd.f32 %v5516, %v5556
        %v5558 = vpop.f32.mrf.mxu0
        %v5559 = vadd.f32 %v5518, %v5558
        %v5560 = vpop.f32.mrf.mxu0
        %v5561 = vpop.f32.mrf.mxu0
        %5562 = vdwg.mxu0
        %5563 = vmatprep.subr.bf16.mxu0 %v3566
        %5564 = vmatpush1.bf16.msra.mxu0 %v3565
        %5565 = vmatprep.subr.bf16.mxu0 %v3562
        %5566 = vmatpush1.bf16.msra.mxu0 %v3561
        %5567 = vmatprep.subr.bf16.mxu0 %v3558
        %5568 = vmatpush1.bf16.msra.mxu0 %v3557
        %5569 = vmatprep.subr.bf16.mxu0 %v3554
        %5570 = vmatpush1.bf16.msra.mxu0 %v3553
        %5571 = vmatprep.subr.bf16.mxu0 %v3550
        %5572 = vmatpush1.bf16.msra.mxu0 %v3549
        %5573 = vmatprep.subr.bf16.mxu0 %v3546
        %5574 = vmatpush1.bf16.msra.mxu0 %v3545
        %5575 = vmatprep.subr.bf16.mxu0 %v3542
        %5576 = vmatpush1.bf16.msra.mxu0 %v3541
        %5577 = vmatprep.subr.bf16.mxu0 %v3538
        %5578 = vmatpush1.bf16.msra.mxu0 %v3537
        %5579 = vmatprep.subr.bf16.mxu0 %v3598
        %5580 = vmatpush2.bf16.msra.mxu0 %v3597
        %5581 = vmatprep.subr.bf16.mxu0 %v3594
        %5582 = vmatpush2.bf16.msra.mxu0 %v3593
        %5583 = vmatprep.subr.bf16.mxu0 %v3590
        %5584 = vmatpush2.bf16.msra.mxu0 %v3589
        %5585 = vmatprep.subr.bf16.mxu0 %v3586
        %5586 = vmatpush2.bf16.msra.mxu0 %v3585
        %5587 = vmatprep.subr.bf16.mxu0 %v3582
        %5588 = vmatpush2.bf16.msra.mxu0 %v3581
        %5589 = vmatprep.subr.bf16.mxu0 %v3578
        %5590 = vmatpush2.bf16.msra.mxu0 %v3577
        %5591 = vmatprep.subr.bf16.mxu0 %v3574
        %5592 = vmatpush2.bf16.msra.mxu0 %v3573
        %5593 = vmatprep.subr.bf16.mxu0 %v3570
        %5594 = vmatpush2.bf16.msra.mxu0 %v3569
        %5595 = vmatprep.mubr.bf16.mxu0 %v440
        %5596 = vmatmul.mubr.bf16.gmra.mxu0 %v439
        %v5597 = vpop.f32.mrf.mxu0
        %v5598 = vadd.f32 0.0, %v5597
        %v5599 = vpop.f32.mrf.mxu0
        %v5600 = vadd.f32 0.0, %v5599
        %v5601 = vpop.f32.mrf.mxu0
        %v5602 = vpop.f32.mrf.mxu0
        %5603 = vdwg.mxu0
        %5604 = vmatprep.subr.bf16.mxu0 %v3630
        %5605 = vmatpush1.bf16.msra.mxu0 %v3629
        %5606 = vmatprep.subr.bf16.mxu0 %v3626
        %5607 = vmatpush1.bf16.msra.mxu0 %v3625
        %5608 = vmatprep.subr.bf16.mxu0 %v3622
        %5609 = vmatpush1.bf16.msra.mxu0 %v3621
        %5610 = vmatprep.subr.bf16.mxu0 %v3618
        %5611 = vmatpush1.bf16.msra.mxu0 %v3617
        %5612 = vmatprep.subr.bf16.mxu0 %v3614
        %5613 = vmatpush1.bf16.msra.mxu0 %v3613
        %5614 = vmatprep.subr.bf16.mxu0 %v3610
        %5615 = vmatpush1.bf16.msra.mxu0 %v3609
        %5616 = vmatprep.subr.bf16.mxu0 %v3606
        %5617 = vmatpush1.bf16.msra.mxu0 %v3605
        %5618 = vmatprep.subr.bf16.mxu0 %v3602
        %5619 = vmatpush1.bf16.msra.mxu0 %v3601
        %5620 = vmatprep.subr.bf16.mxu0 %v3662
        %5621 = vmatpush2.bf16.msra.mxu0 %v3661
        %5622 = vmatprep.subr.bf16.mxu0 %v3658
        %5623 = vmatpush2.bf16.msra.mxu0 %v3657
        %5624 = vmatprep.subr.bf16.mxu0 %v3654
        %5625 = vmatpush2.bf16.msra.mxu0 %v3653
        %5626 = vmatprep.subr.bf16.mxu0 %v3650
        %5627 = vmatpush2.bf16.msra.mxu0 %v3649
        %5628 = vmatprep.subr.bf16.mxu0 %v3646
        %5629 = vmatpush2.bf16.msra.mxu0 %v3645
        %5630 = vmatprep.subr.bf16.mxu0 %v3642
        %5631 = vmatpush2.bf16.msra.mxu0 %v3641
        %5632 = vmatprep.subr.bf16.mxu0 %v3638
        %5633 = vmatpush2.bf16.msra.mxu0 %v3637
        %5634 = vmatprep.subr.bf16.mxu0 %v3634
        %5635 = vmatpush2.bf16.msra.mxu0 %v3633
        %5636 = vmatprep.mubr.bf16.mxu0 %v442
        %5637 = vmatmul.mubr.bf16.gmra.mxu0 %v441
        %v5638 = vpop.f32.mrf.mxu0
        %v5639 = vadd.f32 %v5598, %v5638
        %v5640 = vpop.f32.mrf.mxu0
        %v5641 = vadd.f32 %v5600, %v5640
        %v5642 = vpop.f32.mrf.mxu0
        %v5643 = vpop.f32.mrf.mxu0
        %5644 = vdwg.mxu0
        %5645 = vmatprep.subr.bf16.mxu0 %v3694
        %5646 = vmatpush1.bf16.msra.mxu0 %v3693
        %5647 = vmatprep.subr.bf16.mxu0 %v3690
        %5648 = vmatpush1.bf16.msra.mxu0 %v3689
        %5649 = vmatprep.subr.bf16.mxu0 %v3686
        %5650 = vmatpush1.bf16.msra.mxu0 %v3685
        %5651 = vmatprep.subr.bf16.mxu0 %v3682
        %5652 = vmatpush1.bf16.msra.mxu0 %v3681
        %5653 = vmatprep.subr.bf16.mxu0 %v3678
        %5654 = vmatpush1.bf16.msra.mxu0 %v3677
        %5655 = vmatprep.subr.bf16.mxu0 %v3674
        %5656 = vmatpush1.bf16.msra.mxu0 %v3673
        %5657 = vmatprep.subr.bf16.mxu0 %v3670
        %5658 = vmatpush1.bf16.msra.mxu0 %v3669
        %5659 = vmatprep.subr.bf16.mxu0 %v3666
        %5660 = vmatpush1.bf16.msra.mxu0 %v3665
        %5661 = vmatprep.subr.bf16.mxu0 %v3726
        %5662 = vmatpush2.bf16.msra.mxu0 %v3725
        %5663 = vmatprep.subr.bf16.mxu0 %v3722
        %5664 = vmatpush2.bf16.msra.mxu0 %v3721
        %5665 = vmatprep.subr.bf16.mxu0 %v3718
        %5666 = vmatpush2.bf16.msra.mxu0 %v3717
        %5667 = vmatprep.subr.bf16.mxu0 %v3714
        %5668 = vmatpush2.bf16.msra.mxu0 %v3713
        %5669 = vmatprep.subr.bf16.mxu0 %v3710
        %5670 = vmatpush2.bf16.msra.mxu0 %v3709
        %5671 = vmatprep.subr.bf16.mxu0 %v3706
        %5672 = vmatpush2.bf16.msra.mxu0 %v3705
        %5673 = vmatprep.subr.bf16.mxu0 %v3702
        %5674 = vmatpush2.bf16.msra.mxu0 %v3701
        %5675 = vmatprep.subr.bf16.mxu0 %v3698
        %5676 = vmatpush2.bf16.msra.mxu0 %v3697
        %5677 = vmatprep.mubr.bf16.mxu0 %v444
        %5678 = vmatmul.mubr.bf16.gmra.mxu0 %v443
        %v5679 = vpop.f32.mrf.mxu0
        %v5680 = vadd.f32 %v5639, %v5679
        %v5681 = vpop.f32.mrf.mxu0
        %v5682 = vadd.f32 %v5641, %v5681
        %v5683 = vpop.f32.mrf.mxu0
        %v5684 = vpop.f32.mrf.mxu0
        %5685 = vdwg.mxu0
        %5686 = vmatprep.subr.bf16.mxu0 %v3758
        %5687 = vmatpush1.bf16.msra.mxu0 %v3757
        %5688 = vmatprep.subr.bf16.mxu0 %v3754
        %5689 = vmatpush1.bf16.msra.mxu0 %v3753
        %5690 = vmatprep.subr.bf16.mxu0 %v3750
        %5691 = vmatpush1.bf16.msra.mxu0 %v3749
        %5692 = vmatprep.subr.bf16.mxu0 %v3746
        %5693 = vmatpush1.bf16.msra.mxu0 %v3745
        %5694 = vmatprep.subr.bf16.mxu0 %v3742
        %5695 = vmatpush1.bf16.msra.mxu0 %v3741
        %5696 = vmatprep.subr.bf16.mxu0 %v3738
        %5697 = vmatpush1.bf16.msra.mxu0 %v3737
        %5698 = vmatprep.subr.bf16.mxu0 %v3734
        %5699 = vmatpush1.bf16.msra.mxu0 %v3733
        %5700 = vmatprep.subr.bf16.mxu0 %v3730
        %5701 = vmatpush1.bf16.msra.mxu0 %v3729
        %5702 = vmatprep.subr.bf16.mxu0 %v3790
        %5703 = vmatpush2.bf16.msra.mxu0 %v3789
        %5704 = vmatprep.subr.bf16.mxu0 %v3786
        %5705 = vmatpush2.bf16.msra.mxu0 %v3785
        %5706 = vmatprep.subr.bf16.mxu0 %v3782
        %5707 = vmatpush2.bf16.msra.mxu0 %v3781
        %5708 = vmatprep.subr.bf16.mxu0 %v3778
        %5709 = vmatpush2.bf16.msra.mxu0 %v3777
        %5710 = vmatprep.subr.bf16.mxu0 %v3774
        %5711 = vmatpush2.bf16.msra.mxu0 %v3773
        %5712 = vmatprep.subr.bf16.mxu0 %v3770
        %5713 = vmatpush2.bf16.msra.mxu0 %v3769
        %5714 = vmatprep.subr.bf16.mxu0 %v3766
        %5715 = vmatpush2.bf16.msra.mxu0 %v3765
        %5716 = vmatprep.subr.bf16.mxu0 %v3762
        %5717 = vmatpush2.bf16.msra.mxu0 %v3761
        %5718 = vmatprep.mubr.bf16.mxu0 %v446
        %5719 = vmatmul.mubr.bf16.gmra.mxu0 %v445
        %v5720 = vpop.f32.mrf.mxu0
        %v5721 = vadd.f32 %v5680, %v5720
        %v5722 = vpop.f32.mrf.mxu0
        %v5723 = vadd.f32 %v5682, %v5722
        %v5724 = vpop.f32.mrf.mxu0
        %v5725 = vpop.f32.mrf.mxu0
        %5726 = vdwg.mxu0
        %5727 = vmatprep.subr.bf16.mxu0 %v3822
        %5728 = vmatpush1.bf16.msra.mxu0 %v3821
        %5729 = vmatprep.subr.bf16.mxu0 %v3818
        %5730 = vmatpush1.bf16.msra.mxu0 %v3817
        %5731 = vmatprep.subr.bf16.mxu0 %v3814
        %5732 = vmatpush1.bf16.msra.mxu0 %v3813
        %5733 = vmatprep.subr.bf16.mxu0 %v3810
        %5734 = vmatpush1.bf16.msra.mxu0 %v3809
        %5735 = vmatprep.subr.bf16.mxu0 %v3806
        %5736 = vmatpush1.bf16.msra.mxu0 %v3805
        %5737 = vmatprep.subr.bf16.mxu0 %v3802
        %5738 = vmatpush1.bf16.msra.mxu0 %v3801
        %5739 = vmatprep.subr.bf16.mxu0 %v3798
        %5740 = vmatpush1.bf16.msra.mxu0 %v3797
        %5741 = vmatprep.subr.bf16.mxu0 %v3794
        %5742 = vmatpush1.bf16.msra.mxu0 %v3793
        %5743 = vmatprep.subr.bf16.mxu0 %v3854
        %5744 = vmatpush2.bf16.msra.mxu0 %v3853
        %5745 = vmatprep.subr.bf16.mxu0 %v3850
        %5746 = vmatpush2.bf16.msra.mxu0 %v3849
        %5747 = vmatprep.subr.bf16.mxu0 %v3846
        %5748 = vmatpush2.bf16.msra.mxu0 %v3845
        %5749 = vmatprep.subr.bf16.mxu0 %v3842
        %5750 = vmatpush2.bf16.msra.mxu0 %v3841
        %5751 = vmatprep.subr.bf16.mxu0 %v3838
        %5752 = vmatpush2.bf16.msra.mxu0 %v3837
        %5753 = vmatprep.subr.bf16.mxu0 %v3834
        %5754 = vmatpush2.bf16.msra.mxu0 %v3833
        %5755 = vmatprep.subr.bf16.mxu0 %v3830
        %5756 = vmatpush2.bf16.msra.mxu0 %v3829
        %5757 = vmatprep.subr.bf16.mxu0 %v3826
        %5758 = vmatpush2.bf16.msra.mxu0 %v3825
        %5759 = vmatprep.mubr.bf16.mxu0 %v448
        %5760 = vmatmul.mubr.bf16.gmra.mxu0 %v447
        %v5761 = vpop.f32.mrf.mxu0
        %v5762 = vadd.f32 %v5721, %v5761
        %v5763 = vpop.f32.mrf.mxu0
        %v5764 = vadd.f32 %v5723, %v5763
        %v5765 = vpop.f32.mrf.mxu0
        %v5766 = vpop.f32.mrf.mxu0
        %5767 = vdwg.mxu0
        %5768 = vmatprep.subr.bf16.mxu0 %v3886
        %5769 = vmatpush1.bf16.msra.mxu0 %v3885
        %5770 = vmatprep.subr.bf16.mxu0 %v3882
        %5771 = vmatpush1.bf16.msra.mxu0 %v3881
        %5772 = vmatprep.subr.bf16.mxu0 %v3878
        %5773 = vmatpush1.bf16.msra.mxu0 %v3877
        %5774 = vmatprep.subr.bf16.mxu0 %v3874
        %5775 = vmatpush1.bf16.msra.mxu0 %v3873
        %5776 = vmatprep.subr.bf16.mxu0 %v3870
        %5777 = vmatpush1.bf16.msra.mxu0 %v3869
        %5778 = vmatprep.subr.bf16.mxu0 %v3866
        %5779 = vmatpush1.bf16.msra.mxu0 %v3865
        %5780 = vmatprep.subr.bf16.mxu0 %v3862
        %5781 = vmatpush1.bf16.msra.mxu0 %v3861
        %5782 = vmatprep.subr.bf16.mxu0 %v3858
        %5783 = vmatpush1.bf16.msra.mxu0 %v3857
        %5784 = vmatprep.subr.bf16.mxu0 %v3918
        %5785 = vmatpush2.bf16.msra.mxu0 %v3917
        %5786 = vmatprep.subr.bf16.mxu0 %v3914
        %5787 = vmatpush2.bf16.msra.mxu0 %v3913
        %5788 = vmatprep.subr.bf16.mxu0 %v3910
        %5789 = vmatpush2.bf16.msra.mxu0 %v3909
        %5790 = vmatprep.subr.bf16.mxu0 %v3906
        %5791 = vmatpush2.bf16.msra.mxu0 %v3905
        %5792 = vmatprep.subr.bf16.mxu0 %v3902
        %5793 = vmatpush2.bf16.msra.mxu0 %v3901
        %5794 = vmatprep.subr.bf16.mxu0 %v3898
        %5795 = vmatpush2.bf16.msra.mxu0 %v3897
        %5796 = vmatprep.subr.bf16.mxu0 %v3894
        %5797 = vmatpush2.bf16.msra.mxu0 %v3893
        %5798 = vmatprep.subr.bf16.mxu0 %v3890
        %5799 = vmatpush2.bf16.msra.mxu0 %v3889
        %5800 = vmatprep.mubr.bf16.mxu0 %v450
        %5801 = vmatmul.mubr.bf16.gmra.mxu0 %v449
        %v5802 = vpop.f32.mrf.mxu0
        %v5803 = vadd.f32 %v5762, %v5802
        %v5804 = vpop.f32.mrf.mxu0
        %v5805 = vadd.f32 %v5764, %v5804
        %v5806 = vpop.f32.mrf.mxu0
        %v5807 = vpop.f32.mrf.mxu0
        %5808 = vdwg.mxu0
        %5809 = vmatprep.subr.bf16.mxu0 %v3950
        %5810 = vmatpush1.bf16.msra.mxu0 %v3949
        %5811 = vmatprep.subr.bf16.mxu0 %v3946
        %5812 = vmatpush1.bf16.msra.mxu0 %v3945
        %5813 = vmatprep.subr.bf16.mxu0 %v3942
        %5814 = vmatpush1.bf16.msra.mxu0 %v3941
        %5815 = vmatprep.subr.bf16.mxu0 %v3938
        %5816 = vmatpush1.bf16.msra.mxu0 %v3937
        %5817 = vmatprep.subr.bf16.mxu0 %v3934
        %5818 = vmatpush1.bf16.msra.mxu0 %v3933
        %5819 = vmatprep.subr.bf16.mxu0 %v3930
        %5820 = vmatpush1.bf16.msra.mxu0 %v3929
        %5821 = vmatprep.subr.bf16.mxu0 %v3926
        %5822 = vmatpush1.bf16.msra.mxu0 %v3925
        %5823 = vmatprep.subr.bf16.mxu0 %v3922
        %5824 = vmatpush1.bf16.msra.mxu0 %v3921
        %5825 = vmatprep.subr.bf16.mxu0 %v3982
        %5826 = vmatpush2.bf16.msra.mxu0 %v3981
        %5827 = vmatprep.subr.bf16.mxu0 %v3978
        %5828 = vmatpush2.bf16.msra.mxu0 %v3977
        %5829 = vmatprep.subr.bf16.mxu0 %v3974
        %5830 = vmatpush2.bf16.msra.mxu0 %v3973
        %5831 = vmatprep.subr.bf16.mxu0 %v3970
        %5832 = vmatpush2.bf16.msra.mxu0 %v3969
        %5833 = vmatprep.subr.bf16.mxu0 %v3966
        %5834 = vmatpush2.bf16.msra.mxu0 %v3965
        %5835 = vmatprep.subr.bf16.mxu0 %v3962
        %5836 = vmatpush2.bf16.msra.mxu0 %v3961
        %5837 = vmatprep.subr.bf16.mxu0 %v3958
        %5838 = vmatpush2.bf16.msra.mxu0 %v3957
        %5839 = vmatprep.subr.bf16.mxu0 %v3954
        %5840 = vmatpush2.bf16.msra.mxu0 %v3953
        %5841 = vmatprep.mubr.bf16.mxu0 %v452
        %5842 = vmatmul.mubr.bf16.gmra.mxu0 %v451
        %v5843 = vpop.f32.mrf.mxu0
        %v5844 = vadd.f32 %v5803, %v5843
        %v5845 = vpop.f32.mrf.mxu0
        %v5846 = vadd.f32 %v5805, %v5845
        %v5847 = vpop.f32.mrf.mxu0
        %v5848 = vpop.f32.mrf.mxu0
        %5849 = vdwg.mxu0
        %5850 = vmatprep.subr.bf16.mxu0 %v4014
        %5851 = vmatpush1.bf16.msra.mxu0 %v4013
        %5852 = vmatprep.subr.bf16.mxu0 %v4010
        %5853 = vmatpush1.bf16.msra.mxu0 %v4009
        %5854 = vmatprep.subr.bf16.mxu0 %v4006
        %5855 = vmatpush1.bf16.msra.mxu0 %v4005
        %5856 = vmatprep.subr.bf16.mxu0 %v4002
        %5857 = vmatpush1.bf16.msra.mxu0 %v4001
        %5858 = vmatprep.subr.bf16.mxu0 %v3998
        %5859 = vmatpush1.bf16.msra.mxu0 %v3997
        %5860 = vmatprep.subr.bf16.mxu0 %v3994
        %5861 = vmatpush1.bf16.msra.mxu0 %v3993
        %5862 = vmatprep.subr.bf16.mxu0 %v3990
        %5863 = vmatpush1.bf16.msra.mxu0 %v3989
        %5864 = vmatprep.subr.bf16.mxu0 %v3986
        %5865 = vmatpush1.bf16.msra.mxu0 %v3985
        %5866 = vmatprep.subr.bf16.mxu0 %v4046
        %5867 = vmatpush2.bf16.msra.mxu0 %v4045
        %5868 = vmatprep.subr.bf16.mxu0 %v4042
        %5869 = vmatpush2.bf16.msra.mxu0 %v4041
        %5870 = vmatprep.subr.bf16.mxu0 %v4038
        %5871 = vmatpush2.bf16.msra.mxu0 %v4037
        %5872 = vmatprep.subr.bf16.mxu0 %v4034
        %5873 = vmatpush2.bf16.msra.mxu0 %v4033
        %5874 = vmatprep.subr.bf16.mxu0 %v4030
        %5875 = vmatpush2.bf16.msra.mxu0 %v4029
        %5876 = vmatprep.subr.bf16.mxu0 %v4026
        %5877 = vmatpush2.bf16.msra.mxu0 %v4025
        %5878 = vmatprep.subr.bf16.mxu0 %v4022
        %5879 = vmatpush2.bf16.msra.mxu0 %v4021
        %5880 = vmatprep.subr.bf16.mxu0 %v4018
        %5881 = vmatpush2.bf16.msra.mxu0 %v4017
        %5882 = vmatprep.mubr.bf16.mxu0 %v454
        %5883 = vmatmul.mubr.bf16.gmra.mxu0 %v453
        %v5884 = vpop.f32.mrf.mxu0
        %v5885 = vadd.f32 %v5844, %v5884
        %v5886 = vpop.f32.mrf.mxu0
        %v5887 = vadd.f32 %v5846, %v5886
        %v5888 = vpop.f32.mrf.mxu0
        %v5889 = vpop.f32.mrf.mxu0
        %5890 = vdwg.mxu0
        %5891 = vmatprep.subr.bf16.mxu0 %v4078
        %5892 = vmatpush1.bf16.msra.mxu0 %v4077
        %5893 = vmatprep.subr.bf16.mxu0 %v4074
        %5894 = vmatpush1.bf16.msra.mxu0 %v4073
        %5895 = vmatprep.subr.bf16.mxu0 %v4070
        %5896 = vmatpush1.bf16.msra.mxu0 %v4069
        %5897 = vmatprep.subr.bf16.mxu0 %v4066
        %5898 = vmatpush1.bf16.msra.mxu0 %v4065
        %5899 = vmatprep.subr.bf16.mxu0 %v4062
        %5900 = vmatpush1.bf16.msra.mxu0 %v4061
        %5901 = vmatprep.subr.bf16.mxu0 %v4058
        %5902 = vmatpush1.bf16.msra.mxu0 %v4057
        %5903 = vmatprep.subr.bf16.mxu0 %v4054
        %5904 = vmatpush1.bf16.msra.mxu0 %v4053
        %5905 = vmatprep.subr.bf16.mxu0 %v4050
        %5906 = vmatpush1.bf16.msra.mxu0 %v4049
        %5907 = vmatprep.subr.bf16.mxu0 %v4110
        %5908 = vmatpush2.bf16.msra.mxu0 %v4109
        %5909 = vmatprep.subr.bf16.mxu0 %v4106
        %5910 = vmatpush2.bf16.msra.mxu0 %v4105
        %5911 = vmatprep.subr.bf16.mxu0 %v4102
        %5912 = vmatpush2.bf16.msra.mxu0 %v4101
        %5913 = vmatprep.subr.bf16.mxu0 %v4098
        %5914 = vmatpush2.bf16.msra.mxu0 %v4097
        %5915 = vmatprep.subr.bf16.mxu0 %v4094
        %5916 = vmatpush2.bf16.msra.mxu0 %v4093
        %5917 = vmatprep.subr.bf16.mxu0 %v4090
        %5918 = vmatpush2.bf16.msra.mxu0 %v4089
        %5919 = vmatprep.subr.bf16.mxu0 %v4086
        %5920 = vmatpush2.bf16.msra.mxu0 %v4085
        %5921 = vmatprep.subr.bf16.mxu0 %v4082
        %5922 = vmatpush2.bf16.msra.mxu0 %v4081
        %5923 = vmatprep.mubr.bf16.mxu0 %v456
        %5924 = vmatmul.mubr.bf16.gmra.mxu0 %v455
        %v5925 = vpop.f32.mrf.mxu0
        %v5926 = vadd.f32 %v5885, %v5925
        %v5927 = vpop.f32.mrf.mxu0
        %v5928 = vadd.f32 %v5887, %v5927
        %v5929 = vpop.f32.mrf.mxu0
        %v5930 = vpop.f32.mrf.mxu0
        %5931 = vdwg.mxu0
        %5932 = vmatprep.subr.bf16.mxu0 %v4142
        %5933 = vmatpush1.bf16.msra.mxu0 %v4141
        %5934 = vmatprep.subr.bf16.mxu0 %v4138
        %5935 = vmatpush1.bf16.msra.mxu0 %v4137
        %5936 = vmatprep.subr.bf16.mxu0 %v4134
        %5937 = vmatpush1.bf16.msra.mxu0 %v4133
        %5938 = vmatprep.subr.bf16.mxu0 %v4130
        %5939 = vmatpush1.bf16.msra.mxu0 %v4129
        %5940 = vmatprep.subr.bf16.mxu0 %v4126
        %5941 = vmatpush1.bf16.msra.mxu0 %v4125
        %5942 = vmatprep.subr.bf16.mxu0 %v4122
        %5943 = vmatpush1.bf16.msra.mxu0 %v4121
        %5944 = vmatprep.subr.bf16.mxu0 %v4118
        %5945 = vmatpush1.bf16.msra.mxu0 %v4117
        %5946 = vmatprep.subr.bf16.mxu0 %v4114
        %5947 = vmatpush1.bf16.msra.mxu0 %v4113
        %5948 = vmatprep.subr.bf16.mxu0 %v4174
        %5949 = vmatpush2.bf16.msra.mxu0 %v4173
        %5950 = vmatprep.subr.bf16.mxu0 %v4170
        %5951 = vmatpush2.bf16.msra.mxu0 %v4169
        %5952 = vmatprep.subr.bf16.mxu0 %v4166
        %5953 = vmatpush2.bf16.msra.mxu0 %v4165
        %5954 = vmatprep.subr.bf16.mxu0 %v4162
        %5955 = vmatpush2.bf16.msra.mxu0 %v4161
        %5956 = vmatprep.subr.bf16.mxu0 %v4158
        %5957 = vmatpush2.bf16.msra.mxu0 %v4157
        %5958 = vmatprep.subr.bf16.mxu0 %v4154
        %5959 = vmatpush2.bf16.msra.mxu0 %v4153
        %5960 = vmatprep.subr.bf16.mxu0 %v4150
        %5961 = vmatpush2.bf16.msra.mxu0 %v4149
        %5962 = vmatprep.subr.bf16.mxu0 %v4146
        %5963 = vmatpush2.bf16.msra.mxu0 %v4145
        %5964 = vmatprep.mubr.bf16.mxu0 %v458
        %5965 = vmatmul.mubr.bf16.gmra.mxu0 %v457
        %v5966 = vpop.f32.mrf.mxu0
        %v5967 = vadd.f32 %v5926, %v5966
        %v5968 = vpop.f32.mrf.mxu0
        %v5969 = vadd.f32 %v5928, %v5968
        %v5970 = vpop.f32.mrf.mxu0
        %v5971 = vpop.f32.mrf.mxu0
        %5972 = vdwg.mxu0
        %5973 = vmatprep.subr.bf16.mxu0 %v4206
        %5974 = vmatpush1.bf16.msra.mxu0 %v4205
        %5975 = vmatprep.subr.bf16.mxu0 %v4202
        %5976 = vmatpush1.bf16.msra.mxu0 %v4201
        %5977 = vmatprep.subr.bf16.mxu0 %v4198
        %5978 = vmatpush1.bf16.msra.mxu0 %v4197
        %5979 = vmatprep.subr.bf16.mxu0 %v4194
        %5980 = vmatpush1.bf16.msra.mxu0 %v4193
        %5981 = vmatprep.subr.bf16.mxu0 %v4190
        %5982 = vmatpush1.bf16.msra.mxu0 %v4189
        %5983 = vmatprep.subr.bf16.mxu0 %v4186
        %5984 = vmatpush1.bf16.msra.mxu0 %v4185
        %5985 = vmatprep.subr.bf16.mxu0 %v4182
        %5986 = vmatpush1.bf16.msra.mxu0 %v4181
        %5987 = vmatprep.subr.bf16.mxu0 %v4178
        %5988 = vmatpush1.bf16.msra.mxu0 %v4177
        %5989 = vmatprep.subr.bf16.mxu0 %v4238
        %5990 = vmatpush2.bf16.msra.mxu0 %v4237
        %5991 = vmatprep.subr.bf16.mxu0 %v4234
        %5992 = vmatpush2.bf16.msra.mxu0 %v4233
        %5993 = vmatprep.subr.bf16.mxu0 %v4230
        %5994 = vmatpush2.bf16.msra.mxu0 %v4229
        %5995 = vmatprep.subr.bf16.mxu0 %v4226
        %5996 = vmatpush2.bf16.msra.mxu0 %v4225
        %5997 = vmatprep.subr.bf16.mxu0 %v4222
        %5998 = vmatpush2.bf16.msra.mxu0 %v4221
        %5999 = vmatprep.subr.bf16.mxu0 %v4218
        %6000 = vmatpush2.bf16.msra.mxu0 %v4217
        %6001 = vmatprep.subr.bf16.mxu0 %v4214
        %6002 = vmatpush2.bf16.msra.mxu0 %v4213
        %6003 = vmatprep.subr.bf16.mxu0 %v4210
        %6004 = vmatpush2.bf16.msra.mxu0 %v4209
        %6005 = vmatprep.mubr.bf16.mxu0 %v460
        %6006 = vmatmul.mubr.bf16.gmra.mxu0 %v459
        %v6007 = vpop.f32.mrf.mxu0
        %v6008 = vadd.f32 %v5967, %v6007
        %v6009 = vpop.f32.mrf.mxu0
        %v6010 = vadd.f32 %v5969, %v6009
        %v6011 = vpop.f32.mrf.mxu0
        %v6012 = vpop.f32.mrf.mxu0
        %6013 = vdwg.mxu0
        %6014 = vmatprep.subr.bf16.mxu0 %v4270
        %6015 = vmatpush1.bf16.msra.mxu0 %v4269
        %6016 = vmatprep.subr.bf16.mxu0 %v4266
        %6017 = vmatpush1.bf16.msra.mxu0 %v4265
        %6018 = vmatprep.subr.bf16.mxu0 %v4262
        %6019 = vmatpush1.bf16.msra.mxu0 %v4261
        %6020 = vmatprep.subr.bf16.mxu0 %v4258
        %6021 = vmatpush1.bf16.msra.mxu0 %v4257
        %6022 = vmatprep.subr.bf16.mxu0 %v4254
        %6023 = vmatpush1.bf16.msra.mxu0 %v4253
        %6024 = vmatprep.subr.bf16.mxu0 %v4250
        %6025 = vmatpush1.bf16.msra.mxu0 %v4249
        %6026 = vmatprep.subr.bf16.mxu0 %v4246
        %6027 = vmatpush1.bf16.msra.mxu0 %v4245
        %6028 = vmatprep.subr.bf16.mxu0 %v4242
        %6029 = vmatpush1.bf16.msra.mxu0 %v4241
        %6030 = vmatprep.subr.bf16.mxu0 %v4302
        %6031 = vmatpush2.bf16.msra.mxu0 %v4301
        %6032 = vmatprep.subr.bf16.mxu0 %v4298
        %6033 = vmatpush2.bf16.msra.mxu0 %v4297
        %6034 = vmatprep.subr.bf16.mxu0 %v4294
        %6035 = vmatpush2.bf16.msra.mxu0 %v4293
        %6036 = vmatprep.subr.bf16.mxu0 %v4290
        %6037 = vmatpush2.bf16.msra.mxu0 %v4289
        %6038 = vmatprep.subr.bf16.mxu0 %v4286
        %6039 = vmatpush2.bf16.msra.mxu0 %v4285
        %6040 = vmatprep.subr.bf16.mxu0 %v4282
        %6041 = vmatpush2.bf16.msra.mxu0 %v4281
        %6042 = vmatprep.subr.bf16.mxu0 %v4278
        %6043 = vmatpush2.bf16.msra.mxu0 %v4277
        %6044 = vmatprep.subr.bf16.mxu0 %v4274
        %6045 = vmatpush2.bf16.msra.mxu0 %v4273
        %6046 = vmatprep.mubr.bf16.mxu0 %v462
        %6047 = vmatmul.mubr.bf16.gmra.mxu0 %v461
        %v6048 = vpop.f32.mrf.mxu0
        %v6049 = vadd.f32 %v6008, %v6048
        %v6050 = vpop.f32.mrf.mxu0
        %v6051 = vadd.f32 %v6010, %v6050
        %v6052 = vpop.f32.mrf.mxu0
        %v6053 = vpop.f32.mrf.mxu0
        %6054 = vdwg.mxu0
        %v6059 = vcombine.low %v5557, %v5559
        %v6060 = vcombine.low %v6049, %v6051
        %v6062 = vunpack.c.l.s4 1983009808
        %v6063 = vunpack.c.0.s8 %v6062
        %v6064 = vlaneseq
        %v6065 = vshrl.u32 %v6064, 7
        %v6066 = vsub.s32 %v6063, %v6065
        %v6067 = vrot.slane %v6059, %v6066
        %v6069 = vunpack.c.l.s4 1983009808
        %v6070 = vunpack.c.0.s8 %v6069
        %v6071 = vlaneseq
        %v6072 = vshrl.u32 %v6071, 7
        %v6073 = vsub.s32 %v6070, %v6072
        %v6074 = vrot.slane %v6060, %v6073
        %v6075 = vcombine.low %v6067, %v6074
        %v6077 = vadd.f32 %v300, %v6075
        %6078 = vst [vmem:[#allocation2] sm:$0xff] %v6077
        %p6079 = scmp.eq.s32.totalorder %s22, 5
        // Predicated region
        $region61: #{_forward.1} parent=39 // pred_check
          %p6080 = pneg %p6079
        $region62: #{_forward.1} parent=39 // pred_check_branch
          %6082 = sbr.rel (%p6080) target = $region64
        $region63: #{_forward.1} parent=39 // pred_region
          %v6083 = vld [vmem:[#allocation2] sm:$0xff]
          %v6084 = vld [vmem:[#allocation6] sm:$0xf]
          %v6086 = vlaneseq
          %v6087 = vshrl.u32 %v6086, 7
          %v6088 = vsub.s32 0, %v6087
          %v6089 = vrot.slane %v6084, %v6088
          %v6090 = vlaneseq
          %v6091 = vshrl.u32 %v6090, 7
          %v6092 = vsub.s32 1, %v6091
          %v6093 = vrot.slane %v6084, %v6092
          %v6094 = vlaneseq
          %v6095 = vshrl.u32 %v6094, 7
          %v6096 = vsub.s32 2, %v6095
          %v6097 = vrot.slane %v6084, %v6096
          %v6098 = vlaneseq
          %v6099 = vshrl.u32 %v6098, 7
          %v6100 = vsub.s32 3, %v6099
          %v6101 = vrot.slane %v6084, %v6100
          %v6102 = vcombine.low %v6089, %v6093
          %v6103 = vcombine.low %v6097, %v6101
          %v6105 = vunpack.c.l.s4 1983009808
          %v6106 = vunpack.c.0.s8 %v6105
          %v6107 = vlaneseq
          %v6108 = vshrl.u32 %v6107, 7
          %v6109 = vsub.s32 %v6106, %v6108
          %v6110 = vrot.slane %v6102, %v6109
          %v6112 = vunpack.c.l.s4 1983009808
          %v6113 = vunpack.c.0.s8 %v6112
          %v6114 = vlaneseq
          %v6115 = vshrl.u32 %v6114, 7
          %v6116 = vsub.s32 %v6113, %v6115
          %v6117 = vrot.slane %v6103, %v6116
          %v6118 = vcombine.low %v6110, %v6117
          %v6120 = vadd.f32 %v6083, %v6118
          %v6121 = vmax.f32 %v6120, 0.0
          %v6122 = vld [vmem:[#allocation8] sm:$0xff]
          %v6123 = vld [vmem:[#allocation8 + $0x8] sm:$0xff]
          %v6124 = vld [vmem:[#allocation8 + $0x10] sm:$0xff]
          %v6125 = vld [vmem:[#allocation8 + $0x18] sm:$0xff]
          %v6126 = vld [vmem:[#allocation8 + $0x20] sm:$0xff]
          %v6127 = vld [vmem:[#allocation8 + $0x28] sm:$0xff]
          %v6128 = vld [vmem:[#allocation8 + $0x30] sm:$0xff]
          %v6129 = vld [vmem:[#allocation8 + $0x38] sm:$0xff]
          %v6130 = vld [vmem:[#allocation8 + $0x40] sm:$0xff]
          %v6131 = vld [vmem:[#allocation8 + $0x48] sm:$0xff]
          %v6132 = vld [vmem:[#allocation8 + $0x50] sm:$0xff]
          %v6133 = vld [vmem:[#allocation8 + $0x58] sm:$0xff]
          %v6134 = vld [vmem:[#allocation8 + $0x60] sm:$0xff]
          %v6135 = vld [vmem:[#allocation8 + $0x68] sm:$0xff]
          %v6136 = vld [vmem:[#allocation8 + $0x70] sm:$0xff]
          %v6137 = vld [vmem:[#allocation8 + $0x78] sm:$0xff]
          %v6138 = vld [vmem:[#allocation8 + $0x80] sm:$0xff]
          %v6139 = vld [vmem:[#allocation8 + $0x88] sm:$0xff]
          %v6140 = vld [vmem:[#allocation8 + $0x90] sm:$0xff]
          %v6141 = vld [vmem:[#allocation8 + $0x98] sm:$0xff]
          %v6142 = vld [vmem:[#allocation8 + $0xa0] sm:$0xff]
          %v6143 = vld [vmem:[#allocation8 + $0xa8] sm:$0xff]
          %v6144 = vld [vmem:[#allocation8 + $0xb0] sm:$0xff]
          %v6145 = vld [vmem:[#allocation8 + $0xb8] sm:$0xff]
          %v6146 = vld [vmem:[#allocation8 + $0xc0] sm:$0xff]
          %v6147 = vld [vmem:[#allocation8 + $0xc8] sm:$0xff]
          %v6148 = vld [vmem:[#allocation8 + $0xd0] sm:$0xff]
          %v6149 = vld [vmem:[#allocation8 + $0xd8] sm:$0xff]
          %v6150 = vld [vmem:[#allocation8 + $0xe0] sm:$0xff]
          %v6151 = vld [vmem:[#allocation8 + $0xe8] sm:$0xff]
          %v6152 = vld [vmem:[#allocation8 + $0xf0] sm:$0xff]
          %v6153 = vld [vmem:[#allocation8 + $0xf8] sm:$0xff]
          %v6154 = vld [vmem:[#allocation8 + $0x100] sm:$0xff]
          %v6155 = vld [vmem:[#allocation8 + $0x108] sm:$0xff]
          %v6156 = vld [vmem:[#allocation8 + $0x110] sm:$0xff]
          %v6157 = vld [vmem:[#allocation8 + $0x118] sm:$0xff]
          %v6158 = vld [vmem:[#allocation8 + $0x120] sm:$0xff]
          %v6159 = vld [vmem:[#allocation8 + $0x128] sm:$0xff]
          %v6160 = vld [vmem:[#allocation8 + $0x130] sm:$0xff]
          %v6161 = vld [vmem:[#allocation8 + $0x138] sm:$0xff]
          %v6162 = vld [vmem:[#allocation8 + $0x140] sm:$0xff]
          %v6163 = vld [vmem:[#allocation8 + $0x148] sm:$0xff]
          %v6164 = vld [vmem:[#allocation8 + $0x150] sm:$0xff]
          %v6165 = vld [vmem:[#allocation8 + $0x158] sm:$0xff]
          %v6166 = vld [vmem:[#allocation8 + $0x160] sm:$0xff]
          %v6167 = vld [vmem:[#allocation8 + $0x168] sm:$0xff]
          %v6168 = vld [vmem:[#allocation8 + $0x170] sm:$0xff]
          %v6169 = vld [vmem:[#allocation8 + $0x178] sm:$0xff]
          %v6170 = vld [vmem:[#allocation8 + $0x180] sm:$0xff]
          %v6171 = vld [vmem:[#allocation8 + $0x188] sm:$0xff]
          %v6172 = vld [vmem:[#allocation8 + $0x190] sm:$0xff]
          %v6173 = vld [vmem:[#allocation8 + $0x198] sm:$0xff]
          %v6174 = vld [vmem:[#allocation8 + $0x1a0] sm:$0xff]
          %v6175 = vld [vmem:[#allocation8 + $0x1a8] sm:$0xff]
          %v6176 = vld [vmem:[#allocation8 + $0x1b0] sm:$0xff]
          %v6177 = vld [vmem:[#allocation8 + $0x1b8] sm:$0xff]
          %v6178 = vld [vmem:[#allocation8 + $0x1c0] sm:$0xff]
          %v6179 = vld [vmem:[#allocation8 + $0x1c8] sm:$0xff]
          %v6180 = vld [vmem:[#allocation8 + $0x1d0] sm:$0xff]
          %v6181 = vld [vmem:[#allocation8 + $0x1d8] sm:$0xff]
          %v6182 = vld [vmem:[#allocation8 + $0x1e0] sm:$0xff]
          %v6183 = vld [vmem:[#allocation8 + $0x1e8] sm:$0xff]
          %v6184 = vld [vmem:[#allocation8 + $0x1f0] sm:$0xff]
          %v6185 = vld [vmem:[#allocation8 + $0x1f8] sm:$0xff]
          %v6186 = vld [vmem:[#allocation9] sm:$0x1]
          %v6188 = vlaneseq
          %v6189 = vshrl.u32 %v6188, 7
          %v6190 = vsub.s32 0, %v6189
          %v6191 = vrot.slane %v6186, %v6190
          %v6194 = vcombine.high %v6121, %v6121
          %v6196 = vunpack.c.l.s4 1983009808
          %v6197 = vunpack.c.0.s8 %v6196
          %v6198 = vlaneseq
          %v6199 = vshrl.u32 %v6198, 7
          %v6200 = vsub.s32 %v6197, %v6199
          %v6201 = vrot.slane %v6121, %v6200
          %v6203 = vunpack.c.l.s4 1983009808
          %v6204 = vunpack.c.0.s8 %v6203
          %v6205 = vlaneseq
          %v6206 = vshrl.u32 %v6205, 7
          %v6207 = vsub.s32 %v6204, %v6206
          %v6208 = vrot.slane %v6194, %v6207
          %v6209 = vcombine.high %v6201, %v6201
          %v6210 = vcombine.high %v6208, %v6208
          %6215 = vmatprep.subr.mxu0 0.0
          %6216 = vmatpush1.msra.mxu0 %v6137
          %6217 = vmatprep.subr.mxu0 0.0
          %6218 = vmatpush1.msra.mxu0 %v6136
          %6219 = vmatprep.subr.mxu0 0.0
          %6220 = vmatpush1.msra.mxu0 %v6135
          %6221 = vmatprep.subr.mxu0 0.0
          %6222 = vmatpush1.msra.mxu0 %v6134
          %6223 = vmatprep.subr.mxu0 0.0
          %6224 = vmatpush1.msra.mxu0 %v6133
          %6225 = vmatprep.subr.mxu0 0.0
          %6226 = vmatpush1.msra.mxu0 %v6132
          %6227 = vmatprep.subr.mxu0 0.0
          %6228 = vmatpush1.msra.mxu0 %v6131
          %6229 = vmatprep.subr.mxu0 0.0
          %6230 = vmatpush1.msra.mxu0 %v6130
          %6231 = vmatprep.subr.mxu0 0.0
          %6232 = vmatpush1.msra.mxu0 %v6129
          %6233 = vmatprep.subr.mxu0 0.0
          %6234 = vmatpush1.msra.mxu0 %v6128
          %6235 = vmatprep.subr.mxu0 0.0
          %6236 = vmatpush1.msra.mxu0 %v6127
          %6237 = vmatprep.subr.mxu0 0.0
          %6238 = vmatpush1.msra.mxu0 %v6126
          %6239 = vmatprep.subr.mxu0 0.0
          %6240 = vmatpush1.msra.mxu0 %v6125
          %6241 = vmatprep.subr.mxu0 0.0
          %6242 = vmatpush1.msra.mxu0 %v6124
          %6243 = vmatprep.subr.mxu0 0.0
          %6244 = vmatpush1.msra.mxu0 %v6123
          %6245 = vmatprep.subr.mxu0 0.0
          %6246 = vmatpush1.msra.mxu0 %v6122
          %6247 = vmatprep.subr.mxu0 0.0
          %6248 = vmatpush2.msra.mxu0 %v6153
          %6249 = vmatprep.subr.mxu0 0.0
          %6250 = vmatpush2.msra.mxu0 %v6152
          %6251 = vmatprep.subr.mxu0 0.0
          %6252 = vmatpush2.msra.mxu0 %v6151
          %6253 = vmatprep.subr.mxu0 0.0
          %6254 = vmatpush2.msra.mxu0 %v6150
          %6255 = vmatprep.subr.mxu0 0.0
          %6256 = vmatpush2.msra.mxu0 %v6149
          %6257 = vmatprep.subr.mxu0 0.0
          %6258 = vmatpush2.msra.mxu0 %v6148
          %6259 = vmatprep.subr.mxu0 0.0
          %6260 = vmatpush2.msra.mxu0 %v6147
          %6261 = vmatprep.subr.mxu0 0.0
          %6262 = vmatpush2.msra.mxu0 %v6146
          %6263 = vmatprep.subr.mxu0 0.0
          %6264 = vmatpush2.msra.mxu0 %v6145
          %6265 = vmatprep.subr.mxu0 0.0
          %6266 = vmatpush2.msra.mxu0 %v6144
          %6267 = vmatprep.subr.mxu0 0.0
          %6268 = vmatpush2.msra.mxu0 %v6143
          %6269 = vmatprep.subr.mxu0 0.0
          %6270 = vmatpush2.msra.mxu0 %v6142
          %6271 = vmatprep.subr.mxu0 0.0
          %6272 = vmatpush2.msra.mxu0 %v6141
          %6273 = vmatprep.subr.mxu0 0.0
          %6274 = vmatpush2.msra.mxu0 %v6140
          %6275 = vmatprep.subr.mxu0 0.0
          %6276 = vmatpush2.msra.mxu0 %v6139
          %6277 = vmatprep.subr.mxu0 0.0
          %6278 = vmatpush2.msra.mxu0 %v6138
          %6279 = vmatprep.mubr.f32.mxu0 %v6209
          %6280 = vmatmul.mubr.f32.gmra.mxu0 %v6201
          %v6281 = vpop.f32.mrf.mxu0
          %v6282 = vadd.f32 %v6191, %v6281
          %v6283 = vpop.f32.mrf.mxu0
          %6284 = vdwg.mxu0
          %6285 = vmatprep.subr.mxu0 0.0
          %6286 = vmatpush1.msra.mxu0 %v6169
          %6287 = vmatprep.subr.mxu0 0.0
          %6288 = vmatpush1.msra.mxu0 %v6168
          %6289 = vmatprep.subr.mxu0 0.0
          %6290 = vmatpush1.msra.mxu0 %v6167
          %6291 = vmatprep.subr.mxu0 0.0
          %6292 = vmatpush1.msra.mxu0 %v6166
          %6293 = vmatprep.subr.mxu0 0.0
          %6294 = vmatpush1.msra.mxu0 %v6165
          %6295 = vmatprep.subr.mxu0 0.0
          %6296 = vmatpush1.msra.mxu0 %v6164
          %6297 = vmatprep.subr.mxu0 0.0
          %6298 = vmatpush1.msra.mxu0 %v6163
          %6299 = vmatprep.subr.mxu0 0.0
          %6300 = vmatpush1.msra.mxu0 %v6162
          %6301 = vmatprep.subr.mxu0 0.0
          %6302 = vmatpush1.msra.mxu0 %v6161
          %6303 = vmatprep.subr.mxu0 0.0
          %6304 = vmatpush1.msra.mxu0 %v6160
          %6305 = vmatprep.subr.mxu0 0.0
          %6306 = vmatpush1.msra.mxu0 %v6159
          %6307 = vmatprep.subr.mxu0 0.0
          %6308 = vmatpush1.msra.mxu0 %v6158
          %6309 = vmatprep.subr.mxu0 0.0
          %6310 = vmatpush1.msra.mxu0 %v6157
          %6311 = vmatprep.subr.mxu0 0.0
          %6312 = vmatpush1.msra.mxu0 %v6156
          %6313 = vmatprep.subr.mxu0 0.0
          %6314 = vmatpush1.msra.mxu0 %v6155
          %6315 = vmatprep.subr.mxu0 0.0
          %6316 = vmatpush1.msra.mxu0 %v6154
          %6317 = vmatprep.subr.mxu0 0.0
          %6318 = vmatpush2.msra.mxu0 %v6185
          %6319 = vmatprep.subr.mxu0 0.0
          %6320 = vmatpush2.msra.mxu0 %v6184
          %6321 = vmatprep.subr.mxu0 0.0
          %6322 = vmatpush2.msra.mxu0 %v6183
          %6323 = vmatprep.subr.mxu0 0.0
          %6324 = vmatpush2.msra.mxu0 %v6182
          %6325 = vmatprep.subr.mxu0 0.0
          %6326 = vmatpush2.msra.mxu0 %v6181
          %6327 = vmatprep.subr.mxu0 0.0
          %6328 = vmatpush2.msra.mxu0 %v6180
          %6329 = vmatprep.subr.mxu0 0.0
          %6330 = vmatpush2.msra.mxu0 %v6179
          %6331 = vmatprep.subr.mxu0 0.0
          %6332 = vmatpush2.msra.mxu0 %v6178
          %6333 = vmatprep.subr.mxu0 0.0
          %6334 = vmatpush2.msra.mxu0 %v6177
          %6335 = vmatprep.subr.mxu0 0.0
          %6336 = vmatpush2.msra.mxu0 %v6176
          %6337 = vmatprep.subr.mxu0 0.0
          %6338 = vmatpush2.msra.mxu0 %v6175
          %6339 = vmatprep.subr.mxu0 0.0
          %6340 = vmatpush2.msra.mxu0 %v6174
          %6341 = vmatprep.subr.mxu0 0.0
          %6342 = vmatpush2.msra.mxu0 %v6173
          %6343 = vmatprep.subr.mxu0 0.0
          %6344 = vmatpush2.msra.mxu0 %v6172
          %6345 = vmatprep.subr.mxu0 0.0
          %6346 = vmatpush2.msra.mxu0 %v6171
          %6347 = vmatprep.subr.mxu0 0.0
          %6348 = vmatpush2.msra.mxu0 %v6170
          %6349 = vmatprep.mubr.f32.mxu0 %v6210
          %6350 = vmatmul.mubr.f32.gmra.mxu0 %v6208
          %v6351 = vpop.f32.mrf.mxu0
          %v6352 = vadd.f32 %v6282, %v6351
          %v6353 = vpop.f32.mrf.mxu0
          %6354 = vdwg.mxu0
          %6355 = vst [vmem:[#allocation11] sm:$0x3] %v6352
        $region64: #{_forward.1} parent=39 // pred_fallthru
          _
        // Predicated region
        $region65: #{_forward.1} parent=39 // pred_check
          %p6356 = pneg %p150
        $region66: #{_forward.1} parent=39 // pred_check_branch
          %6358 = sbr.rel (%p6356) target = $region68
        $region67: #{_forward.1} parent=39 // pred_region
          %s6360 = ssub.s32 32, 32
          %6361 = vsyncadd [#allocation5], %s6360
          %s6363 = sshll.u32 [#allocation11], 4
          %s6364 = int_to_ptr.vmem [resolvable:$true] %s6363
          %6366 = dma.vmem_to_hbm [thread:$0]  %s6364, 32, %s5, [#allocation5]
        $region68: #{_forward.1} parent=39 // pred_fallthru
          _
        // Predicated region
        $region69: #{_forward.1} parent=39 // pred_check
          %p6367 = pneg %p150
        $region70: #{_forward.1} parent=39 // pred_check_branch
          %6369 = sbr.rel (%p6367) target = $region72
        $region71: #{_forward.1} parent=39 // pred_region
          %6370 = dma.done [#allocation5], 32
        $region72: #{_forward.1} parent=39 // pred_fallthru
          _
      $region40: #{_forward.1} parent=5 // pred_fallthru
        _
      %p6371 = scmp.le.s32.totalorder 2, %s17
      // Predicated region
      $region73: #{_forward.1} parent=5 // pred_check
        %p6372 = pneg %p6371
      $region74: #{_forward.1} parent=5 // pred_check_branch
        %6374 = sbr.rel (%p6372) target = $region76
      $region75: #{_forward.1} parent=5 // pred_region
        %s6375 = ssub.s32 %s17, 2
      $region76: #{_forward.1} parent=5 // pred_fallthru
        _
    $region6: #{_forward.1} parent=1 // loop_footer
      %s21 = sadd.s32 1, %s17
    $region7: #{_forward.1} parent=1 // loop_footer_branch
      %16 = sbr.rel target = $region3
    $region8: #{_forward.1} parent=1 // loop_exit
      _
    %6376 = vsyncpa [#allocation4], 1
    %s6377 = scalar_lea.sflag [#allocation4], 1
    %6378 = vsyncpa %s6377, 1
    %6379 = vsyncpa [#allocation7], 1
    %6380 = vsyncpa [#allocation10], 1
    %6381 = vsyncpa [#allocation5], 1
    %s6382 = scalar_lea.sflag [#allocation5], 1
    %6383 = vsyncpa %s6382, 1

</llo_original>
